<compile_context>
chip_gen: v5e
topology: v5e:2x2
jax: 0.10.0
libtpu: 0.0.40
codegen_flags: <defaults>
</compile_context>

<pallas_src>
import functools
import math

import jax
import jax.numpy as jnp
from jax.experimental import pallas as pl
from jax.experimental.pallas import tpu as pltpu


# -----------------------------------------------------------------------------
# Kernel 1: per-image global-average-pool numerator (spatial sum).
# -----------------------------------------------------------------------------
def _gap_kernel(x_ref, o_ref):
    # x_ref: (1, H, W, C)   o_ref: (1, 1, C)
    x = x_ref[0]                                   # (H, W, C)
    s = jnp.sum(x, axis=0)                         # (W, C)
    o_ref[0] = jnp.sum(s, axis=0, keepdims=True)   # (1, C)


def gap_sums(x_nhwc):
    N, H, W, C = x_nhwc.shape
    return pl.pallas_call(
        _gap_kernel,
        out_shape=jax.ShapeDtypeStruct((N, 1, C), jnp.float32),
        grid=(N,),
        in_specs=[pl.BlockSpec((1, H, W, C), lambda n: (n, 0, 0, 0))],
        out_specs=pl.BlockSpec((1, 1, C), lambda n: (n, 0, 0)),
        compiler_params=pltpu.CompilerParams(dimension_semantics=("parallel",)),
    )(x_nhwc)


# -----------------------------------------------------------------------------
# Kernel 2: fused  gap-BN -> 1x1 conv -> BN -> ReLU -> (+x) -> 3x3 conv + bias.
# -----------------------------------------------------------------------------
def _ce_kernel(x_ref, sums_ref, w1_ref, g1_ref, b1_ref, g2_ref, b2_ref,
               w3_ref, b3_ref, o_ref, xpad_ref, acc_ref, *, inv_hw, eps):
    n = pl.program_id(0)
    H, W, C = x_ref.shape[1], x_ref.shape[2], x_ref.shape[3]
    Cout = o_ref.shape[3]
    Nb = sums_ref.shape[0]

    # ---- GAP vector path: gap-BN -> 1x1 conv -> BN -> ReLU.
    #      Tiny (Nb, C) math; BN batch statistics computed in-kernel and
    #      recomputed per grid step (negligible cost, avoids an extra pass).
    m = sums_ref[...][:, 0, :] * inv_hw                            # (Nb, C) GAP means
    mu = jnp.mean(m, axis=0, keepdims=True)
    var = jnp.mean((m - mu) ** 2, axis=0, keepdims=True)
    mh = (m - mu) * (g1_ref[...] * jax.lax.rsqrt(var + eps)) + b1_ref[...]
    y = jnp.dot(mh, w1_ref[...], preferred_element_type=jnp.float32)   # 1x1 conv
    mu2 = jnp.mean(y, axis=0, keepdims=True)
    var2 = jnp.mean((y - mu2) ** 2, axis=0, keepdims=True)
    yh = (y - mu2) * (g2_ref[...] * jax.lax.rsqrt(var2 + eps)) + b2_ref[...]
    g = jnp.maximum(yh, 0.0)                                       # ReLU -> (Nb, C)

    # Select this image's row with a mask (avoids a dynamic slice).
    row = jax.lax.broadcasted_iota(jnp.int32, (Nb, 1), 0)
    g_n = jnp.sum(jnp.where(row == n, g, 0.0), axis=0, keepdims=True)   # (1, C)

    # ---- Residual broadcast-add + zero padding, built once in a VMEM halo buffer
    #      (never materialized in HBM).
    xpad_ref[...] = jnp.zeros_like(xpad_ref)
    xpad_ref[1:H + 1, 1:W + 1, :] = x_ref[0] + g_n

    # ---- 3x3 conv = 9 accumulated MXU matmuls over shifted views of the halo
    #      buffer.  bf16 operands, f32 accumulation in a VMEM scratch.
    acc_ref[...] = jnp.zeros_like(acc_ref)
    for ky in range(3):
        for kx in range(3):
            a = xpad_ref[ky:ky + H, kx:kx + W, :].reshape(H * W, C)
            acc_ref[...] += jnp.dot(a.astype(jnp.bfloat16), w3_ref[ky * 3 + kx],
                                    preferred_element_type=jnp.float32)
    out = acc_ref[...] + b3_ref[...]                               # conv bias
    o_ref[...] = out.reshape(1, H, W, Cout)


def ce_block_forward(params, x_nchw, eps=1e-5):
    x = jnp.transpose(x_nchw, (0, 2, 3, 1)).astype(jnp.float32)    # NCHW -> NHWC
    N, H, W, C = x.shape

    sums = gap_sums(x)                                             # (N, 1, C)

    kern = functools.partial(_ce_kernel, inv_hw=1.0 / (H * W), eps=eps)
    vec = pl.BlockSpec((1, C), lambda n: (0, 0))
    out = pl.pallas_call(
        kern,
        out_shape=jax.ShapeDtypeStruct((N, H, W, C), jnp.float32),
        grid=(N,),
        in_specs=[
            pl.BlockSpec((1, H, W, C), lambda n: (n, 0, 0, 0)),    # x (one image / step)
            pl.BlockSpec((N, 1, C), lambda n: (0, 0, 0)),          # GAP sums (VMEM-resident)
            pl.BlockSpec((C, C), lambda n: (0, 0)),                # 1x1 conv weight
            vec, vec,                                              # gap BN gamma / beta
            vec, vec,                                              # conv_gap BN gamma / beta
            pl.BlockSpec((9, C, C), lambda n: (0, 0, 0)),          # 3x3 weight (bf16, resident)
            vec,                                                   # conv_last bias
        ],
        out_specs=pl.BlockSpec((1, H, W, C), lambda n: (n, 0, 0, 0)),
        scratch_shapes=[
            pltpu.VMEM((H + 2, W + 2, C), jnp.float32),            # (x + g) halo buffer
            pltpu.VMEM((H * W, C), jnp.float32),                   # f32 conv accumulator
        ],
        compiler_params=pltpu.CompilerParams(dimension_semantics=("parallel",)),
    )(x, sums, params["w1"], params["bn1_g"], params["bn1_b"],
      params["bn2_g"], params["bn2_b"], params["w3"], params["b3"])
    return jnp.transpose(out, (0, 3, 1, 2))                        # NHWC -> NCHW


# -----------------------------------------------------------------------------
# Deterministic parameter construction.
# -----------------------------------------------------------------------------
def init_ce_params(key, C=128):
    k1, k2, k3 = jax.random.split(key, 3)
    # conv_gap: 1x1, bias=False  (kaiming-normal, fan_out)
    w_gap = jax.random.normal(k1, (C, C), jnp.float32) * math.sqrt(2.0 / C)    # (Cout, Cin)
    # conv_last: 3x3, bias=True  (PyTorch-default-style uniform init)
    fan_in = C * 3 * 3
    bound = 1.0 / math.sqrt(fan_in)
    w_last = jax.random.uniform(k2, (C, C, 3, 3), jnp.float32, -bound, bound)  # (Cout,Cin,kh,kw)
    b_last = jax.random.uniform(k3, (C,), jnp.float32, -bound, bound)
    return {
        "w1": w_gap.T,                                                         # (Cin, Cout)
        "bn1_g": jnp.ones((1, C), jnp.float32),
        "bn1_b": jnp.zeros((1, C), jnp.float32),
        "bn2_g": jnp.ones((1, C), jnp.float32),
        "bn2_b": jnp.zeros((1, C), jnp.float32),
        # (kh, kw, Cin, Cout) -> (9, Cin, Cout), bf16 MXU operand
        "w3": jnp.transpose(w_last, (2, 3, 1, 0)).reshape(9, C, C).astype(jnp.bfloat16),
        "b3": b_last.reshape(1, C),
    }


# -----------------------------------------------------------------------------
if __name__ == "__main__":
    C = 128                                        # CEBlock is fixed at 128 channels
    key = jax.random.PRNGKey(0)
    k_params, k_x = jax.random.split(key)
    params = init_ce_params(k_params, C)
    x = jax.random.normal(k_x, (2, C, 16, 16), jnp.float32)       # NCHW like PyTorch

    fwd = jax.jit(ce_block_forward)
    out = jax.block_until_ready(fwd(params, x))

    assert out.shape == (2, C, 16, 16), out.shape
    assert bool(jnp.all(jnp.isfinite(out)))
    print("KERNEL_OK")
</pallas_src>

<mosaic_0001>
module attributes {stable_mosaic.version = 11 : i64} {
  func.func @_gap_kernel(%arg0: i32, %arg1: memref<1x16x16x128xf32, #tpu.memory_space<vmem>>, %arg2: memref<1x1x128xf32, #tpu.memory_space<vmem>>) attributes {dimension_semantics = [#tpu.dimension_semantics<parallel>], iteration_bounds = array<i64: 2>, scalar_prefetch = 0 : i64, scratch_operands = 0 : i64, tpu.core_type = #tpu.core_type<tc>, window_params = [{transform_indices = @transform_0, window_bounds = array<i64: 1, 16, 16, 128>}, {transform_indices = @transform_1, window_bounds = array<i64: 1, 1, 128>}]} {
    %c0 = arith.constant 0 : index
    %c0_0 = arith.constant 0 : index
    %c0_1 = arith.constant 0 : index
    %c0_2 = arith.constant 0 : index
    %0 = vector.load %arg1[%c0, %c0_0, %c0_1, %c0_2] : memref<1x16x16x128xf32, #tpu.memory_space<vmem>>, vector<1x16x16x128xf32>
    %1 = vector.shape_cast %0 : vector<1x16x16x128xf32> to vector<16x16x128xf32>
    %cst = arith.constant dense<0.000000e+00> : vector<16x128xf32>
    %2 = vector.multi_reduction <add>, %1, %cst [0] : vector<16x16x128xf32> to vector<16x128xf32>
    %cst_3 = arith.constant dense<0.000000e+00> : vector<128xf32>
    %3 = vector.multi_reduction <add>, %2, %cst_3 [0] : vector<16x128xf32> to vector<128xf32>
    %4 = vector.shape_cast %3 : vector<128xf32> to vector<1x128xf32>
    %c0_4 = arith.constant 0 : index
    %c0_5 = arith.constant 0 : index
    %c0_6 = arith.constant 0 : index
    %5 = vector.load %arg2[%c0_4, %c0_5, %c0_6] : memref<1x1x128xf32, #tpu.memory_space<vmem>>, vector<1x1x128xf32>
    %6 = vector.shape_cast %5 : vector<1x1x128xf32> to vector<1x128xf32>
    %7 = vector.shape_cast %4 : vector<1x128xf32> to vector<1x1x128xf32>
    tpu.vector_store %arg2[%c0_4, %c0_5, %c0_6], %7 {strides = array<i32>} : memref<1x1x128xf32, #tpu.memory_space<vmem>>, vector<1x1x128xf32>,
    return
  }
  func.func @transform_0(%arg0: i32) -> (i32, i32, i32, i32) {
    %c0_i32 = arith.constant 0 : i32
    %c0_i32_0 = arith.constant 0 : i32
    %c0_i32_1 = arith.constant 0 : i32
    %c0_i32_2 = arith.constant 0 : i32
    return %arg0, %c0_i32, %c0_i32_0, %c0_i32_1 : i32, i32, i32, i32
  }
  func.func @transform_1(%arg0: i32) -> (i32, i32, i32) {
    %c0_i32 = arith.constant 0 : i32
    %c0_i32_0 = arith.constant 0 : i32
    %c0_i32_1 = arith.constant 0 : i32
    return %arg0, %c0_i32, %c0_i32_0 : i32, i32, i32
  }
}

module attributes {stable_mosaic.version = 11 : i64} {
  func.func @_ce_kernel(%arg0: i32, %arg1: memref<1x16x16x128xf32, #tpu.memory_space<vmem>>, %arg2: memref<2x1x128xf32, #tpu.memory_space<vmem>>, %arg3: memref<128x128xf32, #tpu.memory_space<vmem>>, %arg4: memref<1x128xf32, #tpu.memory_space<vmem>>, %arg5: memref<1x128xf32, #tpu.memory_space<vmem>>, %arg6: memref<1x128xf32, #tpu.memory_space<vmem>>, %arg7: memref<1x128xf32, #tpu.memory_space<vmem>>, %arg8: memref<9x128x128xbf16, #tpu.memory_space<vmem>>, %arg9: memref<1x128xf32, #tpu.memory_space<vmem>>, %arg10: memref<1x16x16x128xf32, #tpu.memory_space<vmem>>, %arg11: memref<18x18x128xf32, #tpu.memory_space<vmem>>, %arg12: memref<256x128xf32, #tpu.memory_space<vmem>>) attributes {dimension_semantics = [#tpu.dimension_semantics<parallel>], iteration_bounds = array<i64: 2>, scalar_prefetch = 0 : i64, scratch_operands = 2 : i64, tpu.core_type = #tpu.core_type<tc>, window_params = [{transform_indices = @transform_0, window_bounds = array<i64: 1, 16, 16, 128>}, {pipeline_mode = #tpu.pipeline_mode<synchronous>, transform_indices = @transform_1, window_bounds = array<i64: 2, 1, 128>}, {pipeline_mode = #tpu.pipeline_mode<synchronous>, transform_indices = @transform_2, window_bounds = array<i64: 128, 128>}, {pipeline_mode = #tpu.pipeline_mode<synchronous>, transform_indices = @transform_3, window_bounds = array<i64: 1, 128>}, {pipeline_mode = #tpu.pipeline_mode<synchronous>, transform_indices = @transform_4, window_bounds = array<i64: 1, 128>}, {pipeline_mode = #tpu.pipeline_mode<synchronous>, transform_indices = @transform_5, window_bounds = array<i64: 1, 128>}, {pipeline_mode = #tpu.pipeline_mode<synchronous>, transform_indices = @transform_6, window_bounds = array<i64: 1, 128>}, {pipeline_mode = #tpu.pipeline_mode<synchronous>, transform_indices = @transform_7, window_bounds = array<i64: 9, 128, 128>}, {pipeline_mode = #tpu.pipeline_mode<synchronous>, transform_indices = @transform_8, window_bounds = array<i64: 1, 128>}, {transform_indices = @transform_9, window_bounds = array<i64: 1, 16, 16, 128>}]} {
    %c0 = arith.constant 0 : index
    %c0_0 = arith.constant 0 : index
    %c0_1 = arith.constant 0 : index
    %0 = vector.load %arg2[%c0, %c0_0, %c0_1] : memref<2x1x128xf32, #tpu.memory_space<vmem>>, vector<2x1x128xf32>
    %1 = vector.shape_cast %0 : vector<2x1x128xf32> to vector<2x128xf32>
    %cst = arith.constant 3.906250e-03 : f32
    %2 = vector.broadcast %cst : f32 to vector<2x128xf32>
    %3 = arith.mulf %1, %2 : vector<2x128xf32>
    %cst_2 = arith.constant dense<0.000000e+00> : vector<128xf32>
    %4 = vector.multi_reduction <add>, %3, %cst_2 [0] : vector<2x128xf32> to vector<128xf32>
    %5 = vector.shape_cast %4 : vector<128xf32> to vector<1x128xf32>
    %cst_3 = arith.constant 2.000000e+00 : f32
    %6 = vector.broadcast %cst_3 : f32 to vector<1x128xf32>
    %7 = arith.divf %5, %6 : vector<1x128xf32>
    %8 = vector.broadcast %7 : vector<1x128xf32> to vector<2x128xf32>
    %9 = arith.subf %3, %8 : vector<2x128xf32>
    %10 = arith.mulf %9, %9 : vector<2x128xf32>
    %cst_4 = arith.constant dense<0.000000e+00> : vector<128xf32>
    %11 = vector.multi_reduction <add>, %10, %cst_4 [0] : vector<2x128xf32> to vector<128xf32>
    %12 = vector.shape_cast %11 : vector<128xf32> to vector<1x128xf32>
    %cst_5 = arith.constant 2.000000e+00 : f32
    %13 = vector.broadcast %cst_5 : f32 to vector<1x128xf32>
    %14 = arith.divf %12, %13 : vector<1x128xf32>
    %15 = vector.broadcast %7 : vector<1x128xf32> to vector<2x128xf32>
    %16 = arith.subf %3, %15 : vector<2x128xf32>
    %c0_6 = arith.constant 0 : index
    %c0_7 = arith.constant 0 : index
    %17 = vector.load %arg4[%c0_6, %c0_7] : memref<1x128xf32, #tpu.memory_space<vmem>>, vector<1x128xf32>
    %cst_8 = arith.constant 9.99999974E-6 : f32
    %18 = vector.broadcast %cst_8 : f32 to vector<1x128xf32>
    %19 = arith.addf %14, %18 : vector<1x128xf32>
    %20 = math.rsqrt %19 : vector<1x128xf32>
    %21 = arith.mulf %17, %20 : vector<1x128xf32>
    %22 = vector.broadcast %21 : vector<1x128xf32> to vector<2x128xf32>
    %23 = arith.mulf %16, %22 : vector<2x128xf32>
    %c0_9 = arith.constant 0 : index
    %c0_10 = arith.constant 0 : index
    %24 = vector.load %arg5[%c0_9, %c0_10] : memref<1x128xf32, #tpu.memory_space<vmem>>, vector<1x128xf32>
    %25 = vector.broadcast %24 : vector<1x128xf32> to vector<2x128xf32>
    %26 = arith.addf %23, %25 : vector<2x128xf32>
    %c0_11 = arith.constant 0 : index
    %c0_12 = arith.constant 0 : index
    %27 = vector.load %arg3[%c0_11, %c0_12] : memref<128x128xf32, #tpu.memory_space<vmem>>, vector<128x128xf32>
    %cst_13 = arith.constant dense<0.000000e+00> : vector<2x128xf32>
    %28 = tpu.matmul %26, %27, %cst_13 {dimension_numbers = #tpu.dot_dimension_numbers<[1], [0], [0], [1], [0, 0, 1, 1], [], []>} : vector<2x128xf32>, vector<128x128xf32>, vector<2x128xf32> -> vector<2x128xf32>
    %cst_14 = arith.constant dense<0.000000e+00> : vector<128xf32>
    %29 = vector.multi_reduction <add>, %28, %cst_14 [0] : vector<2x128xf32> to vector<128xf32>
    %30 = vector.shape_cast %29 : vector<128xf32> to vector<1x128xf32>
    %cst_15 = arith.constant 2.000000e+00 : f32
    %31 = vector.broadcast %cst_15 : f32 to vector<1x128xf32>
    %32 = arith.divf %30, %31 : vector<1x128xf32>
    %33 = vector.broadcast %32 : vector<1x128xf32> to vector<2x128xf32>
    %34 = arith.subf %28, %33 : vector<2x128xf32>
    %35 = arith.mulf %34, %34 : vector<2x128xf32>
    %cst_16 = arith.constant dense<0.000000e+00> : vector<128xf32>
    %36 = vector.multi_reduction <add>, %35, %cst_16 [0] : vector<2x128xf32> to vector<128xf32>
    %37 = vector.shape_cast %36 : vector<128xf32> to vector<1x128xf32>
    %cst_17 = arith.constant 2.000000e+00 : f32
    %38 = vector.broadcast %cst_17 : f32 to vector<1x128xf32>
    %39 = arith.divf %37, %38 : vector<1x128xf32>
    %40 = vector.broadcast %32 : vector<1x128xf32> to vector<2x128xf32>
    %41 = arith.subf %28, %40 : vector<2x128xf32>
    %c0_18 = arith.constant 0 : index
    %c0_19 = arith.constant 0 : index
    %42 = vector.load %arg6[%c0_18, %c0_19] : memref<1x128xf32, #tpu.memory_space<vmem>>, vector<1x128xf32>
    %cst_20 = arith.constant 9.99999974E-6 : f32
    %43 = vector.broadcast %cst_20 : f32 to vector<1x128xf32>
    %44 = arith.addf %39, %43 : vector<1x128xf32>
    %45 = math.rsqrt %44 : vector<1x128xf32>
    %46 = arith.mulf %42, %45 : vector<1x128xf32>
    %47 = vector.broadcast %46 : vector<1x128xf32> to vector<2x128xf32>
    %48 = arith.mulf %41, %47 : vector<2x128xf32>
    %c0_21 = arith.constant 0 : index
    %c0_22 = arith.constant 0 : index
    %49 = vector.load %arg7[%c0_21, %c0_22] : memref<1x128xf32, #tpu.memory_space<vmem>>, vector<1x128xf32>
    %50 = vector.broadcast %49 : vector<1x128xf32> to vector<2x128xf32>
    %51 = arith.addf %48, %50 : vector<2x128xf32>
    %cst_23 = arith.constant 0.000000e+00 : f32
    %52 = vector.broadcast %cst_23 : f32 to vector<2x128xf32>
    %53 = arith.maximumf %51, %52 : vector<2x128xf32>
    %54 = tpu.iota {dimensions = array<i32: 0>} : vector<2x1xi32>
    %55 = vector.broadcast %arg0 : i32 to vector<2x1xi32>
    %56 = arith.cmpi eq, %54, %55 : vector<2x1xi32>
    %cst_24 = arith.constant 0.000000e+00 : f32
    %57 = vector.shape_cast %56 : vector<2x1xi1> to vector<2x1xi1>
    %58 = vector.broadcast %57 : vector<2x1xi1> to vector<2x128xi1>
    %59 = vector.broadcast %cst_24 : f32 to vector<2x128xf32>
    %60 = arith.select %58, %53, %59 : vector<2x128xi1>, vector<2x128xf32>
    %cst_25 = arith.constant dense<0.000000e+00> : vector<128xf32>
    %61 = vector.multi_reduction <add>, %60, %cst_25 [0] : vector<2x128xf32> to vector<128xf32>
    %62 = vector.shape_cast %61 : vector<128xf32> to vector<1x128xf32>
    %cst_26 = arith.constant 0.000000e+00 : f32
    %63 = vector.broadcast %cst_26 : f32 to vector<18x18x128xf32>
    %c0_27 = arith.constant 0 : index
    %c0_28 = arith.constant 0 : index
    %c0_29 = arith.constant 0 : index
    %64 = vector.load %arg11[%c0_27, %c0_28, %c0_29] : memref<18x18x128xf32, #tpu.memory_space<vmem>>, vector<18x18x128xf32>
    tpu.vector_store %arg11[%c0_27, %c0_28, %c0_29], %63 {strides = array<i32>} : memref<18x18x128xf32, #tpu.memory_space<vmem>>, vector<18x18x128xf32>,
    %c0_30 = arith.constant 0 : index
    %c0_31 = arith.constant 0 : index
    %c0_32 = arith.constant 0 : index
    %c0_33 = arith.constant 0 : index
    %65 = vector.load %arg1[%c0_30, %c0_31, %c0_32, %c0_33] : memref<1x16x16x128xf32, #tpu.memory_space<vmem>>, vector<1x16x16x128xf32>
    %66 = vector.shape_cast %65 : vector<1x16x16x128xf32> to vector<16x16x128xf32>
    %67 = vector.shape_cast %62 : vector<1x128xf32> to vector<1x1x128xf32>
    %68 = vector.broadcast %67 : vector<1x1x128xf32> to vector<16x16x128xf32>
    %69 = arith.addf %66, %68 : vector<16x16x128xf32>
    %c1 = arith.constant 1 : index
    %c1_34 = arith.constant 1 : index
    %c0_35 = arith.constant 0 : index
    %70 = vector.load %arg11[%c1, %c1_34, %c0_35] : memref<18x18x128xf32, #tpu.memory_space<vmem>>, vector<16x16x128xf32>
    tpu.vector_store %arg11[%c1, %c1_34, %c0_35], %69 {strides = array<i32>} : memref<18x18x128xf32, #tpu.memory_space<vmem>>, vector<16x16x128xf32>,
    %cst_36 = arith.constant 0.000000e+00 : f32
    %71 = vector.broadcast %cst_36 : f32 to vector<256x128xf32>
    %c0_37 = arith.constant 0 : index
    %c0_38 = arith.constant 0 : index
    %72 = vector.load %arg12[%c0_37, %c0_38] : memref<256x128xf32, #tpu.memory_space<vmem>>, vector<256x128xf32>
    tpu.vector_store %arg12[%c0_37, %c0_38], %71 {strides = array<i32>} : memref<256x128xf32, #tpu.memory_space<vmem>>, vector<256x128xf32>,
    %c0_39 = arith.constant 0 : index
    %c0_40 = arith.constant 0 : index
    %c0_41 = arith.constant 0 : index
    %73 = vector.load %arg11[%c0_39, %c0_40, %c0_41] : memref<18x18x128xf32, #tpu.memory_space<vmem>>, vector<16x16x128xf32>
    %74 = vector.shape_cast %73 : vector<16x16x128xf32> to vector<256x128xf32>
    %c0_42 = arith.constant 0 : index
    %c0_43 = arith.constant 0 : index
    %75 = vector.load %arg12[%c0_42, %c0_43] : memref<256x128xf32, #tpu.memory_space<vmem>>, vector<256x128xf32>
    %76 = arith.truncf %74 : vector<256x128xf32> to vector<256x128xbf16>
    %c0_44 = arith.constant 0 : index
    %c0_45 = arith.constant 0 : index
    %c0_46 = arith.constant 0 : index
    %77 = vector.load %arg8[%c0_44, %c0_45, %c0_46] : memref<9x128x128xbf16, #tpu.memory_space<vmem>>, vector<1x128x128xbf16>
    %78 = vector.shape_cast %77 : vector<1x128x128xbf16> to vector<128x128xbf16>
    %cst_47 = arith.constant dense<0.000000e+00> : vector<256x128xf32>
    %79 = tpu.matmul %76, %78, %cst_47 {dimension_numbers = #tpu.dot_dimension_numbers<[1], [0], [0], [1], [0, 0, 1, 1], [], []>} : vector<256x128xbf16>, vector<128x128xbf16>, vector<256x128xf32> -> vector<256x128xf32>
    %80 = arith.addf %75, %79 : vector<256x128xf32>
    %c0_48 = arith.constant 0 : index
    %c0_49 = arith.constant 0 : index
    %81 = vector.load %arg12[%c0_48, %c0_49] : memref<256x128xf32, #tpu.memory_space<vmem>>, vector<256x128xf32>
    tpu.vector_store %arg12[%c0_48, %c0_49], %80 {strides = array<i32>} : memref<256x128xf32, #tpu.memory_space<vmem>>, vector<256x128xf32>,
    %c0_50 = arith.constant 0 : index
    %c1_51 = arith.constant 1 : index
    %c0_52 = arith.constant 0 : index
    %82 = vector.load %arg11[%c0_50, %c1_51, %c0_52] : memref<18x18x128xf32, #tpu.memory_space<vmem>>, vector<16x16x128xf32>
    %83 = vector.shape_cast %82 : vector<16x16x128xf32> to vector<256x128xf32>
    %c0_53 = arith.constant 0 : index
    %c0_54 = arith.constant 0 : index
    %84 = vector.load %arg12[%c0_53, %c0_54] : memref<256x128xf32, #tpu.memory_space<vmem>>, vector<256x128xf32>
    %85 = arith.truncf %83 : vector<256x128xf32> to vector<256x128xbf16>
    %c1_55 = arith.constant 1 : index
    %c0_56 = arith.constant 0 : index
    %c0_57 = arith.constant 0 : index
    %86 = vector.load %arg8[%c1_55, %c0_56, %c0_57] : memref<9x128x128xbf16, #tpu.memory_space<vmem>>, vector<1x128x128xbf16>
    %87 = vector.shape_cast %86 : vector<1x128x128xbf16> to vector<128x128xbf16>
    %cst_58 = arith.constant dense<0.000000e+00> : vector<256x128xf32>
    %88 = tpu.matmul %85, %87, %cst_58 {dimension_numbers = #tpu.dot_dimension_numbers<[1], [0], [0], [1], [0, 0, 1, 1], [], []>} : vector<256x128xbf16>, vector<128x128xbf16>, vector<256x128xf32> -> vector<256x128xf32>
    %89 = arith.addf %84, %88 : vector<256x128xf32>
    %c0_59 = arith.constant 0 : index
    %c0_60 = arith.constant 0 : index
    %90 = vector.load %arg12[%c0_59, %c0_60] : memref<256x128xf32, #tpu.memory_space<vmem>>, vector<256x128xf32>
    tpu.vector_store %arg12[%c0_59, %c0_60], %89 {strides = array<i32>} : memref<256x128xf32, #tpu.memory_space<vmem>>, vector<256x128xf32>,
    %c0_61 = arith.constant 0 : index
    %c2 = arith.constant 2 : index
    %c0_62 = arith.constant 0 : index
    %91 = vector.load %arg11[%c0_61, %c2, %c0_62] : memref<18x18x128xf32, #tpu.memory_space<vmem>>, vector<16x16x128xf32>
    %92 = vector.shape_cast %91 : vector<16x16x128xf32> to vector<256x128xf32>
    %c0_63 = arith.constant 0 : index
    %c0_64 = arith.constant 0 : index
    %93 = vector.load %arg12[%c0_63, %c0_64] : memref<256x128xf32, #tpu.memory_space<vmem>>, vector<256x128xf32>
    %94 = arith.truncf %92 : vector<256x128xf32> to vector<256x128xbf16>
    %c2_65 = arith.constant 2 : index
    %c0_66 = arith.constant 0 : index
    %c0_67 = arith.constant 0 : index
    %95 = vector.load %arg8[%c2_65, %c0_66, %c0_67] : memref<9x128x128xbf16, #tpu.memory_space<vmem>>, vector<1x128x128xbf16>
    %96 = vector.shape_cast %95 : vector<1x128x128xbf16> to vector<128x128xbf16>
    %cst_68 = arith.constant dense<0.000000e+00> : vector<256x128xf32>
    %97 = tpu.matmul %94, %96, %cst_68 {dimension_numbers = #tpu.dot_dimension_numbers<[1], [0], [0], [1], [0, 0, 1, 1], [], []>} : vector<256x128xbf16>, vector<128x128xbf16>, vector<256x128xf32> -> vector<256x128xf32>
    %98 = arith.addf %93, %97 : vector<256x128xf32>
    %c0_69 = arith.constant 0 : index
    %c0_70 = arith.constant 0 : index
    %99 = vector.load %arg12[%c0_69, %c0_70] : memref<256x128xf32, #tpu.memory_space<vmem>>, vector<256x128xf32>
    tpu.vector_store %arg12[%c0_69, %c0_70], %98 {strides = array<i32>} : memref<256x128xf32, #tpu.memory_space<vmem>>, vector<256x128xf32>,
    %c1_71 = arith.constant 1 : index
    %c0_72 = arith.constant 0 : index
    %c0_73 = arith.constant 0 : index
    %100 = vector.load %arg11[%c1_71, %c0_72, %c0_73] : memref<18x18x128xf32, #tpu.memory_space<vmem>>, vector<16x16x128xf32>
    %101 = vector.shape_cast %100 : vector<16x16x128xf32> to vector<256x128xf32>
    %c0_74 = arith.constant 0 : index
    %c0_75 = arith.constant 0 : index
    %102 = vector.load %arg12[%c0_74, %c0_75] : memref<256x128xf32, #tpu.memory_space<vmem>>, vector<256x128xf32>
    %103 = arith.truncf %101 : vector<256x128xf32> to vector<256x128xbf16>
    %c3 = arith.constant 3 : index
    %c0_76 = arith.constant 0 : index
    %c0_77 = arith.constant 0 : index
    %104 = vector.load %arg8[%c3, %c0_76, %c0_77] : memref<9x128x128xbf16, #tpu.memory_space<vmem>>, vector<1x128x128xbf16>
    %105 = vector.shape_cast %104 : vector<1x128x128xbf16> to vector<128x128xbf16>
    %cst_78 = arith.constant dense<0.000000e+00> : vector<256x128xf32>
    %106 = tpu.matmul %103, %105, %cst_78 {dimension_numbers = #tpu.dot_dimension_numbers<[1], [0], [0], [1], [0, 0, 1, 1], [], []>} : vector<256x128xbf16>, vector<128x128xbf16>, vector<256x128xf32> -> vector<256x128xf32>
    %107 = arith.addf %102, %106 : vector<256x128xf32>
    %c0_79 = arith.constant 0 : index
    %c0_80 = arith.constant 0 : index
    %108 = vector.load %arg12[%c0_79, %c0_80] : memref<256x128xf32, #tpu.memory_space<vmem>>, vector<256x128xf32>
    tpu.vector_store %arg12[%c0_79, %c0_80], %107 {strides = array<i32>} : memref<256x128xf32, #tpu.memory_space<vmem>>, vector<256x128xf32>,
    %c1_81 = arith.constant 1 : index
    %c1_82 = arith.constant 1 : index
    %c0_83 = arith.constant 0 : index
    %109 = vector.load %arg11[%c1_81, %c1_82, %c0_83] : memref<18x18x128xf32, #tpu.memory_space<vmem>>, vector<16x16x128xf32>
    %110 = vector.shape_cast %109 : vector<16x16x128xf32> to vector<256x128xf32>
    %c0_84 = arith.constant 0 : index
    %c0_85 = arith.constant 0 : index
    %111 = vector.load %arg12[%c0_84, %c0_85] : memref<256x128xf32, #tpu.memory_space<vmem>>, vector<256x128xf32>
    %112 = arith.truncf %110 : vector<256x128xf32> to vector<256x128xbf16>
    %c4 = arith.constant 4 : index
    %c0_86 = arith.constant 0 : index
    %c0_87 = arith.constant 0 : index
    %113 = vector.load %arg8[%c4, %c0_86, %c0_87] : memref<9x128x128xbf16, #tpu.memory_space<vmem>>, vector<1x128x128xbf16>
    %114 = vector.shape_cast %113 : vector<1x128x128xbf16> to vector<128x128xbf16>
    %cst_88 = arith.constant dense<0.000000e+00> : vector<256x128xf32>
    %115 = tpu.matmul %112, %114, %cst_88 {dimension_numbers = #tpu.dot_dimension_numbers<[1], [0], [0], [1], [0, 0, 1, 1], [], []>} : vector<256x128xbf16>, vector<128x128xbf16>, vector<256x128xf32> -> vector<256x128xf32>
    %116 = arith.addf %111, %115 : vector<256x128xf32>
    %c0_89 = arith.constant 0 : index
    %c0_90 = arith.constant 0 : index
    %117 = vector.load %arg12[%c0_89, %c0_90] : memref<256x128xf32, #tpu.memory_space<vmem>>, vector<256x128xf32>
    tpu.vector_store %arg12[%c0_89, %c0_90], %116 {strides = array<i32>} : memref<256x128xf32, #tpu.memory_space<vmem>>, vector<256x128xf32>,
    %c1_91 = arith.constant 1 : index
    %c2_92 = arith.constant 2 : index
    %c0_93 = arith.constant 0 : index
    %118 = vector.load %arg11[%c1_91, %c2_92, %c0_93] : memref<18x18x128xf32, #tpu.memory_space<vmem>>, vector<16x16x128xf32>
    %119 = vector.shape_cast %118 : vector<16x16x128xf32> to vector<256x128xf32>
    %c0_94 = arith.constant 0 : index
    %c0_95 = arith.constant 0 : index
    %120 = vector.load %arg12[%c0_94, %c0_95] : memref<256x128xf32, #tpu.memory_space<vmem>>, vector<256x128xf32>
    %121 = arith.truncf %119 : vector<256x128xf32> to vector<256x128xbf16>
    %c5 = arith.constant 5 : index
    %c0_96 = arith.constant 0 : index
    %c0_97 = arith.constant 0 : index
    %122 = vector.load %arg8[%c5, %c0_96, %c0_97] : memref<9x128x128xbf16, #tpu.memory_space<vmem>>, vector<1x128x128xbf16>
    %123 = vector.shape_cast %122 : vector<1x128x128xbf16> to vector<128x128xbf16>
    %cst_98 = arith.constant dense<0.000000e+00> : vector<256x128xf32>
    %124 = tpu.matmul %121, %123, %cst_98 {dimension_numbers = #tpu.dot_dimension_numbers<[1], [0], [0], [1], [0, 0, 1, 1], [], []>} : vector<256x128xbf16>, vector<128x128xbf16>, vector<256x128xf32> -> vector<256x128xf32>
    %125 = arith.addf %120, %124 : vector<256x128xf32>
    %c0_99 = arith.constant 0 : index
    %c0_100 = arith.constant 0 : index
    %126 = vector.load %arg12[%c0_99, %c0_100] : memref<256x128xf32, #tpu.memory_space<vmem>>, vector<256x128xf32>
    tpu.vector_store %arg12[%c0_99, %c0_100], %125 {strides = array<i32>} : memref<256x128xf32, #tpu.memory_space<vmem>>, vector<256x128xf32>,
    %c2_101 = arith.constant 2 : index
    %c0_102 = arith.constant 0 : index
    %c0_103 = arith.constant 0 : index
    %127 = vector.load %arg11[%c2_101, %c0_102, %c0_103] : memref<18x18x128xf32, #tpu.memory_space<vmem>>, vector<16x16x128xf32>
    %128 = vector.shape_cast %127 : vector<16x16x128xf32> to vector<256x128xf32>
    %c0_104 = arith.constant 0 : index
    %c0_105 = arith.constant 0 : index
    %129 = vector.load %arg12[%c0_104, %c0_105] : memref<256x128xf32, #tpu.memory_space<vmem>>, vector<256x128xf32>
    %130 = arith.truncf %128 : vector<256x128xf32> to vector<256x128xbf16>
    %c6 = arith.constant 6 : index
    %c0_106 = arith.constant 0 : index
    %c0_107 = arith.constant 0 : index
    %131 = vector.load %arg8[%c6, %c0_106, %c0_107] : memref<9x128x128xbf16, #tpu.memory_space<vmem>>, vector<1x128x128xbf16>
    %132 = vector.shape_cast %131 : vector<1x128x128xbf16> to vector<128x128xbf16>
    %cst_108 = arith.constant dense<0.000000e+00> : vector<256x128xf32>
    %133 = tpu.matmul %130, %132, %cst_108 {dimension_numbers = #tpu.dot_dimension_numbers<[1], [0], [0], [1], [0, 0, 1, 1], [], []>} : vector<256x128xbf16>, vector<128x128xbf16>, vector<256x128xf32> -> vector<256x128xf32>
    %134 = arith.addf %129, %133 : vector<256x128xf32>
    %c0_109 = arith.constant 0 : index
    %c0_110 = arith.constant 0 : index
    %135 = vector.load %arg12[%c0_109, %c0_110] : memref<256x128xf32, #tpu.memory_space<vmem>>, vector<256x128xf32>
    tpu.vector_store %arg12[%c0_109, %c0_110], %134 {strides = array<i32>} : memref<256x128xf32, #tpu.memory_space<vmem>>, vector<256x128xf32>,
    %c2_111 = arith.constant 2 : index
    %c1_112 = arith.constant 1 : index
    %c0_113 = arith.constant 0 : index
    %136 = vector.load %arg11[%c2_111, %c1_112, %c0_113] : memref<18x18x128xf32, #tpu.memory_space<vmem>>, vector<16x16x128xf32>
    %137 = vector.shape_cast %136 : vector<16x16x128xf32> to vector<256x128xf32>
    %c0_114 = arith.constant 0 : index
    %c0_115 = arith.constant 0 : index
    %138 = vector.load %arg12[%c0_114, %c0_115] : memref<256x128xf32, #tpu.memory_space<vmem>>, vector<256x128xf32>
    %139 = arith.truncf %137 : vector<256x128xf32> to vector<256x128xbf16>
    %c7 = arith.constant 7 : index
    %c0_116 = arith.constant 0 : index
    %c0_117 = arith.constant 0 : index
    %140 = vector.load %arg8[%c7, %c0_116, %c0_117] : memref<9x128x128xbf16, #tpu.memory_space<vmem>>, vector<1x128x128xbf16>
    %141 = vector.shape_cast %140 : vector<1x128x128xbf16> to vector<128x128xbf16>
    %cst_118 = arith.constant dense<0.000000e+00> : vector<256x128xf32>
    %142 = tpu.matmul %139, %141, %cst_118 {dimension_numbers = #tpu.dot_dimension_numbers<[1], [0], [0], [1], [0, 0, 1, 1], [], []>} : vector<256x128xbf16>, vector<128x128xbf16>, vector<256x128xf32> -> vector<256x128xf32>
    %143 = arith.addf %138, %142 : vector<256x128xf32>
    %c0_119 = arith.constant 0 : index
    %c0_120 = arith.constant 0 : index
    %144 = vector.load %arg12[%c0_119, %c0_120] : memref<256x128xf32, #tpu.memory_space<vmem>>, vector<256x128xf32>
    tpu.vector_store %arg12[%c0_119, %c0_120], %143 {strides = array<i32>} : memref<256x128xf32, #tpu.memory_space<vmem>>, vector<256x128xf32>,
    %c2_121 = arith.constant 2 : index
    %c2_122 = arith.constant 2 : index
    %c0_123 = arith.constant 0 : index
    %145 = vector.load %arg11[%c2_121, %c2_122, %c0_123] : memref<18x18x128xf32, #tpu.memory_space<vmem>>, vector<16x16x128xf32>
    %146 = vector.shape_cast %145 : vector<16x16x128xf32> to vector<256x128xf32>
    %c0_124 = arith.constant 0 : index
    %c0_125 = arith.constant 0 : index
    %147 = vector.load %arg12[%c0_124, %c0_125] : memref<256x128xf32, #tpu.memory_space<vmem>>, vector<256x128xf32>
    %148 = arith.truncf %146 : vector<256x128xf32> to vector<256x128xbf16>
    %c8 = arith.constant 8 : index
    %c0_126 = arith.constant 0 : index
    %c0_127 = arith.constant 0 : index
    %149 = vector.load %arg8[%c8, %c0_126, %c0_127] : memref<9x128x128xbf16, #tpu.memory_space<vmem>>, vector<1x128x128xbf16>
    %150 = vector.shape_cast %149 : vector<1x128x128xbf16> to vector<128x128xbf16>
    %cst_128 = arith.constant dense<0.000000e+00> : vector<256x128xf32>
    %151 = tpu.matmul %148, %150, %cst_128 {dimension_numbers = #tpu.dot_dimension_numbers<[1], [0], [0], [1], [0, 0, 1, 1], [], []>} : vector<256x128xbf16>, vector<128x128xbf16>, vector<256x128xf32> -> vector<256x128xf32>
    %152 = arith.addf %147, %151 : vector<256x128xf32>
    %c0_129 = arith.constant 0 : index
    %c0_130 = arith.constant 0 : index
    %153 = vector.load %arg12[%c0_129, %c0_130] : memref<256x128xf32, #tpu.memory_space<vmem>>, vector<256x128xf32>
    tpu.vector_store %arg12[%c0_129, %c0_130], %152 {strides = array<i32>} : memref<256x128xf32, #tpu.memory_space<vmem>>, vector<256x128xf32>,
    %c0_131 = arith.constant 0 : index
    %c0_132 = arith.constant 0 : index
    %154 = vector.load %arg12[%c0_131, %c0_132] : memref<256x128xf32, #tpu.memory_space<vmem>>, vector<256x128xf32>
    %c0_133 = arith.constant 0 : index
    %c0_134 = arith.constant 0 : index
    %155 = vector.load %arg9[%c0_133, %c0_134] : memref<1x128xf32, #tpu.memory_space<vmem>>, vector<1x128xf32>
    %156 = vector.broadcast %155 : vector<1x128xf32> to vector<256x128xf32>
    %157 = arith.addf %154, %156 : vector<256x128xf32>
    %158 = vector.shape_cast %157 : vector<256x128xf32> to vector<1x16x16x128xf32>
    %c0_135 = arith.constant 0 : index
    %c0_136 = arith.constant 0 : index
    %c0_137 = arith.constant 0 : index
    %c0_138 = arith.constant 0 : index
    %159 = vector.load %arg10[%c0_135, %c0_136, %c0_137, %c0_138] : memref<1x16x16x128xf32, #tpu.memory_space<vmem>>, vector<1x16x16x128xf32>
    tpu.vector_store %arg10[%c0_135, %c0_136, %c0_137, %c0_138], %158 {strides = array<i32>} : memref<1x16x16x128xf32, #tpu.memory_space<vmem>>, vector<1x16x16x128xf32>,
    return
  }
  func.func @transform_0(%arg0: i32) -> (i32, i32, i32, i32) {
    %c0_i32 = arith.constant 0 : i32
    %c0_i32_0 = arith.constant 0 : i32
    %c0_i32_1 = arith.constant 0 : i32
    %c0_i32_2 = arith.constant 0 : i32
    return %arg0, %c0_i32, %c0_i32_0, %c0_i32_1 : i32, i32, i32, i32
  }
  func.func @transform_1(%arg0: i32) -> (i32, i32, i32) {
    %c0_i32 = arith.constant 0 : i32
    %c0_i32_0 = arith.constant 0 : i32
    %c0_i32_1 = arith.constant 0 : i32
    %c0_i32_2 = arith.constant 0 : i32
    return %c0_i32, %c0_i32_0, %c0_i32_1 : i32, i32, i32
  }
  func.func @transform_2(%arg0: i32) -> (i32, i32) {
    %c0_i32 = arith.constant 0 : i32
    %c0_i32_0 = arith.constant 0 : i32
    %c0_i32_1 = arith.constant 0 : i32
    return %c0_i32, %c0_i32_0 : i32, i32
  }
  func.func @transform_3(%arg0: i32) -> (i32, i32) {
    %c0_i32 = arith.constant 0 : i32
    %c0_i32_0 = arith.constant 0 : i32
    %c0_i32_1 = arith.constant 0 : i32
    return %c0_i32, %c0_i32_0 : i32, i32
  }
  func.func @transform_4(%arg0: i32) -> (i32, i32) {
    %c0_i32 = arith.constant 0 : i32
    %c0_i32_0 = arith.constant 0 : i32
    %c0_i32_1 = arith.constant 0 : i32
    return %c0_i32, %c0_i32_0 : i32, i32
  }
  func.func @transform_5(%arg0: i32) -> (i32, i32) {
    %c0_i32 = arith.constant 0 : i32
    %c0_i32_0 = arith.constant 0 : i32
    %c0_i32_1 = arith.constant 0 : i32
    return %c0_i32, %c0_i32_0 : i32, i32
  }
  func.func @transform_6(%arg0: i32) -> (i32, i32) {
    %c0_i32 = arith.constant 0 : i32
    %c0_i32_0 = arith.constant 0 : i32
    %c0_i32_1 = arith.constant 0 : i32
    return %c0_i32, %c0_i32_0 : i32, i32
  }
  func.func @transform_7(%arg0: i32) -> (i32, i32, i32) {
    %c0_i32 = arith.constant 0 : i32
    %c0_i32_0 = arith.constant 0 : i32
    %c0_i32_1 = arith.constant 0 : i32
    %c0_i32_2 = arith.constant 0 : i32
    return %c0_i32, %c0_i32_0, %c0_i32_1 : i32, i32, i32
  }
  func.func @transform_8(%arg0: i32) -> (i32, i32) {
    %c0_i32 = arith.constant 0 : i32
    %c0_i32_0 = arith.constant 0 : i32
    %c0_i32_1 = arith.constant 0 : i32
    return %c0_i32, %c0_i32_0 : i32, i32
  }
  func.func @transform_9(%arg0: i32) -> (i32, i32, i32, i32) {
    %c0_i32 = arith.constant 0 : i32
    %c0_i32_0 = arith.constant 0 : i32
    %c0_i32_1 = arith.constant 0 : i32
    %c0_i32_2 = arith.constant 0 : i32
    return %arg0, %c0_i32, %c0_i32_0, %c0_i32_1 : i32, i32, i32, i32
  }
}

</mosaic_0001>

<llo_original>
// kernel: ce_block_forward.2
$region0: #{ce_block_forward.2}
  #allocation0 [shape = 'u32[]', space=smem, size = 0x4, offset = 0x4, fixed_abs, tag = 'smem constant byte address 0x4 - core index']
  #allocation1 [shape = 'u32[72,128]{1,0:T(1,128)}', space=vmem, size = 0x9000, scoped, tag = 'internal scratch']
  %s0 = inlined_call_operand.hbm [shape: f32[2,16,16,128], index: 0, kind: input, shape index: {}]
  %s1 = inlined_call_operand.vmem [shape: f32[2,1,128], index: 1, kind: output, shape index: {}]
  %s2 = sld [smem:[#allocation0]]
  $region41: #{ce_block_forward.2} parent=0
    _
  %s4 = ssub.s32 1, %s2
  %s5 = scalar_select 0, %s4, %s2
  $region1: #{ce_block_forward.2} parent=0
    #allocation2 [shape = 'u8[262144]{0}', space=vmem, size = 0x40000, scoped, tag = 'input window, operand 0']
    #allocation3 [shape = 's32[2]{0}', space=sflag, size = 0x8, scoped, tag = 'scoped memory for ce_block_forward.2']
    %6 = vsyncpa [#allocation3], 0
    %s7 = scalar_lea.sflag [#allocation3], 1
    %8 = vsyncpa %s7, 0
    loop: start=0, step=1, limit=4
    $region2: #{ce_block_forward.2} parent=1 // loop_pre_header
      _
    $region3: #{ce_block_forward.2} parent=1 // loop_header
      %s10 = sphi 0, %s14
      %p11 = scmp.ge.s32.totalorder %s10, 4
      %s20 = sphi 0, %s22
      %s23 = sphi 0, %s20
      %s24 = sphi 0, %s23
      %s40 = sphi 0, %s24
      %s46 = sphi 0, %s48
      %s49 = sphi 0, %s46
      %s50 = sphi 0, %s49
      %s66 = sphi 0, %s50
    $region4: #{ce_block_forward.2} parent=1 // loop_header_branch
      %13 = sbr.rel (%p11) target = $region8
    $region5: #{ce_block_forward.2} parent=1 // loop_body
      %s15 = ssub.s32 %s10, 1
      %s16 = ssub.s32 %s10, 2
      %s17 = sadd.s32 %s10, 1
      %s18 = ssub.s32 %s10, %s17
      %p19 = scmp.eq.s32.totalorder %s18, 0
      %s21 = sadd.s32 %s20, 1
      %s22 = scalar_select %p19, %s20, %s21
      %p25 = pneg %p19
      %p26 = scmp.eq.s32.totalorder %s10, 1
      %p27 = por %p25, %p26
      %p28 = scmp.ne.s32.totalorder %s20, %s23
      %p29 = scmp.eq.s32.totalorder %s10, 0
      %p30 = por %p28, %p29
      %p31 = scmp.ne.s32.totalorder %s20, %s23
      %p32 = scmp.eq.s32.totalorder %s15, 1
      %p33 = por %p31, %p32
      %p34 = scmp.ne.s32.totalorder %s23, %s24
      %p35 = scmp.eq.s32.totalorder %s15, 0
      %p36 = por %p34, %p35
      %p37 = scmp.ne.s32.totalorder %s23, %s24
      %p38 = scmp.eq.s32.totalorder %s16, 1
      %p39 = por %p37, %p38
      %p41 = scmp.ne.s32.totalorder %s24, %s40
      %p42 = scmp.eq.s32.totalorder %s16, 0
      %p43 = por %p41, %p42
      %s44 = ssub.s32 %s10, %s17
      %p45 = scmp.eq.s32.totalorder %s44, 0
      %s47 = sadd.s32 %s46, 1
      %s48 = scalar_select %p45, %s46, %s47
      %p51 = pneg %p45
      %p52 = scmp.eq.s32.totalorder %s10, 1
      %p53 = por %p51, %p52
      %p54 = scmp.ne.s32.totalorder %s46, %s49
      %p55 = scmp.eq.s32.totalorder %s10, 0
      %p56 = por %p54, %p55
      %p57 = scmp.ne.s32.totalorder %s46, %s49
      %p58 = scmp.eq.s32.totalorder %s15, 1
      %p59 = por %p57, %p58
      %p60 = scmp.ne.s32.totalorder %s49, %s50
      %p61 = scmp.eq.s32.totalorder %s15, 0
      %p62 = por %p60, %p61
      %p63 = scmp.ne.s32.totalorder %s49, %s50
      %p64 = scmp.eq.s32.totalorder %s16, 1
      %p65 = por %p63, %p64
      %p67 = scmp.ne.s32.totalorder %s50, %s66
      %p68 = scmp.eq.s32.totalorder %s16, 0
      %p69 = por %p67, %p68
      %p70 = scmp.le.s32.totalorder 1, %s10
      %p71 = scmp.lt.s32.totalorder %s10, 3
      %p72 = pnand %p70, %p71
      %p73 = pneg %p72
      // Predicated region
      $region9: #{ce_block_forward.2} parent=5 // pred_check
        _
      $region10: #{ce_block_forward.2} parent=5 // pred_check_branch
        %75 = sbr.rel (%p72) target = $region12
      $region11: #{ce_block_forward.2} parent=5 // pred_region
        %s76 = ssub.s32 %s10, 1
      $region12: #{ce_block_forward.2} parent=5 // pred_fallthru
        _
      %p77 = scmp.lt.s32.totalorder %s10, 2
      // Predicated region
      $region13: #{ce_block_forward.2} parent=5 // pred_check
        %p78 = pneg %p77
      $region14: #{ce_block_forward.2} parent=5 // pred_check_branch
        %80 = sbr.rel (%p78) target = $region16
      $region15: #{ce_block_forward.2} parent=5 // pred_region
        // Predicated region
        $region17: #{ce_block_forward.2} parent=15 // pred_check
          %p81 = pneg %p30
        $region18: #{ce_block_forward.2} parent=15 // pred_check_branch
          %83 = sbr.rel (%p81) target = $region20
        $region19: #{ce_block_forward.2} parent=15 // pred_region
          %s84 = sand.u32 %s20, 1
          %s85 = scalar_lea.sflag [#allocation3], %s84
          %s86 = sand.u32 %s20, 1
          %s87 = smul.addr %s86, 256
          %s88 = scalar_lea.vmem [#allocation2], %s87
          %90 = vsyncadd %s85, 0
          %s91 = smul.addr %s10, 32
          %s92 = smul.addr %s91, 8
          %s93 = scalar_lea.hbm %s0, %s92
          %s94 = sshll.u32 %s93, 4
          %s95 = int_to_ptr.hbm [resolvable:$true] %s94
          %s96 = sshll.u32 %s88, 4
          %s97 = int_to_ptr.vmem [resolvable:$true] %s96
          %102 = dma.hbm_to_vmem [thread:$0]  %s95, 4096, %s97, %s85, 128, 128, 8
        $region20: #{ce_block_forward.2} parent=15 // pred_fallthru
          _
      $region16: #{ce_block_forward.2} parent=5 // pred_fallthru
        _
      %p103 = scmp.le.s32.totalorder 1, %s10
      %p104 = scmp.lt.s32.totalorder %s10, 3
      %p105 = pnand %p103, %p104
      %p106 = pneg %p105
      // Predicated region
      $region21: #{ce_block_forward.2} parent=5 // pred_check
        _
      $region22: #{ce_block_forward.2} parent=5 // pred_check_branch
        %108 = sbr.rel (%p105) target = $region24
      $region23: #{ce_block_forward.2} parent=5 // pred_region
        %s109 = ssub.s32 %s10, 1
        %s110 = sand.u32 %s23, 1
        %s111 = scalar_lea.sflag [#allocation3], %s110
        %s112 = sand.u32 %s23, 1
        %s113 = smul.addr %s112, 256
        %s114 = scalar_lea.vmem [#allocation2], %s113
        // Predicated region
        $region25: #{ce_block_forward.2} parent=23 // pred_check
          %p115 = pneg %p36
        $region26: #{ce_block_forward.2} parent=23 // pred_check_branch
          %117 = sbr.rel (%p115) target = $region28
        $region27: #{ce_block_forward.2} parent=23 // pred_region
          %119 = dma.done %s111, 4096
        $region28: #{ce_block_forward.2} parent=23 // pred_fallthru
          _
        %s120 = sand.u32 %s23, 1
        %s121 = scalar_lea.sflag [#allocation3], %s120
        %s122 = sand.u32 %s23, 1
        %s123 = smul.addr %s122, 256
        %s124 = scalar_lea.vmem [#allocation2], %s123
        %p125 = pneg %p36
        %p126 = pneg %p33
        %p127 = pneg %p62
        %p128 = pneg %p59
        %p129 = scmp.lt.s32.totalorder %s15, 1
        %s130 = scalar_select %p129, %s15, 1
        %s131 = scalar_lea.vmem %s1, %s130
        %p132 = scmp.lt.s32.totalorder %s15, 1
        %s133 = scalar_select %p132, %s15, 1
        %s134 = scalar_lea.vmem %s1, %s133
        %v135 = vld [vmem:[%s114] sm:$0xff]
        %v136 = vld [vmem:[%s114 + $0x8] sm:$0xff]
        %v137 = vld [vmem:[%s114 + $0x10] sm:$0xff]
        %v138 = vld [vmem:[%s114 + $0x18] sm:$0xff]
        %v139 = vld [vmem:[%s114 + $0x20] sm:$0xff]
        %v140 = vld [vmem:[%s114 + $0x28] sm:$0xff]
        %v141 = vld [vmem:[%s114 + $0x30] sm:$0xff]
        %v142 = vld [vmem:[%s114 + $0x38] sm:$0xff]
        %v143 = vld [vmem:[%s114 + $0x40] sm:$0xff]
        %v144 = vld [vmem:[%s114 + $0x48] sm:$0xff]
        %v145 = vld [vmem:[%s114 + $0x50] sm:$0xff]
        %v146 = vld [vmem:[%s114 + $0x58] sm:$0xff]
        %v147 = vld [vmem:[%s114 + $0x60] sm:$0xff]
        %v148 = vld [vmem:[%s114 + $0x68] sm:$0xff]
        %v149 = vld [vmem:[%s114 + $0x70] sm:$0xff]
        %v150 = vld [vmem:[%s114 + $0x78] sm:$0xff]
        %v151 = vld [vmem:[%s114 + $0x80] sm:$0xff]
        %v152 = vld [vmem:[%s114 + $0x88] sm:$0xff]
        %v153 = vld [vmem:[%s114 + $0x90] sm:$0xff]
        %v154 = vld [vmem:[%s114 + $0x98] sm:$0xff]
        %v155 = vld [vmem:[%s114 + $0xa0] sm:$0xff]
        %v156 = vld [vmem:[%s114 + $0xa8] sm:$0xff]
        %v157 = vld [vmem:[%s114 + $0xb0] sm:$0xff]
        %v158 = vld [vmem:[%s114 + $0xb8] sm:$0xff]
        %v159 = vld [vmem:[%s114 + $0xc0] sm:$0xff]
        %v160 = vld [vmem:[%s114 + $0xc8] sm:$0xff]
        %v161 = vld [vmem:[%s114 + $0xd0] sm:$0xff]
        %v162 = vld [vmem:[%s114 + $0xd8] sm:$0xff]
        %v163 = vld [vmem:[%s114 + $0xe0] sm:$0xff]
        %v164 = vld [vmem:[%s114 + $0xe8] sm:$0xff]
        %v165 = vld [vmem:[%s114 + $0xf0] sm:$0xff]
        %v166 = vld [vmem:[%s114 + $0xf8] sm:$0xff]
        %v167 = vadd.f32 %v135, %v137
        %v168 = vadd.f32 %v167, %v139
        %v169 = vadd.f32 %v168, %v141
        %v170 = vadd.f32 %v169, %v143
        %v171 = vadd.f32 %v170, %v145
        %v172 = vadd.f32 %v171, %v147
        %v173 = vadd.f32 %v172, %v149
        %v174 = vadd.f32 %v173, %v151
        %v175 = vadd.f32 %v174, %v153
        %v176 = vadd.f32 %v175, %v155
        %v177 = vadd.f32 %v176, %v157
        %v178 = vadd.f32 %v177, %v159
        %v179 = vadd.f32 %v178, %v161
        %v180 = vadd.f32 %v179, %v163
        %v181 = vadd.f32 %v180, %v165
        %v182 = vadd.f32 %v136, %v138
        %v183 = vadd.f32 %v182, %v140
        %v184 = vadd.f32 %v183, %v142
        %v185 = vadd.f32 %v184, %v144
        %v186 = vadd.f32 %v185, %v146
        %v187 = vadd.f32 %v186, %v148
        %v188 = vadd.f32 %v187, %v150
        %v189 = vadd.f32 %v188, %v152
        %v190 = vadd.f32 %v189, %v154
        %v191 = vadd.f32 %v190, %v156
        %v192 = vadd.f32 %v191, %v158
        %v193 = vadd.f32 %v192, %v160
        %v194 = vadd.f32 %v193, %v162
        %v195 = vadd.f32 %v194, %v164
        %v196 = vadd.f32 %v195, %v166
        %v197 = vadd.f32 %v181, %v196
        %v198 = vrot.slane %v197, 4
        %v199 = vadd.f32 %v197, %v198
        %v200 = vrot.slane %v199, 2
        %v201 = vadd.f32 %v199, %v200
        %v202 = vrot.slane %v201, 1
        %v203 = vadd.f32 %v201, %v202
        %204 = vst [vmem:[%s134] sm:$0x1] %v203
        %p205 = scmp.lt.s32.totalorder %s15, 1
        %s206 = scalar_select %p205, %s15, 1
        %s207 = scalar_lea.vmem %s1, %s206
        // Predicated region
        $region29: #{ce_block_forward.2} parent=23 // pred_check
          %p208 = pneg %p59
        $region30: #{ce_block_forward.2} parent=23 // pred_check_branch
          %210 = sbr.rel (%p208) target = $region32
        $region31: #{ce_block_forward.2} parent=23 // pred_region
          _
        $region32: #{ce_block_forward.2} parent=23 // pred_fallthru
          _
      $region24: #{ce_block_forward.2} parent=5 // pred_fallthru
        _
      %p211 = scmp.le.s32.totalorder 2, %s10
      // Predicated region
      $region33: #{ce_block_forward.2} parent=5 // pred_check
        %p212 = pneg %p211
      $region34: #{ce_block_forward.2} parent=5 // pred_check_branch
        %214 = sbr.rel (%p212) target = $region36
      $region35: #{ce_block_forward.2} parent=5 // pred_region
        %s215 = ssub.s32 %s10, 2
        // Predicated region
        $region37: #{ce_block_forward.2} parent=35 // pred_check
          %p216 = pneg %p65
        $region38: #{ce_block_forward.2} parent=35 // pred_check_branch
          %218 = sbr.rel (%p216) target = $region40
        $region39: #{ce_block_forward.2} parent=35 // pred_region
          %p219 = scmp.lt.s32.totalorder %s16, 1
          %s220 = scalar_select %p219, %s16, 1
          %s221 = scalar_lea.vmem %s1, %s220
        $region40: #{ce_block_forward.2} parent=35 // pred_fallthru
          _
      $region36: #{ce_block_forward.2} parent=5 // pred_fallthru
        _
    $region6: #{ce_block_forward.2} parent=1 // loop_footer
      %s14 = sadd.s32 1, %s10
    $region7: #{ce_block_forward.2} parent=1 // loop_footer_branch
      %9 = sbr.rel target = $region3
    $region8: #{ce_block_forward.2} parent=1 // loop_exit
      _
    %222 = vsyncpa [#allocation3], 1
    %s223 = scalar_lea.sflag [#allocation3], 1
    %224 = vsyncpa %s223, 1

// kernel: ce_block_forward.3
$region0: #{ce_block_forward.3}
  #allocation0 [shape = 'u32[]', space=smem, size = 0x4, offset = 0x4, fixed_abs, tag = 'smem constant byte address 0x4 - core index']
  #allocation1 [shape = 'u32[72,128]{1,0:T(1,128)}', space=vmem, size = 0x9000, scoped, tag = 'internal scratch']
  #allocation2 [shape = 'f32[18,18,128]{2,1,0:T(8,128)}', space=vmem, size = 0x36000, scoped, tag = 'scratch operand']
  #allocation3 [shape = 'f32[256,128]{1,0:T(8,128)}', space=vmem, size = 0x20000, scoped, tag = 'scratch operand']
  %s0 = inlined_call_operand.hbm [shape: f32[2,16,16,128], index: 0, kind: input, shape index: {}]
  %s1 = inlined_call_operand.vmem [shape: f32[2,1,128], index: 1, kind: input, shape index: {}]
  %s2 = inlined_call_operand.hbm [shape: f32[128,128], index: 2, kind: input, shape index: {}]
  %s3 = inlined_call_operand.vmem [shape: f32[1,128], index: 3, kind: input, shape index: {}]
  %s4 = inlined_call_operand.vmem [shape: f32[1,128], index: 4, kind: input, shape index: {}]
  %s5 = inlined_call_operand.vmem [shape: f32[1,128], index: 5, kind: input, shape index: {}]
  %s6 = inlined_call_operand.vmem [shape: f32[1,128], index: 6, kind: input, shape index: {}]
  %s7 = inlined_call_operand.hbm [shape: bf16[9,128,128], index: 7, kind: input, shape index: {}]
  %s8 = inlined_call_operand.hbm [shape: f32[1,128], index: 8, kind: input, shape index: {}]
  %s9 = inlined_call_operand.hbm [shape: f32[2,16,16,128], index: 9, kind: output, shape index: {}]
  %s10 = sld [smem:[#allocation0]]
  $region85: #{ce_block_forward.3} parent=0
    _
  %s12 = ssub.s32 1, %s10
  %s13 = scalar_select 0, %s12, %s10
  $region1: #{ce_block_forward.3} parent=0
    #allocation4 [shape = 'u8[262144]{0}', space=vmem, size = 0x40000, scoped, tag = 'input window, operand 0']
    #allocation5 [shape = 's32[2]{0}', space=sflag, size = 0x8, scoped, tag = 'scoped memory for ce_block_forward.3']
    #allocation6 [shape = 's32[2]{0}', space=sflag, size = 0x8, scoped, tag = 'scoped memory for ce_block_forward.3']
    #allocation7 [shape = 'u8[65536]{0}', space=vmem, size = 0x10000, scoped, tag = 'input window, operand 2, single buffered']
    #allocation8 [shape = 's32[1]{0}', space=sflag, size = 0x4, scoped, tag = 'scoped memory for ce_block_forward.3']
    #allocation9 [shape = 'u8[294912]{0}', space=vmem, size = 0x48000, scoped, tag = 'input window, operand 7, single buffered']
    #allocation10 [shape = 'u8[512]{0}', space=vmem, size = 0x400, scoped, tag = 'input window, operand 8, single buffered']
    #allocation11 [shape = 's32[1]{0}', space=sflag, size = 0x4, scoped, tag = 'scoped memory for ce_block_forward.3']
    #allocation12 [shape = 'u8[262144]{0}', space=vmem, size = 0x40000, scoped, tag = 'output window, operand 0']
    %14 = vsyncpa [#allocation5], 0
    %s15 = scalar_lea.sflag [#allocation5], 1
    %16 = vsyncpa %s15, 0
    %17 = vsyncpa [#allocation8], 0
    %18 = vsyncpa [#allocation11], 0
    %19 = vsyncpa [#allocation6], 0
    %s20 = scalar_lea.sflag [#allocation6], 1
    %21 = vsyncpa %s20, 0
    loop: start=0, step=1, limit=4
    $region2: #{ce_block_forward.3} parent=1 // loop_pre_header
      _
    $region3: #{ce_block_forward.3} parent=1 // loop_header
      %s23 = sphi 0, %s27
      %p24 = scmp.ge.s32.totalorder %s23, 4
      %s33 = sphi 0, %s35
      %s36 = sphi 0, %s33
      %s37 = sphi 0, %s36
      %s53 = sphi 0, %s37
      %s57 = sphi 0, %s57
      %s59 = sphi 0, %s57
      %s60 = sphi 0, %s59
      %s74 = sphi 0, %s60
      %s78 = sphi 0, %s78
      %s80 = sphi 0, %s78
      %s81 = sphi 0, %s80
      %s95 = sphi 0, %s81
      %s99 = sphi 0, %s99
      %s101 = sphi 0, %s99
      %s102 = sphi 0, %s101
      %s116 = sphi 0, %s102
      %s120 = sphi 0, %s120
      %s122 = sphi 0, %s120
      %s123 = sphi 0, %s122
      %s137 = sphi 0, %s123
      %s141 = sphi 0, %s141
      %s143 = sphi 0, %s141
      %s144 = sphi 0, %s143
      %s158 = sphi 0, %s144
      %s162 = sphi 0, %s162
      %s164 = sphi 0, %s162
      %s165 = sphi 0, %s164
      %s179 = sphi 0, %s165
      %s183 = sphi 0, %s183
      %s185 = sphi 0, %s183
      %s186 = sphi 0, %s185
      %s200 = sphi 0, %s186
      %s204 = sphi 0, %s204
      %s206 = sphi 0, %s204
      %s207 = sphi 0, %s206
      %s221 = sphi 0, %s207
      %s227 = sphi 0, %s229
      %s230 = sphi 0, %s227
      %s231 = sphi 0, %s230
      %s247 = sphi 0, %s231
    $region4: #{ce_block_forward.3} parent=1 // loop_header_branch
      %26 = sbr.rel (%p24) target = $region8
    $region5: #{ce_block_forward.3} parent=1 // loop_body
      %s28 = ssub.s32 %s23, 1
      %s29 = ssub.s32 %s23, 2
      %s30 = sadd.s32 %s23, 1
      %s31 = ssub.s32 %s23, %s30
      %p32 = scmp.eq.s32.totalorder %s31, 0
      %s34 = sadd.s32 %s33, 1
      %s35 = scalar_select %p32, %s33, %s34
      %p38 = pneg %p32
      %p39 = scmp.eq.s32.totalorder %s23, 1
      %p40 = por %p38, %p39
      %p41 = scmp.ne.s32.totalorder %s33, %s36
      %p42 = scmp.eq.s32.totalorder %s23, 0
      %p43 = por %p41, %p42
      %p44 = scmp.ne.s32.totalorder %s33, %s36
      %p45 = scmp.eq.s32.totalorder %s28, 1
      %p46 = por %p44, %p45
      %p47 = scmp.ne.s32.totalorder %s36, %s37
      %p48 = scmp.eq.s32.totalorder %s28, 0
      %p49 = por %p47, %p48
      %p50 = scmp.ne.s32.totalorder %s36, %s37
      %p51 = scmp.eq.s32.totalorder %s29, 1
      %p52 = por %p50, %p51
      %p54 = scmp.ne.s32.totalorder %s37, %s53
      %p55 = scmp.eq.s32.totalorder %s29, 0
      %p56 = por %p54, %p55
      %s58 = sadd.s32 %s57, 1
      %p61 = scmp.eq.s32.totalorder %s23, 1
      %p62 = scmp.ne.s32.totalorder %s57, %s59
      %p63 = scmp.eq.s32.totalorder %s23, 0
      %p64 = por %p62, %p63
      %p65 = scmp.ne.s32.totalorder %s57, %s59
      %p66 = scmp.eq.s32.totalorder %s28, 1
      %p67 = por %p65, %p66
      %p68 = scmp.ne.s32.totalorder %s59, %s60
      %p69 = scmp.eq.s32.totalorder %s28, 0
      %p70 = por %p68, %p69
      %p71 = scmp.ne.s32.totalorder %s59, %s60
      %p72 = scmp.eq.s32.totalorder %s29, 1
      %p73 = por %p71, %p72
      %p75 = scmp.ne.s32.totalorder %s60, %s74
      %p76 = scmp.eq.s32.totalorder %s29, 0
      %p77 = por %p75, %p76
      %s79 = sadd.s32 %s78, 1
      %p82 = scmp.eq.s32.totalorder %s23, 1
      %p83 = scmp.ne.s32.totalorder %s78, %s80
      %p84 = scmp.eq.s32.totalorder %s23, 0
      %p85 = por %p83, %p84
      %p86 = scmp.ne.s32.totalorder %s78, %s80
      %p87 = scmp.eq.s32.totalorder %s28, 1
      %p88 = por %p86, %p87
      %p89 = scmp.ne.s32.totalorder %s80, %s81
      %p90 = scmp.eq.s32.totalorder %s28, 0
      %p91 = por %p89, %p90
      %p92 = scmp.ne.s32.totalorder %s80, %s81
      %p93 = scmp.eq.s32.totalorder %s29, 1
      %p94 = por %p92, %p93
      %p96 = scmp.ne.s32.totalorder %s81, %s95
      %p97 = scmp.eq.s32.totalorder %s29, 0
      %p98 = por %p96, %p97
      %s100 = sadd.s32 %s99, 1
      %p103 = scmp.eq.s32.totalorder %s23, 1
      %p104 = scmp.ne.s32.totalorder %s99, %s101
      %p105 = scmp.eq.s32.totalorder %s23, 0
      %p106 = por %p104, %p105
      %p107 = scmp.ne.s32.totalorder %s99, %s101
      %p108 = scmp.eq.s32.totalorder %s28, 1
      %p109 = por %p107, %p108
      %p110 = scmp.ne.s32.totalorder %s101, %s102
      %p111 = scmp.eq.s32.totalorder %s28, 0
      %p112 = por %p110, %p111
      %p113 = scmp.ne.s32.totalorder %s101, %s102
      %p114 = scmp.eq.s32.totalorder %s29, 1
      %p115 = por %p113, %p114
      %p117 = scmp.ne.s32.totalorder %s102, %s116
      %p118 = scmp.eq.s32.totalorder %s29, 0
      %p119 = por %p117, %p118
      %s121 = sadd.s32 %s120, 1
      %p124 = scmp.eq.s32.totalorder %s23, 1
      %p125 = scmp.ne.s32.totalorder %s120, %s122
      %p126 = scmp.eq.s32.totalorder %s23, 0
      %p127 = por %p125, %p126
      %p128 = scmp.ne.s32.totalorder %s120, %s122
      %p129 = scmp.eq.s32.totalorder %s28, 1
      %p130 = por %p128, %p129
      %p131 = scmp.ne.s32.totalorder %s122, %s123
      %p132 = scmp.eq.s32.totalorder %s28, 0
      %p133 = por %p131, %p132
      %p134 = scmp.ne.s32.totalorder %s122, %s123
      %p135 = scmp.eq.s32.totalorder %s29, 1
      %p136 = por %p134, %p135
      %p138 = scmp.ne.s32.totalorder %s123, %s137
      %p139 = scmp.eq.s32.totalorder %s29, 0
      %p140 = por %p138, %p139
      %s142 = sadd.s32 %s141, 1
      %p145 = scmp.eq.s32.totalorder %s23, 1
      %p146 = scmp.ne.s32.totalorder %s141, %s143
      %p147 = scmp.eq.s32.totalorder %s23, 0
      %p148 = por %p146, %p147
      %p149 = scmp.ne.s32.totalorder %s141, %s143
      %p150 = scmp.eq.s32.totalorder %s28, 1
      %p151 = por %p149, %p150
      %p152 = scmp.ne.s32.totalorder %s143, %s144
      %p153 = scmp.eq.s32.totalorder %s28, 0
      %p154 = por %p152, %p153
      %p155 = scmp.ne.s32.totalorder %s143, %s144
      %p156 = scmp.eq.s32.totalorder %s29, 1
      %p157 = por %p155, %p156
      %p159 = scmp.ne.s32.totalorder %s144, %s158
      %p160 = scmp.eq.s32.totalorder %s29, 0
      %p161 = por %p159, %p160
      %s163 = sadd.s32 %s162, 1
      %p166 = scmp.eq.s32.totalorder %s23, 1
      %p167 = scmp.ne.s32.totalorder %s162, %s164
      %p168 = scmp.eq.s32.totalorder %s23, 0
      %p169 = por %p167, %p168
      %p170 = scmp.ne.s32.totalorder %s162, %s164
      %p171 = scmp.eq.s32.totalorder %s28, 1
      %p172 = por %p170, %p171
      %p173 = scmp.ne.s32.totalorder %s164, %s165
      %p174 = scmp.eq.s32.totalorder %s28, 0
      %p175 = por %p173, %p174
      %p176 = scmp.ne.s32.totalorder %s164, %s165
      %p177 = scmp.eq.s32.totalorder %s29, 1
      %p178 = por %p176, %p177
      %p180 = scmp.ne.s32.totalorder %s165, %s179
      %p181 = scmp.eq.s32.totalorder %s29, 0
      %p182 = por %p180, %p181
      %s184 = sadd.s32 %s183, 1
      %p187 = scmp.eq.s32.totalorder %s23, 1
      %p188 = scmp.ne.s32.totalorder %s183, %s185
      %p189 = scmp.eq.s32.totalorder %s23, 0
      %p190 = por %p188, %p189
      %p191 = scmp.ne.s32.totalorder %s183, %s185
      %p192 = scmp.eq.s32.totalorder %s28, 1
      %p193 = por %p191, %p192
      %p194 = scmp.ne.s32.totalorder %s185, %s186
      %p195 = scmp.eq.s32.totalorder %s28, 0
      %p196 = por %p194, %p195
      %p197 = scmp.ne.s32.totalorder %s185, %s186
      %p198 = scmp.eq.s32.totalorder %s29, 1
      %p199 = por %p197, %p198
      %p201 = scmp.ne.s32.totalorder %s186, %s200
      %p202 = scmp.eq.s32.totalorder %s29, 0
      %p203 = por %p201, %p202
      %s205 = sadd.s32 %s204, 1
      %p208 = scmp.eq.s32.totalorder %s23, 1
      %p209 = scmp.ne.s32.totalorder %s204, %s206
      %p210 = scmp.eq.s32.totalorder %s23, 0
      %p211 = por %p209, %p210
      %p212 = scmp.ne.s32.totalorder %s204, %s206
      %p213 = scmp.eq.s32.totalorder %s28, 1
      %p214 = por %p212, %p213
      %p215 = scmp.ne.s32.totalorder %s206, %s207
      %p216 = scmp.eq.s32.totalorder %s28, 0
      %p217 = por %p215, %p216
      %p218 = scmp.ne.s32.totalorder %s206, %s207
      %p219 = scmp.eq.s32.totalorder %s29, 1
      %p220 = por %p218, %p219
      %p222 = scmp.ne.s32.totalorder %s207, %s221
      %p223 = scmp.eq.s32.totalorder %s29, 0
      %p224 = por %p222, %p223
      %s225 = ssub.s32 %s23, %s30
      %p226 = scmp.eq.s32.totalorder %s225, 0
      %s228 = sadd.s32 %s227, 1
      %s229 = scalar_select %p226, %s227, %s228
      %p232 = pneg %p226
      %p233 = scmp.eq.s32.totalorder %s23, 1
      %p234 = por %p232, %p233
      %p235 = scmp.ne.s32.totalorder %s227, %s230
      %p236 = scmp.eq.s32.totalorder %s23, 0
      %p237 = por %p235, %p236
      %p238 = scmp.ne.s32.totalorder %s227, %s230
      %p239 = scmp.eq.s32.totalorder %s28, 1
      %p240 = por %p238, %p239
      %p241 = scmp.ne.s32.totalorder %s230, %s231
      %p242 = scmp.eq.s32.totalorder %s28, 0
      %p243 = por %p241, %p242
      %p244 = scmp.ne.s32.totalorder %s230, %s231
      %p245 = scmp.eq.s32.totalorder %s29, 1
      %p246 = por %p244, %p245
      %p248 = scmp.ne.s32.totalorder %s231, %s247
      %p249 = scmp.eq.s32.totalorder %s29, 0
      %p250 = por %p248, %p249
      %p251 = scmp.le.s32.totalorder 1, %s23
      %p252 = scmp.lt.s32.totalorder %s23, 3
      %p253 = pnand %p251, %p252
      %p254 = pneg %p253
      // Predicated region
      $region9: #{ce_block_forward.3} parent=5 // pred_check
        _
      $region10: #{ce_block_forward.3} parent=5 // pred_check_branch
        %256 = sbr.rel (%p253) target = $region12
      $region11: #{ce_block_forward.3} parent=5 // pred_region
        %s257 = ssub.s32 %s23, 1
        // Predicated region
        $region13: #{ce_block_forward.3} parent=11 // pred_check
          %p258 = pneg %p70
        $region14: #{ce_block_forward.3} parent=11 // pred_check_branch
          %260 = sbr.rel (%p258) target = $region16
        $region15: #{ce_block_forward.3} parent=11 // pred_region
          _
        $region16: #{ce_block_forward.3} parent=11 // pred_fallthru
          _
        // Predicated region
        $region17: #{ce_block_forward.3} parent=11 // pred_check
          %p261 = pneg %p91
        $region18: #{ce_block_forward.3} parent=11 // pred_check_branch
          %263 = sbr.rel (%p261) target = $region20
        $region19: #{ce_block_forward.3} parent=11 // pred_region
          %265 = vsyncadd [#allocation8], 0
          %s266 = sshll.u32 %s2, 4
          %s267 = int_to_ptr.hbm [resolvable:$true] %s266
          %s268 = sshll.u32 [#allocation7], 4
          %s269 = int_to_ptr.vmem [resolvable:$true] %s268
          %274 = dma.hbm_to_vmem [thread:$0]  %s267, 2048, %s269, [#allocation8], 128, 128, 8
        $region20: #{ce_block_forward.3} parent=11 // pred_fallthru
          _
        // Predicated region
        $region21: #{ce_block_forward.3} parent=11 // pred_check
          %p275 = pneg %p112
        $region22: #{ce_block_forward.3} parent=11 // pred_check_branch
          %277 = sbr.rel (%p275) target = $region24
        $region23: #{ce_block_forward.3} parent=11 // pred_region
          _
        $region24: #{ce_block_forward.3} parent=11 // pred_fallthru
          _
        // Predicated region
        $region25: #{ce_block_forward.3} parent=11 // pred_check
          %p278 = pneg %p133
        $region26: #{ce_block_forward.3} parent=11 // pred_check_branch
          %280 = sbr.rel (%p278) target = $region28
        $region27: #{ce_block_forward.3} parent=11 // pred_region
          _
        $region28: #{ce_block_forward.3} parent=11 // pred_fallthru
          _
        // Predicated region
        $region29: #{ce_block_forward.3} parent=11 // pred_check
          %p281 = pneg %p154
        $region30: #{ce_block_forward.3} parent=11 // pred_check_branch
          %283 = sbr.rel (%p281) target = $region32
        $region31: #{ce_block_forward.3} parent=11 // pred_region
          _
        $region32: #{ce_block_forward.3} parent=11 // pred_fallthru
          _
        // Predicated region
        $region33: #{ce_block_forward.3} parent=11 // pred_check
          %p284 = pneg %p175
        $region34: #{ce_block_forward.3} parent=11 // pred_check_branch
          %286 = sbr.rel (%p284) target = $region36
        $region35: #{ce_block_forward.3} parent=11 // pred_region
          _
        $region36: #{ce_block_forward.3} parent=11 // pred_fallthru
          _
        // Predicated region
        $region37: #{ce_block_forward.3} parent=11 // pred_check
          %p287 = pneg %p196
        $region38: #{ce_block_forward.3} parent=11 // pred_check_branch
          %289 = sbr.rel (%p287) target = $region40
        $region39: #{ce_block_forward.3} parent=11 // pred_region
          %291 = vsyncadd [#allocation8], 0
          %s292 = sshll.u32 %s7, 4
          %s293 = int_to_ptr.hbm [resolvable:$true] %s292
          %s294 = sshll.u32 [#allocation9], 4
          %s295 = int_to_ptr.vmem [resolvable:$true] %s294
          %300 = dma.hbm_to_vmem [thread:$0]  %s293, 9216, %s295, [#allocation8], 64, 64, 4
        $region40: #{ce_block_forward.3} parent=11 // pred_fallthru
          _
        // Predicated region
        $region41: #{ce_block_forward.3} parent=11 // pred_check
          %p301 = pneg %p217
        $region42: #{ce_block_forward.3} parent=11 // pred_check_branch
          %303 = sbr.rel (%p301) target = $region44
        $region43: #{ce_block_forward.3} parent=11 // pred_region
          %305 = vsyncadd [#allocation11], 0
          %s307 = sshll.u32 %s8, 4
          %s308 = int_to_ptr.hbm [resolvable:$true] %s307
          %s309 = sshll.u32 [#allocation10], 4
          %s310 = int_to_ptr.vmem [resolvable:$true] %s309
          %312 = dma.hbm_to_vmem [thread:$0]  %s308, 16, %s310, [#allocation11]
        $region44: #{ce_block_forward.3} parent=11 // pred_fallthru
          _
      $region12: #{ce_block_forward.3} parent=5 // pred_fallthru
        _
      %p313 = scmp.lt.s32.totalorder %s23, 2
      // Predicated region
      $region45: #{ce_block_forward.3} parent=5 // pred_check
        %p314 = pneg %p313
      $region46: #{ce_block_forward.3} parent=5 // pred_check_branch
        %316 = sbr.rel (%p314) target = $region48
      $region47: #{ce_block_forward.3} parent=5 // pred_region
        // Predicated region
        $region49: #{ce_block_forward.3} parent=47 // pred_check
          %p317 = pneg %p43
        $region50: #{ce_block_forward.3} parent=47 // pred_check_branch
          %319 = sbr.rel (%p317) target = $region52
        $region51: #{ce_block_forward.3} parent=47 // pred_region
          %s320 = sand.u32 %s33, 1
          %s321 = scalar_lea.sflag [#allocation5], %s320
          %s322 = sand.u32 %s33, 1
          %s323 = smul.addr %s322, 256
          %s324 = scalar_lea.vmem [#allocation4], %s323
          %326 = vsyncadd %s321, 0
          %s327 = smul.addr %s23, 32
          %s328 = smul.addr %s327, 8
          %s329 = scalar_lea.hbm %s0, %s328
          %s330 = sshll.u32 %s329, 4
          %s331 = int_to_ptr.hbm [resolvable:$true] %s330
          %s332 = sshll.u32 %s324, 4
          %s333 = int_to_ptr.vmem [resolvable:$true] %s332
          %338 = dma.hbm_to_vmem [thread:$0]  %s331, 4096, %s333, %s321, 128, 128, 8
        $region52: #{ce_block_forward.3} parent=47 // pred_fallthru
          _
      $region48: #{ce_block_forward.3} parent=5 // pred_fallthru
        _
      %p339 = scmp.le.s32.totalorder 1, %s23
      %p340 = scmp.lt.s32.totalorder %s23, 3
      %p341 = pnand %p339, %p340
      %p342 = pneg %p341
      // Predicated region
      $region53: #{ce_block_forward.3} parent=5 // pred_check
        _
      $region54: #{ce_block_forward.3} parent=5 // pred_check_branch
        %344 = sbr.rel (%p341) target = $region56
      $region55: #{ce_block_forward.3} parent=5 // pred_region
        %s345 = ssub.s32 %s23, 1
        %s346 = sand.u32 %s36, 1
        %s347 = scalar_lea.sflag [#allocation5], %s346
        %s348 = sand.u32 %s36, 1
        %s349 = smul.addr %s348, 256
        %s350 = scalar_lea.vmem [#allocation4], %s349
        // Predicated region
        $region57: #{ce_block_forward.3} parent=55 // pred_check
          %p351 = pneg %p49
        $region58: #{ce_block_forward.3} parent=55 // pred_check_branch
          %353 = sbr.rel (%p351) target = $region60
        $region59: #{ce_block_forward.3} parent=55 // pred_region
          %355 = dma.done %s347, 4096
        $region60: #{ce_block_forward.3} parent=55 // pred_fallthru
          _
        // Predicated region
        $region61: #{ce_block_forward.3} parent=55 // pred_check
          %p356 = pneg %p91
        $region62: #{ce_block_forward.3} parent=55 // pred_check_branch
          %358 = sbr.rel (%p356) target = $region64
        $region63: #{ce_block_forward.3} parent=55 // pred_region
          %360 = dma.done [#allocation8], 2048
        $region64: #{ce_block_forward.3} parent=55 // pred_fallthru
          _
        // Predicated region
        $region65: #{ce_block_forward.3} parent=55 // pred_check
          %p361 = pneg %p196
        $region66: #{ce_block_forward.3} parent=55 // pred_check_branch
          %363 = sbr.rel (%p361) target = $region68
        $region67: #{ce_block_forward.3} parent=55 // pred_region
          %365 = dma.done [#allocation8], 9216
        $region68: #{ce_block_forward.3} parent=55 // pred_fallthru
          _
        // Predicated region
        $region69: #{ce_block_forward.3} parent=55 // pred_check
          %p366 = pneg %p217
        $region70: #{ce_block_forward.3} parent=55 // pred_check_branch
          %368 = sbr.rel (%p366) target = $region72
        $region71: #{ce_block_forward.3} parent=55 // pred_region
          %370 = dma.done [#allocation11], 16
        $region72: #{ce_block_forward.3} parent=55 // pred_fallthru
          _
        %s371 = sand.u32 %s36, 1
        %s372 = scalar_lea.sflag [#allocation5], %s371
        %s373 = sand.u32 %s36, 1
        %s374 = smul.addr %s373, 256
        %s375 = scalar_lea.vmem [#allocation4], %s374
        %p376 = pneg %p49
        %p377 = pneg %p46
        %p378 = pneg %p70
        %p379 = pneg %p67
        %p380 = pneg %p91
        %p381 = pneg %p88
        %p382 = pneg %p112
        %p383 = pneg %p109
        %p384 = pneg %p133
        %p385 = pneg %p130
        %p386 = pneg %p154
        %p387 = pneg %p151
        %p388 = pneg %p175
        %p389 = pneg %p172
        %p390 = pneg %p196
        %p391 = pneg %p193
        %p392 = pneg %p217
        %p393 = pneg %p214
        %p394 = pneg %p243
        %p395 = pneg %p240
        %s396 = sand.u32 %s230, 1
        %s397 = scalar_lea.sflag [#allocation6], %s396
        %s398 = sand.u32 %s230, 1
        %s399 = smul.addr %s398, 256
        %s400 = scalar_lea.vmem [#allocation12], %s399
        %v401 = vld [vmem:[%s1] sm:$0x1]
        %v402 = vld [vmem:[%s1 + $0x1] sm:$0x1]
        %v403 = vmul.f32 %v401, 0.00390625
        %v404 = vmul.f32 %v402, 0.00390625
        %407 = vst [vmem:[#allocation1] ss:$9 sm:$0xff] %v403
        %s408 = scalar_lea.vmem [#allocation1], 1
        %409 = vst [vmem:[%s408] ss:$9 sm:$0xff] %v404
        %v410 = vld [vmem:[#allocation1] sm:$0xff]
        %vm412 = vcmask 1041408
        %v413 = vsel %vm412, %v410, 0.0
        %v414 = vrot.slane %v413, 4
        %v415 = vadd.f32 %v413, %v414
        %v416 = vrot.slane %v415, 2
        %v417 = vadd.f32 %v415, %v416
        %v418 = vrot.slane %v417, 1
        %v419 = vadd.f32 %v417, %v418
        %v420 = vrcp.pop 2.0
        %v421 = vmul.f32 2.0, %v420
        %v422 = vsub.f32 1.0, %v421
        %v423 = vmul.f32 %v420, %v422
        %v424 = vadd.f32 %v420, %v423
        %vm425 = vweird.f32 %v420
        %v426 = vsel %vm425, %v420, %v424
        %v427 = vmul.f32 %v419, %v426
        %v428 = vperm.slane %v427, 0
        %v430 = vrot.slane %v428, 1
        %v432 = vsub.f32 %v403, %v428
        %v433 = vsub.f32 %v404, %v430
        %v434 = vmul.f32 %v432, %v432
        %v435 = vmul.f32 %v433, %v433
        %438 = vst [vmem:[#allocation1] ss:$9 sm:$0xff] %v434
        %s439 = scalar_lea.vmem [#allocation1], 1
        %440 = vst [vmem:[%s439] ss:$9 sm:$0xff] %v435
        %v441 = vld [vmem:[#allocation1] sm:$0xff]
        %v443 = vsel %vm412, %v441, 0.0
        %v444 = vrot.slane %v443, 4
        %v445 = vadd.f32 %v443, %v444
        %v446 = vrot.slane %v445, 2
        %v447 = vadd.f32 %v445, %v446
        %v448 = vrot.slane %v447, 1
        %v449 = vadd.f32 %v447, %v448
        %v450 = vmul.f32 %v449, %v426
        %v451 = vld [vmem:[%s3] sm:$0x1]
        %v452 = vadd.f32 %v450, 1e-05
        %v453 = vrsqrt.pop %v452
        %v454 = vmul.f32 %v453, %v452
        %v455 = vmul.f32 %v454, %v453
        %v456 = vmul.f32 0.5, %v455
        %v457 = vsub.f32 1.5, %v456
        %v458 = vmul.f32 %v453, %v457
        %vm459 = vweird.f32 %v452
        %vm460 = vweird.f32 %v453
        %vm461 = vmor %vm459, %vm460
        %v462 = vsel %vm461, %v453, %v458
        %v463 = vmul.f32 %v451, %v462
        %v465 = vperm.slane %v463, 0
        %v467 = vrot.slane %v465, 1
        %v469 = vmul.f32 %v432, %v465
        %v470 = vmul.f32 %v433, %v467
        %v471 = vld [vmem:[%s4] sm:$0x1]
        %v473 = vperm.slane %v471, 0
        %v475 = vrot.slane %v473, 1
        %v477 = vadd.f32 %v469, %v473
        %v478 = vadd.f32 %v470, %v475
        %v479 = vld [vmem:[#allocation7] sm:$0xff]
        %v480 = vld [vmem:[#allocation7 + $0x8] sm:$0xff]
        %v481 = vld [vmem:[#allocation7 + $0x10] sm:$0xff]
        %v482 = vld [vmem:[#allocation7 + $0x18] sm:$0xff]
        %v483 = vld [vmem:[#allocation7 + $0x20] sm:$0xff]
        %v484 = vld [vmem:[#allocation7 + $0x28] sm:$0xff]
        %v485 = vld [vmem:[#allocation7 + $0x30] sm:$0xff]
        %v486 = vld [vmem:[#allocation7 + $0x38] sm:$0xff]
        %v487 = vld [vmem:[#allocation7 + $0x40] sm:$0xff]
        %v488 = vld [vmem:[#allocation7 + $0x48] sm:$0xff]
        %v489 = vld [vmem:[#allocation7 + $0x50] sm:$0xff]
        %v490 = vld [vmem:[#allocation7 + $0x58] sm:$0xff]
        %v491 = vld [vmem:[#allocation7 + $0x60] sm:$0xff]
        %v492 = vld [vmem:[#allocation7 + $0x68] sm:$0xff]
        %v493 = vld [vmem:[#allocation7 + $0x70] sm:$0xff]
        %v494 = vld [vmem:[#allocation7 + $0x78] sm:$0xff]
        %497 = vst [vmem:[#allocation1] ss:$9 sm:$0xff] %v477
        %s498 = scalar_lea.vmem [#allocation1], 1
        %499 = vst [vmem:[%s498] ss:$9 sm:$0xff] %v478
        %v500 = vld [vmem:[#allocation1] sm:$0xff]
        %502 = vmatpush.msra.mxu0 %v494
        %503 = vmatpush.msra.mxu0 %v493
        %504 = vmatpush.msra.mxu0 %v492
        %505 = vmatpush.msra.mxu0 %v491
        %506 = vmatpush.msra.mxu0 %v490
        %507 = vmatpush.msra.mxu0 %v489
        %508 = vmatpush.msra.mxu0 %v488
        %509 = vmatpush.msra.mxu0 %v487
        %510 = vmatpush.msra.mxu0 %v486
        %511 = vmatpush.msra.mxu0 %v485
        %512 = vmatpush.msra.mxu0 %v484
        %513 = vmatpush.msra.mxu0 %v483
        %514 = vmatpush.msra.mxu0 %v482
        %515 = vmatpush.msra.mxu0 %v481
        %516 = vmatpush.msra.mxu0 %v480
        %517 = vmatpush.msra.mxu0 %v479
        %518 = vmatmul.f32.gmra.mxu0 %v500
        %v519 = vpop.f32.mrf.mxu0
        %v520 = vadd.f32 0.0, %v519
        %521 = vdwg.mxu0
        %v522 = vsel %vm412, %v520, 0.0
        %v523 = vrot.slane %v522, 4
        %v524 = vadd.f32 %v522, %v523
        %v525 = vrot.slane %v524, 2
        %v526 = vadd.f32 %v524, %v525
        %v527 = vrot.slane %v526, 1
        %v528 = vadd.f32 %v526, %v527
        %v529 = vmul.f32 %v528, %v426
        %v530 = vsub.f32 %v520, %v529
        %v531 = vmul.f32 %v530, %v530
        %v532 = vsel %vm412, %v531, 0.0
        %v533 = vrot.slane %v532, 4
        %v534 = vadd.f32 %v532, %v533
        %v535 = vrot.slane %v534, 2
        %v536 = vadd.f32 %v534, %v535
        %v537 = vrot.slane %v536, 1
        %v538 = vadd.f32 %v536, %v537
        %v539 = vmul.f32 %v538, %v426
        %v540 = vld [vmem:[%s5] sm:$0x1]
        %v541 = vadd.f32 %v539, 1e-05
        %v542 = vrsqrt.pop %v541
        %v543 = vmul.f32 %v542, %v541
        %v544 = vmul.f32 %v543, %v542
        %v545 = vmul.f32 0.5, %v544
        %v546 = vsub.f32 1.5, %v545
        %v547 = vmul.f32 %v542, %v546
        %vm548 = vweird.f32 %v541
        %vm549 = vweird.f32 %v542
        %vm550 = vmor %vm548, %vm549
        %v551 = vsel %vm550, %v542, %v547
        %v552 = vmul.f32 %v540, %v551
        %v554 = vperm.slane %v552, 0
        %v556 = vmul.f32 %v530, %v554
        %v557 = vld [vmem:[%s6] sm:$0x1]
        %v559 = vperm.slane %v557, 0
        %v561 = vadd.f32 %v556, %v559
        %v562 = vmax.f32 %v561, 0.0
        %v563 = vlaneseq
        %v564 = vshrl.u32 %v563, 7
        %v565 = vstv %s28
        %vm566 = vcmp.eq.s32.totalorder %v564, %v565
        %v567 = vsel %vm566, 1, 0
        %vm568 = vcmp.eq.s32.totalorder %v567, 1
        %v569 = vsel %vm568, %v562, 0.0
        %v570 = vsel %vm412, %v569, 0.0
        %v571 = vrot.slane %v570, 4
        %v572 = vadd.f32 %v570, %v571
        %v573 = vrot.slane %v572, 2
        %v574 = vadd.f32 %v572, %v573
        %v575 = vrot.slane %v574, 1
        %v576 = vadd.f32 %v574, %v575
        %577 = vst [vmem:[#allocation2] sm:$0xff] 0.0
        %578 = vst [vmem:[#allocation2 + $0x8] sm:$0xff] 0.0
        %579 = vst [vmem:[#allocation2 + $0x10] sm:$0x3] 0.0
        %580 = vst [vmem:[#allocation2 + $0x18] sm:$0xff] 0.0
        %581 = vst [vmem:[#allocation2 + $0x20] sm:$0xff] 0.0
        %582 = vst [vmem:[#allocation2 + $0x28] sm:$0x3] 0.0
        %583 = vst [vmem:[#allocation2 + $0x30] sm:$0xff] 0.0
        %584 = vst [vmem:[#allocation2 + $0x38] sm:$0xff] 0.0
        %585 = vst [vmem:[#allocation2 + $0x40] sm:$0x3] 0.0
        %586 = vst [vmem:[#allocation2 + $0x48] sm:$0xff] 0.0
        %587 = vst [vmem:[#allocation2 + $0x50] sm:$0xff] 0.0
        %588 = vst [vmem:[#allocation2 + $0x58] sm:$0x3] 0.0
        %589 = vst [vmem:[#allocation2 + $0x60] sm:$0xff] 0.0
        %590 = vst [vmem:[#allocation2 + $0x68] sm:$0xff] 0.0
        %591 = vst [vmem:[#allocation2 + $0x70] sm:$0x3] 0.0
        %592 = vst [vmem:[#allocation2 + $0x78] sm:$0xff] 0.0
        %593 = vst [vmem:[#allocation2 + $0x80] sm:$0xff] 0.0
        %594 = vst [vmem:[#allocation2 + $0x88] sm:$0x3] 0.0
        %595 = vst [vmem:[#allocation2 + $0x90] sm:$0xff] 0.0
        %596 = vst [vmem:[#allocation2 + $0x98] sm:$0xff] 0.0
        %597 = vst [vmem:[#allocation2 + $0xa0] sm:$0x3] 0.0
        %598 = vst [vmem:[#allocation2 + $0xa8] sm:$0xff] 0.0
        %599 = vst [vmem:[#allocation2 + $0xb0] sm:$0xff] 0.0
        %600 = vst [vmem:[#allocation2 + $0xb8] sm:$0x3] 0.0
        %601 = vst [vmem:[#allocation2 + $0xc0] sm:$0xff] 0.0
        %602 = vst [vmem:[#allocation2 + $0xc8] sm:$0xff] 0.0
        %603 = vst [vmem:[#allocation2 + $0xd0] sm:$0x3] 0.0
        %604 = vst [vmem:[#allocation2 + $0xd8] sm:$0xff] 0.0
        %605 = vst [vmem:[#allocation2 + $0xe0] sm:$0xff] 0.0
        %606 = vst [vmem:[#allocation2 + $0xe8] sm:$0x3] 0.0
        %607 = vst [vmem:[#allocation2 + $0xf0] sm:$0xff] 0.0
        %608 = vst [vmem:[#allocation2 + $0xf8] sm:$0xff] 0.0
        %609 = vst [vmem:[#allocation2 + $0x100] sm:$0x3] 0.0
        %610 = vst [vmem:[#allocation2 + $0x108] sm:$0xff] 0.0
        %611 = vst [vmem:[#allocation2 + $0x110] sm:$0xff] 0.0
        %612 = vst [vmem:[#allocation2 + $0x118] sm:$0x3] 0.0
        %613 = vst [vmem:[#allocation2 + $0x120] sm:$0xff] 0.0
        %614 = vst [vmem:[#allocation2 + $0x128] sm:$0xff] 0.0
        %615 = vst [vmem:[#allocation2 + $0x130] sm:$0x3] 0.0
        %616 = vst [vmem:[#allocation2 + $0x138] sm:$0xff] 0.0
        %617 = vst [vmem:[#allocation2 + $0x140] sm:$0xff] 0.0
        %618 = vst [vmem:[#allocation2 + $0x148] sm:$0x3] 0.0
        %619 = vst [vmem:[#allocation2 + $0x150] sm:$0xff] 0.0
        %620 = vst [vmem:[#allocation2 + $0x158] sm:$0xff] 0.0
        %621 = vst [vmem:[#allocation2 + $0x160] sm:$0x3] 0.0
        %622 = vst [vmem:[#allocation2 + $0x168] sm:$0xff] 0.0
        %623 = vst [vmem:[#allocation2 + $0x170] sm:$0xff] 0.0
        %624 = vst [vmem:[#allocation2 + $0x178] sm:$0x3] 0.0
        %625 = vst [vmem:[#allocation2 + $0x180] sm:$0xff] 0.0
        %626 = vst [vmem:[#allocation2 + $0x188] sm:$0xff] 0.0
        %627 = vst [vmem:[#allocation2 + $0x190] sm:$0x3] 0.0
        %628 = vst [vmem:[#allocation2 + $0x198] sm:$0xff] 0.0
        %629 = vst [vmem:[#allocation2 + $0x1a0] sm:$0xff] 0.0
        %630 = vst [vmem:[#allocation2 + $0x1a8] sm:$0x3] 0.0
        %v631 = vld [vmem:[%s350] sm:$0xff]
        %v632 = vld [vmem:[%s350 + $0x8] sm:$0xff]
        %v633 = vld [vmem:[%s350 + $0x10] sm:$0xff]
        %v634 = vld [vmem:[%s350 + $0x18] sm:$0xff]
        %v635 = vld [vmem:[%s350 + $0x20] sm:$0xff]
        %v636 = vld [vmem:[%s350 + $0x28] sm:$0xff]
        %v637 = vld [vmem:[%s350 + $0x30] sm:$0xff]
        %v638 = vld [vmem:[%s350 + $0x38] sm:$0xff]
        %v639 = vld [vmem:[%s350 + $0x40] sm:$0xff]
        %v640 = vld [vmem:[%s350 + $0x48] sm:$0xff]
        %v641 = vld [vmem:[%s350 + $0x50] sm:$0xff]
        %v642 = vld [vmem:[%s350 + $0x58] sm:$0xff]
        %v643 = vld [vmem:[%s350 + $0x60] sm:$0xff]
        %v644 = vld [vmem:[%s350 + $0x68] sm:$0xff]
        %v645 = vld [vmem:[%s350 + $0x70] sm:$0xff]
        %v646 = vld [vmem:[%s350 + $0x78] sm:$0xff]
        %v647 = vld [vmem:[%s350 + $0x80] sm:$0xff]
        %v648 = vld [vmem:[%s350 + $0x88] sm:$0xff]
        %v649 = vld [vmem:[%s350 + $0x90] sm:$0xff]
        %v650 = vld [vmem:[%s350 + $0x98] sm:$0xff]
        %v651 = vld [vmem:[%s350 + $0xa0] sm:$0xff]
        %v652 = vld [vmem:[%s350 + $0xa8] sm:$0xff]
        %v653 = vld [vmem:[%s350 + $0xb0] sm:$0xff]
        %v654 = vld [vmem:[%s350 + $0xb8] sm:$0xff]
        %v655 = vld [vmem:[%s350 + $0xc0] sm:$0xff]
        %v656 = vld [vmem:[%s350 + $0xc8] sm:$0xff]
        %v657 = vld [vmem:[%s350 + $0xd0] sm:$0xff]
        %v658 = vld [vmem:[%s350 + $0xd8] sm:$0xff]
        %v659 = vld [vmem:[%s350 + $0xe0] sm:$0xff]
        %v660 = vld [vmem:[%s350 + $0xe8] sm:$0xff]
        %v661 = vld [vmem:[%s350 + $0xf0] sm:$0xff]
        %v662 = vld [vmem:[%s350 + $0xf8] sm:$0xff]
        %v663 = vadd.f32 %v631, %v576
        %v664 = vadd.f32 %v632, %v576
        %v665 = vadd.f32 %v633, %v576
        %v666 = vadd.f32 %v634, %v576
        %v667 = vadd.f32 %v635, %v576
        %v668 = vadd.f32 %v636, %v576
        %v669 = vadd.f32 %v637, %v576
        %v670 = vadd.f32 %v638, %v576
        %v671 = vadd.f32 %v639, %v576
        %v672 = vadd.f32 %v640, %v576
        %v673 = vadd.f32 %v641, %v576
        %v674 = vadd.f32 %v642, %v576
        %v675 = vadd.f32 %v643, %v576
        %v676 = vadd.f32 %v644, %v576
        %v677 = vadd.f32 %v645, %v576
        %v678 = vadd.f32 %v646, %v576
        %v679 = vadd.f32 %v647, %v576
        %v680 = vadd.f32 %v648, %v576
        %v681 = vadd.f32 %v649, %v576
        %v682 = vadd.f32 %v650, %v576
        %v683 = vadd.f32 %v651, %v576
        %v684 = vadd.f32 %v652, %v576
        %v685 = vadd.f32 %v653, %v576
        %v686 = vadd.f32 %v654, %v576
        %v687 = vadd.f32 %v655, %v576
        %v688 = vadd.f32 %v656, %v576
        %v689 = vadd.f32 %v657, %v576
        %v690 = vadd.f32 %v658, %v576
        %v691 = vadd.f32 %v659, %v576
        %v692 = vadd.f32 %v660, %v576
        %v693 = vadd.f32 %v661, %v576
        %v694 = vadd.f32 %v662, %v576
        %s695 = scalar_lea.vmem [#allocation2], 24
        %696 = vst [vmem:[%s695 + $0x1] sm:$0xff] %v663
        %697 = vst [vmem:[%s695 + $0x9] sm:$0xff] %v664
        %698 = vst [vmem:[%s695 + $0x19] sm:$0xff] %v665
        %699 = vst [vmem:[%s695 + $0x21] sm:$0xff] %v666
        %700 = vst [vmem:[%s695 + $0x31] sm:$0xff] %v667
        %701 = vst [vmem:[%s695 + $0x39] sm:$0xff] %v668
        %702 = vst [vmem:[%s695 + $0x49] sm:$0xff] %v669
        %703 = vst [vmem:[%s695 + $0x51] sm:$0xff] %v670
        %704 = vst [vmem:[%s695 + $0x61] sm:$0xff] %v671
        %705 = vst [vmem:[%s695 + $0x69] sm:$0xff] %v672
        %706 = vst [vmem:[%s695 + $0x79] sm:$0xff] %v673
        %707 = vst [vmem:[%s695 + $0x81] sm:$0xff] %v674
        %708 = vst [vmem:[%s695 + $0x91] sm:$0xff] %v675
        %709 = vst [vmem:[%s695 + $0x99] sm:$0xff] %v676
        %710 = vst [vmem:[%s695 + $0xa9] sm:$0xff] %v677
        %711 = vst [vmem:[%s695 + $0xb1] sm:$0xff] %v678
        %712 = vst [vmem:[%s695 + $0xc1] sm:$0xff] %v679
        %713 = vst [vmem:[%s695 + $0xc9] sm:$0xff] %v680
        %714 = vst [vmem:[%s695 + $0xd9] sm:$0xff] %v681
        %715 = vst [vmem:[%s695 + $0xe1] sm:$0xff] %v682
        %716 = vst [vmem:[%s695 + $0xf1] sm:$0xff] %v683
        %717 = vst [vmem:[%s695 + $0xf9] sm:$0xff] %v684
        %718 = vst [vmem:[%s695 + $0x109] sm:$0xff] %v685
        %719 = vst [vmem:[%s695 + $0x111] sm:$0xff] %v686
        %720 = vst [vmem:[%s695 + $0x121] sm:$0xff] %v687
        %721 = vst [vmem:[%s695 + $0x129] sm:$0xff] %v688
        %722 = vst [vmem:[%s695 + $0x139] sm:$0xff] %v689
        %723 = vst [vmem:[%s695 + $0x141] sm:$0xff] %v690
        %724 = vst [vmem:[%s695 + $0x151] sm:$0xff] %v691
        %725 = vst [vmem:[%s695 + $0x159] sm:$0xff] %v692
        %726 = vst [vmem:[%s695 + $0x169] sm:$0xff] %v693
        %727 = vst [vmem:[%s695 + $0x171] sm:$0xff] %v694
        %728 = vst [vmem:[#allocation3] sm:$0xff] 0.0
        %729 = vst [vmem:[#allocation3 + $0x8] sm:$0xff] 0.0
        %730 = vst [vmem:[#allocation3 + $0x10] sm:$0xff] 0.0
        %731 = vst [vmem:[#allocation3 + $0x18] sm:$0xff] 0.0
        %732 = vst [vmem:[#allocation3 + $0x20] sm:$0xff] 0.0
        %733 = vst [vmem:[#allocation3 + $0x28] sm:$0xff] 0.0
        %734 = vst [vmem:[#allocation3 + $0x30] sm:$0xff] 0.0
        %735 = vst [vmem:[#allocation3 + $0x38] sm:$0xff] 0.0
        %736 = vst [vmem:[#allocation3 + $0x40] sm:$0xff] 0.0
        %737 = vst [vmem:[#allocation3 + $0x48] sm:$0xff] 0.0
        %738 = vst [vmem:[#allocation3 + $0x50] sm:$0xff] 0.0
        %739 = vst [vmem:[#allocation3 + $0x58] sm:$0xff] 0.0
        %740 = vst [vmem:[#allocation3 + $0x60] sm:$0xff] 0.0
        %741 = vst [vmem:[#allocation3 + $0x68] sm:$0xff] 0.0
        %742 = vst [vmem:[#allocation3 + $0x70] sm:$0xff] 0.0
        %743 = vst [vmem:[#allocation3 + $0x78] sm:$0xff] 0.0
        %744 = vst [vmem:[#allocation3 + $0x80] sm:$0xff] 0.0
        %745 = vst [vmem:[#allocation3 + $0x88] sm:$0xff] 0.0
        %746 = vst [vmem:[#allocation3 + $0x90] sm:$0xff] 0.0
        %747 = vst [vmem:[#allocation3 + $0x98] sm:$0xff] 0.0
        %748 = vst [vmem:[#allocation3 + $0xa0] sm:$0xff] 0.0
        %749 = vst [vmem:[#allocation3 + $0xa8] sm:$0xff] 0.0
        %750 = vst [vmem:[#allocation3 + $0xb0] sm:$0xff] 0.0
        %751 = vst [vmem:[#allocation3 + $0xb8] sm:$0xff] 0.0
        %752 = vst [vmem:[#allocation3 + $0xc0] sm:$0xff] 0.0
        %753 = vst [vmem:[#allocation3 + $0xc8] sm:$0xff] 0.0
        %754 = vst [vmem:[#allocation3 + $0xd0] sm:$0xff] 0.0
        %755 = vst [vmem:[#allocation3 + $0xd8] sm:$0xff] 0.0
        %756 = vst [vmem:[#allocation3 + $0xe0] sm:$0xff] 0.0
        %757 = vst [vmem:[#allocation3 + $0xe8] sm:$0xff] 0.0
        %758 = vst [vmem:[#allocation3 + $0xf0] sm:$0xff] 0.0
        %759 = vst [vmem:[#allocation3 + $0xf8] sm:$0xff] 0.0
        %v760 = vld [vmem:[#allocation2] sm:$0xff]
        %v761 = vld [vmem:[#allocation2 + $0x8] sm:$0xff]
        %v762 = vld [vmem:[#allocation2 + $0x18] sm:$0xff]
        %v763 = vld [vmem:[#allocation2 + $0x20] sm:$0xff]
        %v764 = vld [vmem:[#allocation2 + $0x30] sm:$0xff]
        %v765 = vld [vmem:[#allocation2 + $0x38] sm:$0xff]
        %v766 = vld [vmem:[#allocation2 + $0x48] sm:$0xff]
        %v767 = vld [vmem:[#allocation2 + $0x50] sm:$0xff]
        %v768 = vld [vmem:[#allocation2 + $0x60] sm:$0xff]
        %v769 = vld [vmem:[#allocation2 + $0x68] sm:$0xff]
        %v770 = vld [vmem:[#allocation2 + $0x78] sm:$0xff]
        %v771 = vld [vmem:[#allocation2 + $0x80] sm:$0xff]
        %v772 = vld [vmem:[#allocation2 + $0x90] sm:$0xff]
        %v773 = vld [vmem:[#allocation2 + $0x98] sm:$0xff]
        %v774 = vld [vmem:[#allocation2 + $0xa8] sm:$0xff]
        %v775 = vld [vmem:[#allocation2 + $0xb0] sm:$0xff]
        %v776 = vld [vmem:[#allocation2 + $0xc0] sm:$0xff]
        %v777 = vld [vmem:[#allocation2 + $0xc8] sm:$0xff]
        %v778 = vld [vmem:[#allocation2 + $0xd8] sm:$0xff]
        %v779 = vld [vmem:[#allocation2 + $0xe0] sm:$0xff]
        %v780 = vld [vmem:[#allocation2 + $0xf0] sm:$0xff]
        %v781 = vld [vmem:[#allocation2 + $0xf8] sm:$0xff]
        %v782 = vld [vmem:[#allocation2 + $0x108] sm:$0xff]
        %v783 = vld [vmem:[#allocation2 + $0x110] sm:$0xff]
        %v784 = vld [vmem:[#allocation2 + $0x120] sm:$0xff]
        %v785 = vld [vmem:[#allocation2 + $0x128] sm:$0xff]
        %v786 = vld [vmem:[#allocation2 + $0x138] sm:$0xff]
        %v787 = vld [vmem:[#allocation2 + $0x140] sm:$0xff]
        %v788 = vld [vmem:[#allocation2 + $0x150] sm:$0xff]
        %v789 = vld [vmem:[#allocation2 + $0x158] sm:$0xff]
        %v790 = vld [vmem:[#allocation2 + $0x168] sm:$0xff]
        %v791 = vld [vmem:[#allocation2 + $0x170] sm:$0xff]
        %v792 = vld [vmem:[#allocation3] sm:$0xff]
        %v793 = vld [vmem:[#allocation3 + $0x8] sm:$0xff]
        %v794 = vld [vmem:[#allocation3 + $0x10] sm:$0xff]
        %v795 = vld [vmem:[#allocation3 + $0x18] sm:$0xff]
        %v796 = vld [vmem:[#allocation3 + $0x20] sm:$0xff]
        %v797 = vld [vmem:[#allocation3 + $0x28] sm:$0xff]
        %v798 = vld [vmem:[#allocation3 + $0x30] sm:$0xff]
        %v799 = vld [vmem:[#allocation3 + $0x38] sm:$0xff]
        %v800 = vld [vmem:[#allocation3 + $0x40] sm:$0xff]
        %v801 = vld [vmem:[#allocation3 + $0x48] sm:$0xff]
        %v802 = vld [vmem:[#allocation3 + $0x50] sm:$0xff]
        %v803 = vld [vmem:[#allocation3 + $0x58] sm:$0xff]
        %v804 = vld [vmem:[#allocation3 + $0x60] sm:$0xff]
        %v805 = vld [vmem:[#allocation3 + $0x68] sm:$0xff]
        %v806 = vld [vmem:[#allocation3 + $0x70] sm:$0xff]
        %v807 = vld [vmem:[#allocation3 + $0x78] sm:$0xff]
        %v808 = vld [vmem:[#allocation3 + $0x80] sm:$0xff]
        %v809 = vld [vmem:[#allocation3 + $0x88] sm:$0xff]
        %v810 = vld [vmem:[#allocation3 + $0x90] sm:$0xff]
        %v811 = vld [vmem:[#allocation3 + $0x98] sm:$0xff]
        %v812 = vld [vmem:[#allocation3 + $0xa0] sm:$0xff]
        %v813 = vld [vmem:[#allocation3 + $0xa8] sm:$0xff]
        %v814 = vld [vmem:[#allocation3 + $0xb0] sm:$0xff]
        %v815 = vld [vmem:[#allocation3 + $0xb8] sm:$0xff]
        %v816 = vld [vmem:[#allocation3 + $0xc0] sm:$0xff]
        %v817 = vld [vmem:[#allocation3 + $0xc8] sm:$0xff]
        %v818 = vld [vmem:[#allocation3 + $0xd0] sm:$0xff]
        %v819 = vld [vmem:[#allocation3 + $0xd8] sm:$0xff]
        %v820 = vld [vmem:[#allocation3 + $0xe0] sm:$0xff]
        %v821 = vld [vmem:[#allocation3 + $0xe8] sm:$0xff]
        %v822 = vld [vmem:[#allocation3 + $0xf0] sm:$0xff]
        %v823 = vld [vmem:[#allocation3 + $0xf8] sm:$0xff]
        %v824 = vpack.c.bf16 %v761, %v760
        %v825 = vpack.c.bf16 %v763, %v762
        %v826 = vpack.c.bf16 %v765, %v764
        %v827 = vpack.c.bf16 %v767, %v766
        %v828 = vpack.c.bf16 %v769, %v768
        %v829 = vpack.c.bf16 %v771, %v770
        %v830 = vpack.c.bf16 %v773, %v772
        %v831 = vpack.c.bf16 %v775, %v774
        %v832 = vpack.c.bf16 %v777, %v776
        %v833 = vpack.c.bf16 %v779, %v778
        %v834 = vpack.c.bf16 %v781, %v780
        %v835 = vpack.c.bf16 %v783, %v782
        %v836 = vpack.c.bf16 %v785, %v784
        %v837 = vpack.c.bf16 %v787, %v786
        %v838 = vpack.c.bf16 %v789, %v788
        %v839 = vpack.c.bf16 %v791, %v790
        %v840 = vld [vmem:[#allocation9] sm:$0xf]
        %v841 = vld [vmem:[#allocation9 + $0x4] sm:$0xf]
        %v842 = vld [vmem:[#allocation9 + $0x8] sm:$0xf]
        %v843 = vld [vmem:[#allocation9 + $0xc] sm:$0xf]
        %v844 = vld [vmem:[#allocation9 + $0x10] sm:$0xf]
        %v845 = vld [vmem:[#allocation9 + $0x14] sm:$0xf]
        %v846 = vld [vmem:[#allocation9 + $0x18] sm:$0xf]
        %v847 = vld [vmem:[#allocation9 + $0x1c] sm:$0xf]
        %v848 = vld [vmem:[#allocation9 + $0x20] sm:$0xf]
        %v849 = vld [vmem:[#allocation9 + $0x24] sm:$0xf]
        %v850 = vld [vmem:[#allocation9 + $0x28] sm:$0xf]
        %v851 = vld [vmem:[#allocation9 + $0x2c] sm:$0xf]
        %v852 = vld [vmem:[#allocation9 + $0x30] sm:$0xf]
        %v853 = vld [vmem:[#allocation9 + $0x34] sm:$0xf]
        %v854 = vld [vmem:[#allocation9 + $0x38] sm:$0xf]
        %v855 = vld [vmem:[#allocation9 + $0x3c] sm:$0xf]
        %v872 = vunpack.c.l.b16 %v840
        %v873 = vunpack.c.l.b16 %v841
        %v874 = vunpack.c.l.b16 %v842
        %v875 = vunpack.c.l.b16 %v843
        %v876 = vunpack.c.l.b16 %v844
        %v877 = vunpack.c.l.b16 %v845
        %v878 = vunpack.c.l.b16 %v846
        %v879 = vunpack.c.l.b16 %v847
        %v880 = vunpack.c.l.b16 %v848
        %v881 = vunpack.c.l.b16 %v849
        %v882 = vunpack.c.l.b16 %v850
        %v883 = vunpack.c.l.b16 %v851
        %v884 = vunpack.c.l.b16 %v852
        %v885 = vunpack.c.l.b16 %v853
        %v886 = vunpack.c.l.b16 %v854
        %v887 = vunpack.c.l.b16 %v855
        %v888 = vpack.c.b16 %v873, %v872
        %v889 = vpack.c.b16 %v875, %v874
        %v890 = vpack.c.b16 %v877, %v876
        %v891 = vpack.c.b16 %v879, %v878
        %v892 = vpack.c.b16 %v881, %v880
        %v893 = vpack.c.b16 %v883, %v882
        %v894 = vpack.c.b16 %v885, %v884
        %v895 = vpack.c.b16 %v887, %v886
        %904 = vmatpush.bf16.msra.mxu0 %v895
        %905 = vmatpush.bf16.msra.mxu0 %v894
        %906 = vmatpush.bf16.msra.mxu0 %v893
        %907 = vmatpush.bf16.msra.mxu0 %v892
        %908 = vmatpush.bf16.msra.mxu0 %v891
        %909 = vmatpush.bf16.msra.mxu0 %v890
        %910 = vmatpush.bf16.msra.mxu0 %v889
        %911 = vmatpush.bf16.msra.mxu0 %v888
        %912 = vmatmul.bf16.gmra.mxu0 %v824
        %v913 = vpop.f32.mrf.mxu0
        %v914 = vadd.f32 0.0, %v913
        %v915 = vpop.f32.mrf.mxu0
        %v916 = vadd.f32 0.0, %v915
        %917 = vmatmul.bf16.gmra.mxu0 %v825
        %v918 = vpop.f32.mrf.mxu0
        %v919 = vadd.f32 0.0, %v918
        %v920 = vpop.f32.mrf.mxu0
        %v921 = vadd.f32 0.0, %v920
        %922 = vmatmul.bf16.gmra.mxu0 %v826
        %v923 = vpop.f32.mrf.mxu0
        %v924 = vadd.f32 0.0, %v923
        %v925 = vpop.f32.mrf.mxu0
        %v926 = vadd.f32 0.0, %v925
        %927 = vmatmul.bf16.gmra.mxu0 %v827
        %v928 = vpop.f32.mrf.mxu0
        %v929 = vadd.f32 0.0, %v928
        %v930 = vpop.f32.mrf.mxu0
        %v931 = vadd.f32 0.0, %v930
        %932 = vmatmul.bf16.gmra.mxu0 %v828
        %v933 = vpop.f32.mrf.mxu0
        %v934 = vadd.f32 0.0, %v933
        %v935 = vpop.f32.mrf.mxu0
        %v936 = vadd.f32 0.0, %v935
        %937 = vmatmul.bf16.gmra.mxu0 %v829
        %v938 = vpop.f32.mrf.mxu0
        %v939 = vadd.f32 0.0, %v938
        %v940 = vpop.f32.mrf.mxu0
        %v941 = vadd.f32 0.0, %v940
        %942 = vmatmul.bf16.gmra.mxu0 %v830
        %v943 = vpop.f32.mrf.mxu0
        %v944 = vadd.f32 0.0, %v943
        %v945 = vpop.f32.mrf.mxu0
        %v946 = vadd.f32 0.0, %v945
        %947 = vmatmul.bf16.gmra.mxu0 %v831
        %v948 = vpop.f32.mrf.mxu0
        %v949 = vadd.f32 0.0, %v948
        %v950 = vpop.f32.mrf.mxu0
        %v951 = vadd.f32 0.0, %v950
        %952 = vmatmul.bf16.gmra.mxu0 %v832
        %v953 = vpop.f32.mrf.mxu0
        %v954 = vadd.f32 0.0, %v953
        %v955 = vpop.f32.mrf.mxu0
        %v956 = vadd.f32 0.0, %v955
        %957 = vmatmul.bf16.gmra.mxu0 %v833
        %v958 = vpop.f32.mrf.mxu0
        %v959 = vadd.f32 0.0, %v958
        %v960 = vpop.f32.mrf.mxu0
        %v961 = vadd.f32 0.0, %v960
        %962 = vmatmul.bf16.gmra.mxu0 %v834
        %v963 = vpop.f32.mrf.mxu0
        %v964 = vadd.f32 0.0, %v963
        %v965 = vpop.f32.mrf.mxu0
        %v966 = vadd.f32 0.0, %v965
        %967 = vmatmul.bf16.gmra.mxu0 %v835
        %v968 = vpop.f32.mrf.mxu0
        %v969 = vadd.f32 0.0, %v968
        %v970 = vpop.f32.mrf.mxu0
        %v971 = vadd.f32 0.0, %v970
        %972 = vmatmul.bf16.gmra.mxu0 %v836
        %v973 = vpop.f32.mrf.mxu0
        %v974 = vadd.f32 0.0, %v973
        %v975 = vpop.f32.mrf.mxu0
        %v976 = vadd.f32 0.0, %v975
        %977 = vmatmul.bf16.gmra.mxu0 %v837
        %v978 = vpop.f32.mrf.mxu0
        %v979 = vadd.f32 0.0, %v978
        %v980 = vpop.f32.mrf.mxu0
        %v981 = vadd.f32 0.0, %v980
        %982 = vmatmul.bf16.gmra.mxu0 %v838
        %v983 = vpop.f32.mrf.mxu0
        %v984 = vadd.f32 0.0, %v983
        %v985 = vpop.f32.mrf.mxu0
        %v986 = vadd.f32 0.0, %v985
        %987 = vmatmul.bf16.gmra.mxu0 %v839
        %v988 = vpop.f32.mrf.mxu0
        %v989 = vadd.f32 0.0, %v988
        %v990 = vpop.f32.mrf.mxu0
        %v991 = vadd.f32 0.0, %v990
        %992 = vdwg.mxu0
        %v993 = vadd.f32 %v792, %v914
        %v994 = vadd.f32 %v793, %v916
        %v995 = vadd.f32 %v794, %v919
        %v996 = vadd.f32 %v795, %v921
        %v997 = vadd.f32 %v796, %v924
        %v998 = vadd.f32 %v797, %v926
        %v999 = vadd.f32 %v798, %v929
        %v1000 = vadd.f32 %v799, %v931
        %v1001 = vadd.f32 %v800, %v934
        %v1002 = vadd.f32 %v801, %v936
        %v1003 = vadd.f32 %v802, %v939
        %v1004 = vadd.f32 %v803, %v941
        %v1005 = vadd.f32 %v804, %v944
        %v1006 = vadd.f32 %v805, %v946
        %v1007 = vadd.f32 %v806, %v949
        %v1008 = vadd.f32 %v807, %v951
        %v1009 = vadd.f32 %v808, %v954
        %v1010 = vadd.f32 %v809, %v956
        %v1011 = vadd.f32 %v810, %v959
        %v1012 = vadd.f32 %v811, %v961
        %v1013 = vadd.f32 %v812, %v964
        %v1014 = vadd.f32 %v813, %v966
        %v1015 = vadd.f32 %v814, %v969
        %v1016 = vadd.f32 %v815, %v971
        %v1017 = vadd.f32 %v816, %v974
        %v1018 = vadd.f32 %v817, %v976
        %v1019 = vadd.f32 %v818, %v979
        %v1020 = vadd.f32 %v819, %v981
        %v1021 = vadd.f32 %v820, %v984
        %v1022 = vadd.f32 %v821, %v986
        %v1023 = vadd.f32 %v822, %v989
        %v1024 = vadd.f32 %v823, %v991
        %1025 = vst [vmem:[#allocation3] sm:$0xff] %v993
        %1026 = vst [vmem:[#allocation3 + $0x8] sm:$0xff] %v994
        %1027 = vst [vmem:[#allocation3 + $0x10] sm:$0xff] %v995
        %1028 = vst [vmem:[#allocation3 + $0x18] sm:$0xff] %v996
        %1029 = vst [vmem:[#allocation3 + $0x20] sm:$0xff] %v997
        %1030 = vst [vmem:[#allocation3 + $0x28] sm:$0xff] %v998
        %1031 = vst [vmem:[#allocation3 + $0x30] sm:$0xff] %v999
        %1032 = vst [vmem:[#allocation3 + $0x38] sm:$0xff] %v1000
        %1033 = vst [vmem:[#allocation3 + $0x40] sm:$0xff] %v1001
        %1034 = vst [vmem:[#allocation3 + $0x48] sm:$0xff] %v1002
        %1035 = vst [vmem:[#allocation3 + $0x50] sm:$0xff] %v1003
        %1036 = vst [vmem:[#allocation3 + $0x58] sm:$0xff] %v1004
        %1037 = vst [vmem:[#allocation3 + $0x60] sm:$0xff] %v1005
        %1038 = vst [vmem:[#allocation3 + $0x68] sm:$0xff] %v1006
        %1039 = vst [vmem:[#allocation3 + $0x70] sm:$0xff] %v1007
        %1040 = vst [vmem:[#allocation3 + $0x78] sm:$0xff] %v1008
        %1041 = vst [vmem:[#allocation3 + $0x80] sm:$0xff] %v1009
        %1042 = vst [vmem:[#allocation3 + $0x88] sm:$0xff] %v1010
        %1043 = vst [vmem:[#allocation3 + $0x90] sm:$0xff] %v1011
        %1044 = vst [vmem:[#allocation3 + $0x98] sm:$0xff] %v1012
        %1045 = vst [vmem:[#allocation3 + $0xa0] sm:$0xff] %v1013
        %1046 = vst [vmem:[#allocation3 + $0xa8] sm:$0xff] %v1014
        %1047 = vst [vmem:[#allocation3 + $0xb0] sm:$0xff] %v1015
        %1048 = vst [vmem:[#allocation3 + $0xb8] sm:$0xff] %v1016
        %1049 = vst [vmem:[#allocation3 + $0xc0] sm:$0xff] %v1017
        %1050 = vst [vmem:[#allocation3 + $0xc8] sm:$0xff] %v1018
        %1051 = vst [vmem:[#allocation3 + $0xd0] sm:$0xff] %v1019
        %1052 = vst [vmem:[#allocation3 + $0xd8] sm:$0xff] %v1020
        %1053 = vst [vmem:[#allocation3 + $0xe0] sm:$0xff] %v1021
        %1054 = vst [vmem:[#allocation3 + $0xe8] sm:$0xff] %v1022
        %1055 = vst [vmem:[#allocation3 + $0xf0] sm:$0xff] %v1023
        %1056 = vst [vmem:[#allocation3 + $0xf8] sm:$0xff] %v1024
        %v1057 = vld [vmem:[#allocation2 + $0x1] sm:$0xff]
        %v1058 = vld [vmem:[#allocation2 + $0x9] sm:$0xff]
        %v1059 = vld [vmem:[#allocation2 + $0x19] sm:$0xff]
        %v1060 = vld [vmem:[#allocation2 + $0x21] sm:$0xff]
        %v1061 = vld [vmem:[#allocation2 + $0x31] sm:$0xff]
        %v1062 = vld [vmem:[#allocation2 + $0x39] sm:$0xff]
        %v1063 = vld [vmem:[#allocation2 + $0x49] sm:$0xff]
        %v1064 = vld [vmem:[#allocation2 + $0x51] sm:$0xff]
        %v1065 = vld [vmem:[#allocation2 + $0x61] sm:$0xff]
        %v1066 = vld [vmem:[#allocation2 + $0x69] sm:$0xff]
        %v1067 = vld [vmem:[#allocation2 + $0x79] sm:$0xff]
        %v1068 = vld [vmem:[#allocation2 + $0x81] sm:$0xff]
        %v1069 = vld [vmem:[#allocation2 + $0x91] sm:$0xff]
        %v1070 = vld [vmem:[#allocation2 + $0x99] sm:$0xff]
        %v1071 = vld [vmem:[#allocation2 + $0xa9] sm:$0xff]
        %v1072 = vld [vmem:[#allocation2 + $0xb1] sm:$0xff]
        %v1073 = vld [vmem:[#allocation2 + $0xc1] sm:$0xff]
        %v1074 = vld [vmem:[#allocation2 + $0xc9] sm:$0xff]
        %v1075 = vld [vmem:[#allocation2 + $0xd9] sm:$0xff]
        %v1076 = vld [vmem:[#allocation2 + $0xe1] sm:$0xff]
        %v1077 = vld [vmem:[#allocation2 + $0xf1] sm:$0xff]
        %v1078 = vld [vmem:[#allocation2 + $0xf9] sm:$0xff]
        %v1079 = vld [vmem:[#allocation2 + $0x109] sm:$0xff]
        %v1080 = vld [vmem:[#allocation2 + $0x111] sm:$0xff]
        %v1081 = vld [vmem:[#allocation2 + $0x121] sm:$0xff]
        %v1082 = vld [vmem:[#allocation2 + $0x129] sm:$0xff]
        %v1083 = vld [vmem:[#allocation2 + $0x139] sm:$0xff]
        %v1084 = vld [vmem:[#allocation2 + $0x141] sm:$0xff]
        %v1085 = vld [vmem:[#allocation2 + $0x151] sm:$0xff]
        %v1086 = vld [vmem:[#allocation2 + $0x159] sm:$0xff]
        %v1087 = vld [vmem:[#allocation2 + $0x169] sm:$0xff]
        %v1088 = vld [vmem:[#allocation2 + $0x171] sm:$0xff]
        %v1089 = vld [vmem:[#allocation3] sm:$0xff]
        %v1090 = vld [vmem:[#allocation3 + $0x8] sm:$0xff]
        %v1091 = vld [vmem:[#allocation3 + $0x10] sm:$0xff]
        %v1092 = vld [vmem:[#allocation3 + $0x18] sm:$0xff]
        %v1093 = vld [vmem:[#allocation3 + $0x20] sm:$0xff]
        %v1094 = vld [vmem:[#allocation3 + $0x28] sm:$0xff]
        %v1095 = vld [vmem:[#allocation3 + $0x30] sm:$0xff]
        %v1096 = vld [vmem:[#allocation3 + $0x38] sm:$0xff]
        %v1097 = vld [vmem:[#allocation3 + $0x40] sm:$0xff]
        %v1098 = vld [vmem:[#allocation3 + $0x48] sm:$0xff]
        %v1099 = vld [vmem:[#allocation3 + $0x50] sm:$0xff]
        %v1100 = vld [vmem:[#allocation3 + $0x58] sm:$0xff]
        %v1101 = vld [vmem:[#allocation3 + $0x60] sm:$0xff]
        %v1102 = vld [vmem:[#allocation3 + $0x68] sm:$0xff]
        %v1103 = vld [vmem:[#allocation3 + $0x70] sm:$0xff]
        %v1104 = vld [vmem:[#allocation3 + $0x78] sm:$0xff]
        %v1105 = vld [vmem:[#allocation3 + $0x80] sm:$0xff]
        %v1106 = vld [vmem:[#allocation3 + $0x88] sm:$0xff]
        %v1107 = vld [vmem:[#allocation3 + $0x90] sm:$0xff]
        %v1108 = vld [vmem:[#allocation3 + $0x98] sm:$0xff]
        %v1109 = vld [vmem:[#allocation3 + $0xa0] sm:$0xff]
        %v1110 = vld [vmem:[#allocation3 + $0xa8] sm:$0xff]
        %v1111 = vld [vmem:[#allocation3 + $0xb0] sm:$0xff]
        %v1112 = vld [vmem:[#allocation3 + $0xb8] sm:$0xff]
        %v1113 = vld [vmem:[#allocation3 + $0xc0] sm:$0xff]
        %v1114 = vld [vmem:[#allocation3 + $0xc8] sm:$0xff]
        %v1115 = vld [vmem:[#allocation3 + $0xd0] sm:$0xff]
        %v1116 = vld [vmem:[#allocation3 + $0xd8] sm:$0xff]
        %v1117 = vld [vmem:[#allocation3 + $0xe0] sm:$0xff]
        %v1118 = vld [vmem:[#allocation3 + $0xe8] sm:$0xff]
        %v1119 = vld [vmem:[#allocation3 + $0xf0] sm:$0xff]
        %v1120 = vld [vmem:[#allocation3 + $0xf8] sm:$0xff]
        %v1121 = vpack.c.bf16 %v1058, %v1057
        %v1122 = vpack.c.bf16 %v1060, %v1059
        %v1123 = vpack.c.bf16 %v1062, %v1061
        %v1124 = vpack.c.bf16 %v1064, %v1063
        %v1125 = vpack.c.bf16 %v1066, %v1065
        %v1126 = vpack.c.bf16 %v1068, %v1067
        %v1127 = vpack.c.bf16 %v1070, %v1069
        %v1128 = vpack.c.bf16 %v1072, %v1071
        %v1129 = vpack.c.bf16 %v1074, %v1073
        %v1130 = vpack.c.bf16 %v1076, %v1075
        %v1131 = vpack.c.bf16 %v1078, %v1077
        %v1132 = vpack.c.bf16 %v1080, %v1079
        %v1133 = vpack.c.bf16 %v1082, %v1081
        %v1134 = vpack.c.bf16 %v1084, %v1083
        %v1135 = vpack.c.bf16 %v1086, %v1085
        %v1136 = vpack.c.bf16 %v1088, %v1087
        %s1137 = scalar_lea.vmem [#allocation9], 64
        %v1138 = vld [vmem:[%s1137] sm:$0xf]
        %v1139 = vld [vmem:[%s1137 + $0x4] sm:$0xf]
        %v1140 = vld [vmem:[%s1137 + $0x8] sm:$0xf]
        %v1141 = vld [vmem:[%s1137 + $0xc] sm:$0xf]
        %v1142 = vld [vmem:[%s1137 + $0x10] sm:$0xf]
        %v1143 = vld [vmem:[%s1137 + $0x14] sm:$0xf]
        %v1144 = vld [vmem:[%s1137 + $0x18] sm:$0xf]
        %v1145 = vld [vmem:[%s1137 + $0x1c] sm:$0xf]
        %v1146 = vld [vmem:[%s1137 + $0x20] sm:$0xf]
        %v1147 = vld [vmem:[%s1137 + $0x24] sm:$0xf]
        %v1148 = vld [vmem:[%s1137 + $0x28] sm:$0xf]
        %v1149 = vld [vmem:[%s1137 + $0x2c] sm:$0xf]
        %v1150 = vld [vmem:[%s1137 + $0x30] sm:$0xf]
        %v1151 = vld [vmem:[%s1137 + $0x34] sm:$0xf]
        %v1152 = vld [vmem:[%s1137 + $0x38] sm:$0xf]
        %v1153 = vld [vmem:[%s1137 + $0x3c] sm:$0xf]
        %v1170 = vunpack.c.l.b16 %v1138
        %v1171 = vunpack.c.l.b16 %v1139
        %v1172 = vunpack.c.l.b16 %v1140
        %v1173 = vunpack.c.l.b16 %v1141
        %v1174 = vunpack.c.l.b16 %v1142
        %v1175 = vunpack.c.l.b16 %v1143
        %v1176 = vunpack.c.l.b16 %v1144
        %v1177 = vunpack.c.l.b16 %v1145
        %v1178 = vunpack.c.l.b16 %v1146
        %v1179 = vunpack.c.l.b16 %v1147
        %v1180 = vunpack.c.l.b16 %v1148
        %v1181 = vunpack.c.l.b16 %v1149
        %v1182 = vunpack.c.l.b16 %v1150
        %v1183 = vunpack.c.l.b16 %v1151
        %v1184 = vunpack.c.l.b16 %v1152
        %v1185 = vunpack.c.l.b16 %v1153
        %v1186 = vpack.c.b16 %v1171, %v1170
        %v1187 = vpack.c.b16 %v1173, %v1172
        %v1188 = vpack.c.b16 %v1175, %v1174
        %v1189 = vpack.c.b16 %v1177, %v1176
        %v1190 = vpack.c.b16 %v1179, %v1178
        %v1191 = vpack.c.b16 %v1181, %v1180
        %v1192 = vpack.c.b16 %v1183, %v1182
        %v1193 = vpack.c.b16 %v1185, %v1184
        %1202 = vmatpush.bf16.msra.mxu0 %v1193
        %1203 = vmatpush.bf16.msra.mxu0 %v1192
        %1204 = vmatpush.bf16.msra.mxu0 %v1191
        %1205 = vmatpush.bf16.msra.mxu0 %v1190
        %1206 = vmatpush.bf16.msra.mxu0 %v1189
        %1207 = vmatpush.bf16.msra.mxu0 %v1188
        %1208 = vmatpush.bf16.msra.mxu0 %v1187
        %1209 = vmatpush.bf16.msra.mxu0 %v1186
        %1210 = vmatmul.bf16.gmra.mxu0 %v1121
        %v1211 = vpop.f32.mrf.mxu0
        %v1212 = vadd.f32 0.0, %v1211
        %v1213 = vpop.f32.mrf.mxu0
        %v1214 = vadd.f32 0.0, %v1213
        %1215 = vmatmul.bf16.gmra.mxu0 %v1122
        %v1216 = vpop.f32.mrf.mxu0
        %v1217 = vadd.f32 0.0, %v1216
        %v1218 = vpop.f32.mrf.mxu0
        %v1219 = vadd.f32 0.0, %v1218
        %1220 = vmatmul.bf16.gmra.mxu0 %v1123
        %v1221 = vpop.f32.mrf.mxu0
        %v1222 = vadd.f32 0.0, %v1221
        %v1223 = vpop.f32.mrf.mxu0
        %v1224 = vadd.f32 0.0, %v1223
        %1225 = vmatmul.bf16.gmra.mxu0 %v1124
        %v1226 = vpop.f32.mrf.mxu0
        %v1227 = vadd.f32 0.0, %v1226
        %v1228 = vpop.f32.mrf.mxu0
        %v1229 = vadd.f32 0.0, %v1228
        %1230 = vmatmul.bf16.gmra.mxu0 %v1125
        %v1231 = vpop.f32.mrf.mxu0
        %v1232 = vadd.f32 0.0, %v1231
        %v1233 = vpop.f32.mrf.mxu0
        %v1234 = vadd.f32 0.0, %v1233
        %1235 = vmatmul.bf16.gmra.mxu0 %v1126
        %v1236 = vpop.f32.mrf.mxu0
        %v1237 = vadd.f32 0.0, %v1236
        %v1238 = vpop.f32.mrf.mxu0
        %v1239 = vadd.f32 0.0, %v1238
        %1240 = vmatmul.bf16.gmra.mxu0 %v1127
        %v1241 = vpop.f32.mrf.mxu0
        %v1242 = vadd.f32 0.0, %v1241
        %v1243 = vpop.f32.mrf.mxu0
        %v1244 = vadd.f32 0.0, %v1243
        %1245 = vmatmul.bf16.gmra.mxu0 %v1128
        %v1246 = vpop.f32.mrf.mxu0
        %v1247 = vadd.f32 0.0, %v1246
        %v1248 = vpop.f32.mrf.mxu0
        %v1249 = vadd.f32 0.0, %v1248
        %1250 = vmatmul.bf16.gmra.mxu0 %v1129
        %v1251 = vpop.f32.mrf.mxu0
        %v1252 = vadd.f32 0.0, %v1251
        %v1253 = vpop.f32.mrf.mxu0
        %v1254 = vadd.f32 0.0, %v1253
        %1255 = vmatmul.bf16.gmra.mxu0 %v1130
        %v1256 = vpop.f32.mrf.mxu0
        %v1257 = vadd.f32 0.0, %v1256
        %v1258 = vpop.f32.mrf.mxu0
        %v1259 = vadd.f32 0.0, %v1258
        %1260 = vmatmul.bf16.gmra.mxu0 %v1131
        %v1261 = vpop.f32.mrf.mxu0
        %v1262 = vadd.f32 0.0, %v1261
        %v1263 = vpop.f32.mrf.mxu0
        %v1264 = vadd.f32 0.0, %v1263
        %1265 = vmatmul.bf16.gmra.mxu0 %v1132
        %v1266 = vpop.f32.mrf.mxu0
        %v1267 = vadd.f32 0.0, %v1266
        %v1268 = vpop.f32.mrf.mxu0
        %v1269 = vadd.f32 0.0, %v1268
        %1270 = vmatmul.bf16.gmra.mxu0 %v1133
        %v1271 = vpop.f32.mrf.mxu0
        %v1272 = vadd.f32 0.0, %v1271
        %v1273 = vpop.f32.mrf.mxu0
        %v1274 = vadd.f32 0.0, %v1273
        %1275 = vmatmul.bf16.gmra.mxu0 %v1134
        %v1276 = vpop.f32.mrf.mxu0
        %v1277 = vadd.f32 0.0, %v1276
        %v1278 = vpop.f32.mrf.mxu0
        %v1279 = vadd.f32 0.0, %v1278
        %1280 = vmatmul.bf16.gmra.mxu0 %v1135
        %v1281 = vpop.f32.mrf.mxu0
        %v1282 = vadd.f32 0.0, %v1281
        %v1283 = vpop.f32.mrf.mxu0
        %v1284 = vadd.f32 0.0, %v1283
        %1285 = vmatmul.bf16.gmra.mxu0 %v1136
        %v1286 = vpop.f32.mrf.mxu0
        %v1287 = vadd.f32 0.0, %v1286
        %v1288 = vpop.f32.mrf.mxu0
        %v1289 = vadd.f32 0.0, %v1288
        %1290 = vdwg.mxu0
        %v1291 = vadd.f32 %v1089, %v1212
        %v1292 = vadd.f32 %v1090, %v1214
        %v1293 = vadd.f32 %v1091, %v1217
        %v1294 = vadd.f32 %v1092, %v1219
        %v1295 = vadd.f32 %v1093, %v1222
        %v1296 = vadd.f32 %v1094, %v1224
        %v1297 = vadd.f32 %v1095, %v1227
        %v1298 = vadd.f32 %v1096, %v1229
        %v1299 = vadd.f32 %v1097, %v1232
        %v1300 = vadd.f32 %v1098, %v1234
        %v1301 = vadd.f32 %v1099, %v1237
        %v1302 = vadd.f32 %v1100, %v1239
        %v1303 = vadd.f32 %v1101, %v1242
        %v1304 = vadd.f32 %v1102, %v1244
        %v1305 = vadd.f32 %v1103, %v1247
        %v1306 = vadd.f32 %v1104, %v1249
        %v1307 = vadd.f32 %v1105, %v1252
        %v1308 = vadd.f32 %v1106, %v1254
        %v1309 = vadd.f32 %v1107, %v1257
        %v1310 = vadd.f32 %v1108, %v1259
        %v1311 = vadd.f32 %v1109, %v1262
        %v1312 = vadd.f32 %v1110, %v1264
        %v1313 = vadd.f32 %v1111, %v1267
        %v1314 = vadd.f32 %v1112, %v1269
        %v1315 = vadd.f32 %v1113, %v1272
        %v1316 = vadd.f32 %v1114, %v1274
        %v1317 = vadd.f32 %v1115, %v1277
        %v1318 = vadd.f32 %v1116, %v1279
        %v1319 = vadd.f32 %v1117, %v1282
        %v1320 = vadd.f32 %v1118, %v1284
        %v1321 = vadd.f32 %v1119, %v1287
        %v1322 = vadd.f32 %v1120, %v1289
        %1323 = vst [vmem:[#allocation3] sm:$0xff] %v1291
        %1324 = vst [vmem:[#allocation3 + $0x8] sm:$0xff] %v1292
        %1325 = vst [vmem:[#allocation3 + $0x10] sm:$0xff] %v1293
        %1326 = vst [vmem:[#allocation3 + $0x18] sm:$0xff] %v1294
        %1327 = vst [vmem:[#allocation3 + $0x20] sm:$0xff] %v1295
        %1328 = vst [vmem:[#allocation3 + $0x28] sm:$0xff] %v1296
        %1329 = vst [vmem:[#allocation3 + $0x30] sm:$0xff] %v1297
        %1330 = vst [vmem:[#allocation3 + $0x38] sm:$0xff] %v1298
        %1331 = vst [vmem:[#allocation3 + $0x40] sm:$0xff] %v1299
        %1332 = vst [vmem:[#allocation3 + $0x48] sm:$0xff] %v1300
        %1333 = vst [vmem:[#allocation3 + $0x50] sm:$0xff] %v1301
        %1334 = vst [vmem:[#allocation3 + $0x58] sm:$0xff] %v1302
        %1335 = vst [vmem:[#allocation3 + $0x60] sm:$0xff] %v1303
        %1336 = vst [vmem:[#allocation3 + $0x68] sm:$0xff] %v1304
        %1337 = vst [vmem:[#allocation3 + $0x70] sm:$0xff] %v1305
        %1338 = vst [vmem:[#allocation3 + $0x78] sm:$0xff] %v1306
        %1339 = vst [vmem:[#allocation3 + $0x80] sm:$0xff] %v1307
        %1340 = vst [vmem:[#allocation3 + $0x88] sm:$0xff] %v1308
        %1341 = vst [vmem:[#allocation3 + $0x90] sm:$0xff] %v1309
        %1342 = vst [vmem:[#allocation3 + $0x98] sm:$0xff] %v1310
        %1343 = vst [vmem:[#allocation3 + $0xa0] sm:$0xff] %v1311
        %1344 = vst [vmem:[#allocation3 + $0xa8] sm:$0xff] %v1312
        %1345 = vst [vmem:[#allocation3 + $0xb0] sm:$0xff] %v1313
        %1346 = vst [vmem:[#allocation3 + $0xb8] sm:$0xff] %v1314
        %1347 = vst [vmem:[#allocation3 + $0xc0] sm:$0xff] %v1315
        %1348 = vst [vmem:[#allocation3 + $0xc8] sm:$0xff] %v1316
        %1349 = vst [vmem:[#allocation3 + $0xd0] sm:$0xff] %v1317
        %1350 = vst [vmem:[#allocation3 + $0xd8] sm:$0xff] %v1318
        %1351 = vst [vmem:[#allocation3 + $0xe0] sm:$0xff] %v1319
        %1352 = vst [vmem:[#allocation3 + $0xe8] sm:$0xff] %v1320
        %1353 = vst [vmem:[#allocation3 + $0xf0] sm:$0xff] %v1321
        %1354 = vst [vmem:[#allocation3 + $0xf8] sm:$0xff] %v1322
        %v1355 = vld [vmem:[#allocation2 + $0x2] sm:$0xff]
        %v1356 = vld [vmem:[#allocation2 + $0xa] sm:$0xff]
        %v1357 = vld [vmem:[#allocation2 + $0x1a] sm:$0xff]
        %v1358 = vld [vmem:[#allocation2 + $0x22] sm:$0xff]
        %v1359 = vld [vmem:[#allocation2 + $0x32] sm:$0xff]
        %v1360 = vld [vmem:[#allocation2 + $0x3a] sm:$0xff]
        %v1361 = vld [vmem:[#allocation2 + $0x4a] sm:$0xff]
        %v1362 = vld [vmem:[#allocation2 + $0x52] sm:$0xff]
        %v1363 = vld [vmem:[#allocation2 + $0x62] sm:$0xff]
        %v1364 = vld [vmem:[#allocation2 + $0x6a] sm:$0xff]
        %v1365 = vld [vmem:[#allocation2 + $0x7a] sm:$0xff]
        %v1366 = vld [vmem:[#allocation2 + $0x82] sm:$0xff]
        %v1367 = vld [vmem:[#allocation2 + $0x92] sm:$0xff]
        %v1368 = vld [vmem:[#allocation2 + $0x9a] sm:$0xff]
        %v1369 = vld [vmem:[#allocation2 + $0xaa] sm:$0xff]
        %v1370 = vld [vmem:[#allocation2 + $0xb2] sm:$0xff]
        %v1371 = vld [vmem:[#allocation2 + $0xc2] sm:$0xff]
        %v1372 = vld [vmem:[#allocation2 + $0xca] sm:$0xff]
        %v1373 = vld [vmem:[#allocation2 + $0xda] sm:$0xff]
        %v1374 = vld [vmem:[#allocation2 + $0xe2] sm:$0xff]
        %v1375 = vld [vmem:[#allocation2 + $0xf2] sm:$0xff]
        %v1376 = vld [vmem:[#allocation2 + $0xfa] sm:$0xff]
        %v1377 = vld [vmem:[#allocation2 + $0x10a] sm:$0xff]
        %v1378 = vld [vmem:[#allocation2 + $0x112] sm:$0xff]
        %v1379 = vld [vmem:[#allocation2 + $0x122] sm:$0xff]
        %v1380 = vld [vmem:[#allocation2 + $0x12a] sm:$0xff]
        %v1381 = vld [vmem:[#allocation2 + $0x13a] sm:$0xff]
        %v1382 = vld [vmem:[#allocation2 + $0x142] sm:$0xff]
        %v1383 = vld [vmem:[#allocation2 + $0x152] sm:$0xff]
        %v1384 = vld [vmem:[#allocation2 + $0x15a] sm:$0xff]
        %v1385 = vld [vmem:[#allocation2 + $0x16a] sm:$0xff]
        %v1386 = vld [vmem:[#allocation2 + $0x172] sm:$0xff]
        %v1387 = vld [vmem:[#allocation3] sm:$0xff]
        %v1388 = vld [vmem:[#allocation3 + $0x8] sm:$0xff]
        %v1389 = vld [vmem:[#allocation3 + $0x10] sm:$0xff]
        %v1390 = vld [vmem:[#allocation3 + $0x18] sm:$0xff]
        %v1391 = vld [vmem:[#allocation3 + $0x20] sm:$0xff]
        %v1392 = vld [vmem:[#allocation3 + $0x28] sm:$0xff]
        %v1393 = vld [vmem:[#allocation3 + $0x30] sm:$0xff]
        %v1394 = vld [vmem:[#allocation3 + $0x38] sm:$0xff]
        %v1395 = vld [vmem:[#allocation3 + $0x40] sm:$0xff]
        %v1396 = vld [vmem:[#allocation3 + $0x48] sm:$0xff]
        %v1397 = vld [vmem:[#allocation3 + $0x50] sm:$0xff]
        %v1398 = vld [vmem:[#allocation3 + $0x58] sm:$0xff]
        %v1399 = vld [vmem:[#allocation3 + $0x60] sm:$0xff]
        %v1400 = vld [vmem:[#allocation3 + $0x68] sm:$0xff]
        %v1401 = vld [vmem:[#allocation3 + $0x70] sm:$0xff]
        %v1402 = vld [vmem:[#allocation3 + $0x78] sm:$0xff]
        %v1403 = vld [vmem:[#allocation3 + $0x80] sm:$0xff]
        %v1404 = vld [vmem:[#allocation3 + $0x88] sm:$0xff]
        %v1405 = vld [vmem:[#allocation3 + $0x90] sm:$0xff]
        %v1406 = vld [vmem:[#allocation3 + $0x98] sm:$0xff]
        %v1407 = vld [vmem:[#allocation3 + $0xa0] sm:$0xff]
        %v1408 = vld [vmem:[#allocation3 + $0xa8] sm:$0xff]
        %v1409 = vld [vmem:[#allocation3 + $0xb0] sm:$0xff]
        %v1410 = vld [vmem:[#allocation3 + $0xb8] sm:$0xff]
        %v1411 = vld [vmem:[#allocation3 + $0xc0] sm:$0xff]
        %v1412 = vld [vmem:[#allocation3 + $0xc8] sm:$0xff]
        %v1413 = vld [vmem:[#allocation3 + $0xd0] sm:$0xff]
        %v1414 = vld [vmem:[#allocation3 + $0xd8] sm:$0xff]
        %v1415 = vld [vmem:[#allocation3 + $0xe0] sm:$0xff]
        %v1416 = vld [vmem:[#allocation3 + $0xe8] sm:$0xff]
        %v1417 = vld [vmem:[#allocation3 + $0xf0] sm:$0xff]
        %v1418 = vld [vmem:[#allocation3 + $0xf8] sm:$0xff]
        %v1419 = vpack.c.bf16 %v1356, %v1355
        %v1420 = vpack.c.bf16 %v1358, %v1357
        %v1421 = vpack.c.bf16 %v1360, %v1359
        %v1422 = vpack.c.bf16 %v1362, %v1361
        %v1423 = vpack.c.bf16 %v1364, %v1363
        %v1424 = vpack.c.bf16 %v1366, %v1365
        %v1425 = vpack.c.bf16 %v1368, %v1367
        %v1426 = vpack.c.bf16 %v1370, %v1369
        %v1427 = vpack.c.bf16 %v1372, %v1371
        %v1428 = vpack.c.bf16 %v1374, %v1373
        %v1429 = vpack.c.bf16 %v1376, %v1375
        %v1430 = vpack.c.bf16 %v1378, %v1377
        %v1431 = vpack.c.bf16 %v1380, %v1379
        %v1432 = vpack.c.bf16 %v1382, %v1381
        %v1433 = vpack.c.bf16 %v1384, %v1383
        %v1434 = vpack.c.bf16 %v1386, %v1385
        %s1435 = scalar_lea.vmem [#allocation9], 128
        %v1436 = vld [vmem:[%s1435] sm:$0xf]
        %v1437 = vld [vmem:[%s1435 + $0x4] sm:$0xf]
        %v1438 = vld [vmem:[%s1435 + $0x8] sm:$0xf]
        %v1439 = vld [vmem:[%s1435 + $0xc] sm:$0xf]
        %v1440 = vld [vmem:[%s1435 + $0x10] sm:$0xf]
        %v1441 = vld [vmem:[%s1435 + $0x14] sm:$0xf]
        %v1442 = vld [vmem:[%s1435 + $0x18] sm:$0xf]
        %v1443 = vld [vmem:[%s1435 + $0x1c] sm:$0xf]
        %v1444 = vld [vmem:[%s1435 + $0x20] sm:$0xf]
        %v1445 = vld [vmem:[%s1435 + $0x24] sm:$0xf]
        %v1446 = vld [vmem:[%s1435 + $0x28] sm:$0xf]
        %v1447 = vld [vmem:[%s1435 + $0x2c] sm:$0xf]
        %v1448 = vld [vmem:[%s1435 + $0x30] sm:$0xf]
        %v1449 = vld [vmem:[%s1435 + $0x34] sm:$0xf]
        %v1450 = vld [vmem:[%s1435 + $0x38] sm:$0xf]
        %v1451 = vld [vmem:[%s1435 + $0x3c] sm:$0xf]
        %v1468 = vunpack.c.l.b16 %v1436
        %v1469 = vunpack.c.l.b16 %v1437
        %v1470 = vunpack.c.l.b16 %v1438
        %v1471 = vunpack.c.l.b16 %v1439
        %v1472 = vunpack.c.l.b16 %v1440
        %v1473 = vunpack.c.l.b16 %v1441
        %v1474 = vunpack.c.l.b16 %v1442
        %v1475 = vunpack.c.l.b16 %v1443
        %v1476 = vunpack.c.l.b16 %v1444
        %v1477 = vunpack.c.l.b16 %v1445
        %v1478 = vunpack.c.l.b16 %v1446
        %v1479 = vunpack.c.l.b16 %v1447
        %v1480 = vunpack.c.l.b16 %v1448
        %v1481 = vunpack.c.l.b16 %v1449
        %v1482 = vunpack.c.l.b16 %v1450
        %v1483 = vunpack.c.l.b16 %v1451
        %v1484 = vpack.c.b16 %v1469, %v1468
        %v1485 = vpack.c.b16 %v1471, %v1470
        %v1486 = vpack.c.b16 %v1473, %v1472
        %v1487 = vpack.c.b16 %v1475, %v1474
        %v1488 = vpack.c.b16 %v1477, %v1476
        %v1489 = vpack.c.b16 %v1479, %v1478
        %v1490 = vpack.c.b16 %v1481, %v1480
        %v1491 = vpack.c.b16 %v1483, %v1482
        %1500 = vmatpush.bf16.msra.mxu0 %v1491
        %1501 = vmatpush.bf16.msra.mxu0 %v1490
        %1502 = vmatpush.bf16.msra.mxu0 %v1489
        %1503 = vmatpush.bf16.msra.mxu0 %v1488
        %1504 = vmatpush.bf16.msra.mxu0 %v1487
        %1505 = vmatpush.bf16.msra.mxu0 %v1486
        %1506 = vmatpush.bf16.msra.mxu0 %v1485
        %1507 = vmatpush.bf16.msra.mxu0 %v1484
        %1508 = vmatmul.bf16.gmra.mxu0 %v1419
        %v1509 = vpop.f32.mrf.mxu0
        %v1510 = vadd.f32 0.0, %v1509
        %v1511 = vpop.f32.mrf.mxu0
        %v1512 = vadd.f32 0.0, %v1511
        %1513 = vmatmul.bf16.gmra.mxu0 %v1420
        %v1514 = vpop.f32.mrf.mxu0
        %v1515 = vadd.f32 0.0, %v1514
        %v1516 = vpop.f32.mrf.mxu0
        %v1517 = vadd.f32 0.0, %v1516
        %1518 = vmatmul.bf16.gmra.mxu0 %v1421
        %v1519 = vpop.f32.mrf.mxu0
        %v1520 = vadd.f32 0.0, %v1519
        %v1521 = vpop.f32.mrf.mxu0
        %v1522 = vadd.f32 0.0, %v1521
        %1523 = vmatmul.bf16.gmra.mxu0 %v1422
        %v1524 = vpop.f32.mrf.mxu0
        %v1525 = vadd.f32 0.0, %v1524
        %v1526 = vpop.f32.mrf.mxu0
        %v1527 = vadd.f32 0.0, %v1526
        %1528 = vmatmul.bf16.gmra.mxu0 %v1423
        %v1529 = vpop.f32.mrf.mxu0
        %v1530 = vadd.f32 0.0, %v1529
        %v1531 = vpop.f32.mrf.mxu0
        %v1532 = vadd.f32 0.0, %v1531
        %1533 = vmatmul.bf16.gmra.mxu0 %v1424
        %v1534 = vpop.f32.mrf.mxu0
        %v1535 = vadd.f32 0.0, %v1534
        %v1536 = vpop.f32.mrf.mxu0
        %v1537 = vadd.f32 0.0, %v1536
        %1538 = vmatmul.bf16.gmra.mxu0 %v1425
        %v1539 = vpop.f32.mrf.mxu0
        %v1540 = vadd.f32 0.0, %v1539
        %v1541 = vpop.f32.mrf.mxu0
        %v1542 = vadd.f32 0.0, %v1541
        %1543 = vmatmul.bf16.gmra.mxu0 %v1426
        %v1544 = vpop.f32.mrf.mxu0
        %v1545 = vadd.f32 0.0, %v1544
        %v1546 = vpop.f32.mrf.mxu0
        %v1547 = vadd.f32 0.0, %v1546
        %1548 = vmatmul.bf16.gmra.mxu0 %v1427
        %v1549 = vpop.f32.mrf.mxu0
        %v1550 = vadd.f32 0.0, %v1549
        %v1551 = vpop.f32.mrf.mxu0
        %v1552 = vadd.f32 0.0, %v1551
        %1553 = vmatmul.bf16.gmra.mxu0 %v1428
        %v1554 = vpop.f32.mrf.mxu0
        %v1555 = vadd.f32 0.0, %v1554
        %v1556 = vpop.f32.mrf.mxu0
        %v1557 = vadd.f32 0.0, %v1556
        %1558 = vmatmul.bf16.gmra.mxu0 %v1429
        %v1559 = vpop.f32.mrf.mxu0
        %v1560 = vadd.f32 0.0, %v1559
        %v1561 = vpop.f32.mrf.mxu0
        %v1562 = vadd.f32 0.0, %v1561
        %1563 = vmatmul.bf16.gmra.mxu0 %v1430
        %v1564 = vpop.f32.mrf.mxu0
        %v1565 = vadd.f32 0.0, %v1564
        %v1566 = vpop.f32.mrf.mxu0
        %v1567 = vadd.f32 0.0, %v1566
        %1568 = vmatmul.bf16.gmra.mxu0 %v1431
        %v1569 = vpop.f32.mrf.mxu0
        %v1570 = vadd.f32 0.0, %v1569
        %v1571 = vpop.f32.mrf.mxu0
        %v1572 = vadd.f32 0.0, %v1571
        %1573 = vmatmul.bf16.gmra.mxu0 %v1432
        %v1574 = vpop.f32.mrf.mxu0
        %v1575 = vadd.f32 0.0, %v1574
        %v1576 = vpop.f32.mrf.mxu0
        %v1577 = vadd.f32 0.0, %v1576
        %1578 = vmatmul.bf16.gmra.mxu0 %v1433
        %v1579 = vpop.f32.mrf.mxu0
        %v1580 = vadd.f32 0.0, %v1579
        %v1581 = vpop.f32.mrf.mxu0
        %v1582 = vadd.f32 0.0, %v1581
        %1583 = vmatmul.bf16.gmra.mxu0 %v1434
        %v1584 = vpop.f32.mrf.mxu0
        %v1585 = vadd.f32 0.0, %v1584
        %v1586 = vpop.f32.mrf.mxu0
        %v1587 = vadd.f32 0.0, %v1586
        %1588 = vdwg.mxu0
        %v1589 = vadd.f32 %v1387, %v1510
        %v1590 = vadd.f32 %v1388, %v1512
        %v1591 = vadd.f32 %v1389, %v1515
        %v1592 = vadd.f32 %v1390, %v1517
        %v1593 = vadd.f32 %v1391, %v1520
        %v1594 = vadd.f32 %v1392, %v1522
        %v1595 = vadd.f32 %v1393, %v1525
        %v1596 = vadd.f32 %v1394, %v1527
        %v1597 = vadd.f32 %v1395, %v1530
        %v1598 = vadd.f32 %v1396, %v1532
        %v1599 = vadd.f32 %v1397, %v1535
        %v1600 = vadd.f32 %v1398, %v1537
        %v1601 = vadd.f32 %v1399, %v1540
        %v1602 = vadd.f32 %v1400, %v1542
        %v1603 = vadd.f32 %v1401, %v1545
        %v1604 = vadd.f32 %v1402, %v1547
        %v1605 = vadd.f32 %v1403, %v1550
        %v1606 = vadd.f32 %v1404, %v1552
        %v1607 = vadd.f32 %v1405, %v1555
        %v1608 = vadd.f32 %v1406, %v1557
        %v1609 = vadd.f32 %v1407, %v1560
        %v1610 = vadd.f32 %v1408, %v1562
        %v1611 = vadd.f32 %v1409, %v1565
        %v1612 = vadd.f32 %v1410, %v1567
        %v1613 = vadd.f32 %v1411, %v1570
        %v1614 = vadd.f32 %v1412, %v1572
        %v1615 = vadd.f32 %v1413, %v1575
        %v1616 = vadd.f32 %v1414, %v1577
        %v1617 = vadd.f32 %v1415, %v1580
        %v1618 = vadd.f32 %v1416, %v1582
        %v1619 = vadd.f32 %v1417, %v1585
        %v1620 = vadd.f32 %v1418, %v1587
        %1621 = vst [vmem:[#allocation3] sm:$0xff] %v1589
        %1622 = vst [vmem:[#allocation3 + $0x8] sm:$0xff] %v1590
        %1623 = vst [vmem:[#allocation3 + $0x10] sm:$0xff] %v1591
        %1624 = vst [vmem:[#allocation3 + $0x18] sm:$0xff] %v1592
        %1625 = vst [vmem:[#allocation3 + $0x20] sm:$0xff] %v1593
        %1626 = vst [vmem:[#allocation3 + $0x28] sm:$0xff] %v1594
        %1627 = vst [vmem:[#allocation3 + $0x30] sm:$0xff] %v1595
        %1628 = vst [vmem:[#allocation3 + $0x38] sm:$0xff] %v1596
        %1629 = vst [vmem:[#allocation3 + $0x40] sm:$0xff] %v1597
        %1630 = vst [vmem:[#allocation3 + $0x48] sm:$0xff] %v1598
        %1631 = vst [vmem:[#allocation3 + $0x50] sm:$0xff] %v1599
        %1632 = vst [vmem:[#allocation3 + $0x58] sm:$0xff] %v1600
        %1633 = vst [vmem:[#allocation3 + $0x60] sm:$0xff] %v1601
        %1634 = vst [vmem:[#allocation3 + $0x68] sm:$0xff] %v1602
        %1635 = vst [vmem:[#allocation3 + $0x70] sm:$0xff] %v1603
        %1636 = vst [vmem:[#allocation3 + $0x78] sm:$0xff] %v1604
        %1637 = vst [vmem:[#allocation3 + $0x80] sm:$0xff] %v1605
        %1638 = vst [vmem:[#allocation3 + $0x88] sm:$0xff] %v1606
        %1639 = vst [vmem:[#allocation3 + $0x90] sm:$0xff] %v1607
        %1640 = vst [vmem:[#allocation3 + $0x98] sm:$0xff] %v1608
        %1641 = vst [vmem:[#allocation3 + $0xa0] sm:$0xff] %v1609
        %1642 = vst [vmem:[#allocation3 + $0xa8] sm:$0xff] %v1610
        %1643 = vst [vmem:[#allocation3 + $0xb0] sm:$0xff] %v1611
        %1644 = vst [vmem:[#allocation3 + $0xb8] sm:$0xff] %v1612
        %1645 = vst [vmem:[#allocation3 + $0xc0] sm:$0xff] %v1613
        %1646 = vst [vmem:[#allocation3 + $0xc8] sm:$0xff] %v1614
        %1647 = vst [vmem:[#allocation3 + $0xd0] sm:$0xff] %v1615
        %1648 = vst [vmem:[#allocation3 + $0xd8] sm:$0xff] %v1616
        %1649 = vst [vmem:[#allocation3 + $0xe0] sm:$0xff] %v1617
        %1650 = vst [vmem:[#allocation3 + $0xe8] sm:$0xff] %v1618
        %1651 = vst [vmem:[#allocation3 + $0xf0] sm:$0xff] %v1619
        %1652 = vst [vmem:[#allocation3 + $0xf8] sm:$0xff] %v1620
        %v1653 = vld [vmem:[%s695] sm:$0xff]
        %v1654 = vld [vmem:[%s695 + $0x8] sm:$0xff]
        %v1655 = vld [vmem:[%s695 + $0x18] sm:$0xff]
        %v1656 = vld [vmem:[%s695 + $0x20] sm:$0xff]
        %v1657 = vld [vmem:[%s695 + $0x30] sm:$0xff]
        %v1658 = vld [vmem:[%s695 + $0x38] sm:$0xff]
        %v1659 = vld [vmem:[%s695 + $0x48] sm:$0xff]
        %v1660 = vld [vmem:[%s695 + $0x50] sm:$0xff]
        %v1661 = vld [vmem:[%s695 + $0x60] sm:$0xff]
        %v1662 = vld [vmem:[%s695 + $0x68] sm:$0xff]
        %v1663 = vld [vmem:[%s695 + $0x78] sm:$0xff]
        %v1664 = vld [vmem:[%s695 + $0x80] sm:$0xff]
        %v1665 = vld [vmem:[%s695 + $0x90] sm:$0xff]
        %v1666 = vld [vmem:[%s695 + $0x98] sm:$0xff]
        %v1667 = vld [vmem:[%s695 + $0xa8] sm:$0xff]
        %v1668 = vld [vmem:[%s695 + $0xb0] sm:$0xff]
        %v1669 = vld [vmem:[%s695 + $0xc0] sm:$0xff]
        %v1670 = vld [vmem:[%s695 + $0xc8] sm:$0xff]
        %v1671 = vld [vmem:[%s695 + $0xd8] sm:$0xff]
        %v1672 = vld [vmem:[%s695 + $0xe0] sm:$0xff]
        %v1673 = vld [vmem:[%s695 + $0xf0] sm:$0xff]
        %v1674 = vld [vmem:[%s695 + $0xf8] sm:$0xff]
        %v1675 = vld [vmem:[%s695 + $0x108] sm:$0xff]
        %v1676 = vld [vmem:[%s695 + $0x110] sm:$0xff]
        %v1677 = vld [vmem:[%s695 + $0x120] sm:$0xff]
        %v1678 = vld [vmem:[%s695 + $0x128] sm:$0xff]
        %v1679 = vld [vmem:[%s695 + $0x138] sm:$0xff]
        %v1680 = vld [vmem:[%s695 + $0x140] sm:$0xff]
        %v1681 = vld [vmem:[%s695 + $0x150] sm:$0xff]
        %v1682 = vld [vmem:[%s695 + $0x158] sm:$0xff]
        %v1683 = vld [vmem:[%s695 + $0x168] sm:$0xff]
        %v1684 = vld [vmem:[%s695 + $0x170] sm:$0xff]
        %v1685 = vld [vmem:[#allocation3] sm:$0xff]
        %v1686 = vld [vmem:[#allocation3 + $0x8] sm:$0xff]
        %v1687 = vld [vmem:[#allocation3 + $0x10] sm:$0xff]
        %v1688 = vld [vmem:[#allocation3 + $0x18] sm:$0xff]
        %v1689 = vld [vmem:[#allocation3 + $0x20] sm:$0xff]
        %v1690 = vld [vmem:[#allocation3 + $0x28] sm:$0xff]
        %v1691 = vld [vmem:[#allocation3 + $0x30] sm:$0xff]
        %v1692 = vld [vmem:[#allocation3 + $0x38] sm:$0xff]
        %v1693 = vld [vmem:[#allocation3 + $0x40] sm:$0xff]
        %v1694 = vld [vmem:[#allocation3 + $0x48] sm:$0xff]
        %v1695 = vld [vmem:[#allocation3 + $0x50] sm:$0xff]
        %v1696 = vld [vmem:[#allocation3 + $0x58] sm:$0xff]
        %v1697 = vld [vmem:[#allocation3 + $0x60] sm:$0xff]
        %v1698 = vld [vmem:[#allocation3 + $0x68] sm:$0xff]
        %v1699 = vld [vmem:[#allocation3 + $0x70] sm:$0xff]
        %v1700 = vld [vmem:[#allocation3 + $0x78] sm:$0xff]
        %v1701 = vld [vmem:[#allocation3 + $0x80] sm:$0xff]
        %v1702 = vld [vmem:[#allocation3 + $0x88] sm:$0xff]
        %v1703 = vld [vmem:[#allocation3 + $0x90] sm:$0xff]
        %v1704 = vld [vmem:[#allocation3 + $0x98] sm:$0xff]
        %v1705 = vld [vmem:[#allocation3 + $0xa0] sm:$0xff]
        %v1706 = vld [vmem:[#allocation3 + $0xa8] sm:$0xff]
        %v1707 = vld [vmem:[#allocation3 + $0xb0] sm:$0xff]
        %v1708 = vld [vmem:[#allocation3 + $0xb8] sm:$0xff]
        %v1709 = vld [vmem:[#allocation3 + $0xc0] sm:$0xff]
        %v1710 = vld [vmem:[#allocation3 + $0xc8] sm:$0xff]
        %v1711 = vld [vmem:[#allocation3 + $0xd0] sm:$0xff]
        %v1712 = vld [vmem:[#allocation3 + $0xd8] sm:$0xff]
        %v1713 = vld [vmem:[#allocation3 + $0xe0] sm:$0xff]
        %v1714 = vld [vmem:[#allocation3 + $0xe8] sm:$0xff]
        %v1715 = vld [vmem:[#allocation3 + $0xf0] sm:$0xff]
        %v1716 = vld [vmem:[#allocation3 + $0xf8] sm:$0xff]
        %v1717 = vpack.c.bf16 %v1654, %v1653
        %v1718 = vpack.c.bf16 %v1656, %v1655
        %v1719 = vpack.c.bf16 %v1658, %v1657
        %v1720 = vpack.c.bf16 %v1660, %v1659
        %v1721 = vpack.c.bf16 %v1662, %v1661
        %v1722 = vpack.c.bf16 %v1664, %v1663
        %v1723 = vpack.c.bf16 %v1666, %v1665
        %v1724 = vpack.c.bf16 %v1668, %v1667
        %v1725 = vpack.c.bf16 %v1670, %v1669
        %v1726 = vpack.c.bf16 %v1672, %v1671
        %v1727 = vpack.c.bf16 %v1674, %v1673
        %v1728 = vpack.c.bf16 %v1676, %v1675
        %v1729 = vpack.c.bf16 %v1678, %v1677
        %v1730 = vpack.c.bf16 %v1680, %v1679
        %v1731 = vpack.c.bf16 %v1682, %v1681
        %v1732 = vpack.c.bf16 %v1684, %v1683
        %s1733 = scalar_lea.vmem [#allocation9], 192
        %v1734 = vld [vmem:[%s1733] sm:$0xf]
        %v1735 = vld [vmem:[%s1733 + $0x4] sm:$0xf]
        %v1736 = vld [vmem:[%s1733 + $0x8] sm:$0xf]
        %v1737 = vld [vmem:[%s1733 + $0xc] sm:$0xf]
        %v1738 = vld [vmem:[%s1733 + $0x10] sm:$0xf]
        %v1739 = vld [vmem:[%s1733 + $0x14] sm:$0xf]
        %v1740 = vld [vmem:[%s1733 + $0x18] sm:$0xf]
        %v1741 = vld [vmem:[%s1733 + $0x1c] sm:$0xf]
        %v1742 = vld [vmem:[%s1733 + $0x20] sm:$0xf]
        %v1743 = vld [vmem:[%s1733 + $0x24] sm:$0xf]
        %v1744 = vld [vmem:[%s1733 + $0x28] sm:$0xf]
        %v1745 = vld [vmem:[%s1733 + $0x2c] sm:$0xf]
        %v1746 = vld [vmem:[%s1733 + $0x30] sm:$0xf]
        %v1747 = vld [vmem:[%s1733 + $0x34] sm:$0xf]
        %v1748 = vld [vmem:[%s1733 + $0x38] sm:$0xf]
        %v1749 = vld [vmem:[%s1733 + $0x3c] sm:$0xf]
        %v1766 = vunpack.c.l.b16 %v1734
        %v1767 = vunpack.c.l.b16 %v1735
        %v1768 = vunpack.c.l.b16 %v1736
        %v1769 = vunpack.c.l.b16 %v1737
        %v1770 = vunpack.c.l.b16 %v1738
        %v1771 = vunpack.c.l.b16 %v1739
        %v1772 = vunpack.c.l.b16 %v1740
        %v1773 = vunpack.c.l.b16 %v1741
        %v1774 = vunpack.c.l.b16 %v1742
        %v1775 = vunpack.c.l.b16 %v1743
        %v1776 = vunpack.c.l.b16 %v1744
        %v1777 = vunpack.c.l.b16 %v1745
        %v1778 = vunpack.c.l.b16 %v1746
        %v1779 = vunpack.c.l.b16 %v1747
        %v1780 = vunpack.c.l.b16 %v1748
        %v1781 = vunpack.c.l.b16 %v1749
        %v1782 = vpack.c.b16 %v1767, %v1766
        %v1783 = vpack.c.b16 %v1769, %v1768
        %v1784 = vpack.c.b16 %v1771, %v1770
        %v1785 = vpack.c.b16 %v1773, %v1772
        %v1786 = vpack.c.b16 %v1775, %v1774
        %v1787 = vpack.c.b16 %v1777, %v1776
        %v1788 = vpack.c.b16 %v1779, %v1778
        %v1789 = vpack.c.b16 %v1781, %v1780
        %1798 = vmatpush.bf16.msra.mxu0 %v1789
        %1799 = vmatpush.bf16.msra.mxu0 %v1788
        %1800 = vmatpush.bf16.msra.mxu0 %v1787
        %1801 = vmatpush.bf16.msra.mxu0 %v1786
        %1802 = vmatpush.bf16.msra.mxu0 %v1785
        %1803 = vmatpush.bf16.msra.mxu0 %v1784
        %1804 = vmatpush.bf16.msra.mxu0 %v1783
        %1805 = vmatpush.bf16.msra.mxu0 %v1782
        %1806 = vmatmul.bf16.gmra.mxu0 %v1717
        %v1807 = vpop.f32.mrf.mxu0
        %v1808 = vadd.f32 0.0, %v1807
        %v1809 = vpop.f32.mrf.mxu0
        %v1810 = vadd.f32 0.0, %v1809
        %1811 = vmatmul.bf16.gmra.mxu0 %v1718
        %v1812 = vpop.f32.mrf.mxu0
        %v1813 = vadd.f32 0.0, %v1812
        %v1814 = vpop.f32.mrf.mxu0
        %v1815 = vadd.f32 0.0, %v1814
        %1816 = vmatmul.bf16.gmra.mxu0 %v1719
        %v1817 = vpop.f32.mrf.mxu0
        %v1818 = vadd.f32 0.0, %v1817
        %v1819 = vpop.f32.mrf.mxu0
        %v1820 = vadd.f32 0.0, %v1819
        %1821 = vmatmul.bf16.gmra.mxu0 %v1720
        %v1822 = vpop.f32.mrf.mxu0
        %v1823 = vadd.f32 0.0, %v1822
        %v1824 = vpop.f32.mrf.mxu0
        %v1825 = vadd.f32 0.0, %v1824
        %1826 = vmatmul.bf16.gmra.mxu0 %v1721
        %v1827 = vpop.f32.mrf.mxu0
        %v1828 = vadd.f32 0.0, %v1827
        %v1829 = vpop.f32.mrf.mxu0
        %v1830 = vadd.f32 0.0, %v1829
        %1831 = vmatmul.bf16.gmra.mxu0 %v1722
        %v1832 = vpop.f32.mrf.mxu0
        %v1833 = vadd.f32 0.0, %v1832
        %v1834 = vpop.f32.mrf.mxu0
        %v1835 = vadd.f32 0.0, %v1834
        %1836 = vmatmul.bf16.gmra.mxu0 %v1723
        %v1837 = vpop.f32.mrf.mxu0
        %v1838 = vadd.f32 0.0, %v1837
        %v1839 = vpop.f32.mrf.mxu0
        %v1840 = vadd.f32 0.0, %v1839
        %1841 = vmatmul.bf16.gmra.mxu0 %v1724
        %v1842 = vpop.f32.mrf.mxu0
        %v1843 = vadd.f32 0.0, %v1842
        %v1844 = vpop.f32.mrf.mxu0
        %v1845 = vadd.f32 0.0, %v1844
        %1846 = vmatmul.bf16.gmra.mxu0 %v1725
        %v1847 = vpop.f32.mrf.mxu0
        %v1848 = vadd.f32 0.0, %v1847
        %v1849 = vpop.f32.mrf.mxu0
        %v1850 = vadd.f32 0.0, %v1849
        %1851 = vmatmul.bf16.gmra.mxu0 %v1726
        %v1852 = vpop.f32.mrf.mxu0
        %v1853 = vadd.f32 0.0, %v1852
        %v1854 = vpop.f32.mrf.mxu0
        %v1855 = vadd.f32 0.0, %v1854
        %1856 = vmatmul.bf16.gmra.mxu0 %v1727
        %v1857 = vpop.f32.mrf.mxu0
        %v1858 = vadd.f32 0.0, %v1857
        %v1859 = vpop.f32.mrf.mxu0
        %v1860 = vadd.f32 0.0, %v1859
        %1861 = vmatmul.bf16.gmra.mxu0 %v1728
        %v1862 = vpop.f32.mrf.mxu0
        %v1863 = vadd.f32 0.0, %v1862
        %v1864 = vpop.f32.mrf.mxu0
        %v1865 = vadd.f32 0.0, %v1864
        %1866 = vmatmul.bf16.gmra.mxu0 %v1729
        %v1867 = vpop.f32.mrf.mxu0
        %v1868 = vadd.f32 0.0, %v1867
        %v1869 = vpop.f32.mrf.mxu0
        %v1870 = vadd.f32 0.0, %v1869
        %1871 = vmatmul.bf16.gmra.mxu0 %v1730
        %v1872 = vpop.f32.mrf.mxu0
        %v1873 = vadd.f32 0.0, %v1872
        %v1874 = vpop.f32.mrf.mxu0
        %v1875 = vadd.f32 0.0, %v1874
        %1876 = vmatmul.bf16.gmra.mxu0 %v1731
        %v1877 = vpop.f32.mrf.mxu0
        %v1878 = vadd.f32 0.0, %v1877
        %v1879 = vpop.f32.mrf.mxu0
        %v1880 = vadd.f32 0.0, %v1879
        %1881 = vmatmul.bf16.gmra.mxu0 %v1732
        %v1882 = vpop.f32.mrf.mxu0
        %v1883 = vadd.f32 0.0, %v1882
        %v1884 = vpop.f32.mrf.mxu0
        %v1885 = vadd.f32 0.0, %v1884
        %1886 = vdwg.mxu0
        %v1887 = vadd.f32 %v1685, %v1808
        %v1888 = vadd.f32 %v1686, %v1810
        %v1889 = vadd.f32 %v1687, %v1813
        %v1890 = vadd.f32 %v1688, %v1815
        %v1891 = vadd.f32 %v1689, %v1818
        %v1892 = vadd.f32 %v1690, %v1820
        %v1893 = vadd.f32 %v1691, %v1823
        %v1894 = vadd.f32 %v1692, %v1825
        %v1895 = vadd.f32 %v1693, %v1828
        %v1896 = vadd.f32 %v1694, %v1830
        %v1897 = vadd.f32 %v1695, %v1833
        %v1898 = vadd.f32 %v1696, %v1835
        %v1899 = vadd.f32 %v1697, %v1838
        %v1900 = vadd.f32 %v1698, %v1840
        %v1901 = vadd.f32 %v1699, %v1843
        %v1902 = vadd.f32 %v1700, %v1845
        %v1903 = vadd.f32 %v1701, %v1848
        %v1904 = vadd.f32 %v1702, %v1850
        %v1905 = vadd.f32 %v1703, %v1853
        %v1906 = vadd.f32 %v1704, %v1855
        %v1907 = vadd.f32 %v1705, %v1858
        %v1908 = vadd.f32 %v1706, %v1860
        %v1909 = vadd.f32 %v1707, %v1863
        %v1910 = vadd.f32 %v1708, %v1865
        %v1911 = vadd.f32 %v1709, %v1868
        %v1912 = vadd.f32 %v1710, %v1870
        %v1913 = vadd.f32 %v1711, %v1873
        %v1914 = vadd.f32 %v1712, %v1875
        %v1915 = vadd.f32 %v1713, %v1878
        %v1916 = vadd.f32 %v1714, %v1880
        %v1917 = vadd.f32 %v1715, %v1883
        %v1918 = vadd.f32 %v1716, %v1885
        %1919 = vst [vmem:[#allocation3] sm:$0xff] %v1887
        %1920 = vst [vmem:[#allocation3 + $0x8] sm:$0xff] %v1888
        %1921 = vst [vmem:[#allocation3 + $0x10] sm:$0xff] %v1889
        %1922 = vst [vmem:[#allocation3 + $0x18] sm:$0xff] %v1890
        %1923 = vst [vmem:[#allocation3 + $0x20] sm:$0xff] %v1891
        %1924 = vst [vmem:[#allocation3 + $0x28] sm:$0xff] %v1892
        %1925 = vst [vmem:[#allocation3 + $0x30] sm:$0xff] %v1893
        %1926 = vst [vmem:[#allocation3 + $0x38] sm:$0xff] %v1894
        %1927 = vst [vmem:[#allocation3 + $0x40] sm:$0xff] %v1895
        %1928 = vst [vmem:[#allocation3 + $0x48] sm:$0xff] %v1896
        %1929 = vst [vmem:[#allocation3 + $0x50] sm:$0xff] %v1897
        %1930 = vst [vmem:[#allocation3 + $0x58] sm:$0xff] %v1898
        %1931 = vst [vmem:[#allocation3 + $0x60] sm:$0xff] %v1899
        %1932 = vst [vmem:[#allocation3 + $0x68] sm:$0xff] %v1900
        %1933 = vst [vmem:[#allocation3 + $0x70] sm:$0xff] %v1901
        %1934 = vst [vmem:[#allocation3 + $0x78] sm:$0xff] %v1902
        %1935 = vst [vmem:[#allocation3 + $0x80] sm:$0xff] %v1903
        %1936 = vst [vmem:[#allocation3 + $0x88] sm:$0xff] %v1904
        %1937 = vst [vmem:[#allocation3 + $0x90] sm:$0xff] %v1905
        %1938 = vst [vmem:[#allocation3 + $0x98] sm:$0xff] %v1906
        %1939 = vst [vmem:[#allocation3 + $0xa0] sm:$0xff] %v1907
        %1940 = vst [vmem:[#allocation3 + $0xa8] sm:$0xff] %v1908
        %1941 = vst [vmem:[#allocation3 + $0xb0] sm:$0xff] %v1909
        %1942 = vst [vmem:[#allocation3 + $0xb8] sm:$0xff] %v1910
        %1943 = vst [vmem:[#allocation3 + $0xc0] sm:$0xff] %v1911
        %1944 = vst [vmem:[#allocation3 + $0xc8] sm:$0xff] %v1912
        %1945 = vst [vmem:[#allocation3 + $0xd0] sm:$0xff] %v1913
        %1946 = vst [vmem:[#allocation3 + $0xd8] sm:$0xff] %v1914
        %1947 = vst [vmem:[#allocation3 + $0xe0] sm:$0xff] %v1915
        %1948 = vst [vmem:[#allocation3 + $0xe8] sm:$0xff] %v1916
        %1949 = vst [vmem:[#allocation3 + $0xf0] sm:$0xff] %v1917
        %1950 = vst [vmem:[#allocation3 + $0xf8] sm:$0xff] %v1918
        %v1951 = vld [vmem:[%s695 + $0x1] sm:$0xff]
        %v1952 = vld [vmem:[%s695 + $0x9] sm:$0xff]
        %v1953 = vld [vmem:[%s695 + $0x19] sm:$0xff]
        %v1954 = vld [vmem:[%s695 + $0x21] sm:$0xff]
        %v1955 = vld [vmem:[%s695 + $0x31] sm:$0xff]
        %v1956 = vld [vmem:[%s695 + $0x39] sm:$0xff]
        %v1957 = vld [vmem:[%s695 + $0x49] sm:$0xff]
        %v1958 = vld [vmem:[%s695 + $0x51] sm:$0xff]
        %v1959 = vld [vmem:[%s695 + $0x61] sm:$0xff]
        %v1960 = vld [vmem:[%s695 + $0x69] sm:$0xff]
        %v1961 = vld [vmem:[%s695 + $0x79] sm:$0xff]
        %v1962 = vld [vmem:[%s695 + $0x81] sm:$0xff]
        %v1963 = vld [vmem:[%s695 + $0x91] sm:$0xff]
        %v1964 = vld [vmem:[%s695 + $0x99] sm:$0xff]
        %v1965 = vld [vmem:[%s695 + $0xa9] sm:$0xff]
        %v1966 = vld [vmem:[%s695 + $0xb1] sm:$0xff]
        %v1967 = vld [vmem:[%s695 + $0xc1] sm:$0xff]
        %v1968 = vld [vmem:[%s695 + $0xc9] sm:$0xff]
        %v1969 = vld [vmem:[%s695 + $0xd9] sm:$0xff]
        %v1970 = vld [vmem:[%s695 + $0xe1] sm:$0xff]
        %v1971 = vld [vmem:[%s695 + $0xf1] sm:$0xff]
        %v1972 = vld [vmem:[%s695 + $0xf9] sm:$0xff]
        %v1973 = vld [vmem:[%s695 + $0x109] sm:$0xff]
        %v1974 = vld [vmem:[%s695 + $0x111] sm:$0xff]
        %v1975 = vld [vmem:[%s695 + $0x121] sm:$0xff]
        %v1976 = vld [vmem:[%s695 + $0x129] sm:$0xff]
        %v1977 = vld [vmem:[%s695 + $0x139] sm:$0xff]
        %v1978 = vld [vmem:[%s695 + $0x141] sm:$0xff]
        %v1979 = vld [vmem:[%s695 + $0x151] sm:$0xff]
        %v1980 = vld [vmem:[%s695 + $0x159] sm:$0xff]
        %v1981 = vld [vmem:[%s695 + $0x169] sm:$0xff]
        %v1982 = vld [vmem:[%s695 + $0x171] sm:$0xff]
        %v1983 = vld [vmem:[#allocation3] sm:$0xff]
        %v1984 = vld [vmem:[#allocation3 + $0x8] sm:$0xff]
        %v1985 = vld [vmem:[#allocation3 + $0x10] sm:$0xff]
        %v1986 = vld [vmem:[#allocation3 + $0x18] sm:$0xff]
        %v1987 = vld [vmem:[#allocation3 + $0x20] sm:$0xff]
        %v1988 = vld [vmem:[#allocation3 + $0x28] sm:$0xff]
        %v1989 = vld [vmem:[#allocation3 + $0x30] sm:$0xff]
        %v1990 = vld [vmem:[#allocation3 + $0x38] sm:$0xff]
        %v1991 = vld [vmem:[#allocation3 + $0x40] sm:$0xff]
        %v1992 = vld [vmem:[#allocation3 + $0x48] sm:$0xff]
        %v1993 = vld [vmem:[#allocation3 + $0x50] sm:$0xff]
        %v1994 = vld [vmem:[#allocation3 + $0x58] sm:$0xff]
        %v1995 = vld [vmem:[#allocation3 + $0x60] sm:$0xff]
        %v1996 = vld [vmem:[#allocation3 + $0x68] sm:$0xff]
        %v1997 = vld [vmem:[#allocation3 + $0x70] sm:$0xff]
        %v1998 = vld [vmem:[#allocation3 + $0x78] sm:$0xff]
        %v1999 = vld [vmem:[#allocation3 + $0x80] sm:$0xff]
        %v2000 = vld [vmem:[#allocation3 + $0x88] sm:$0xff]
        %v2001 = vld [vmem:[#allocation3 + $0x90] sm:$0xff]
        %v2002 = vld [vmem:[#allocation3 + $0x98] sm:$0xff]
        %v2003 = vld [vmem:[#allocation3 + $0xa0] sm:$0xff]
        %v2004 = vld [vmem:[#allocation3 + $0xa8] sm:$0xff]
        %v2005 = vld [vmem:[#allocation3 + $0xb0] sm:$0xff]
        %v2006 = vld [vmem:[#allocation3 + $0xb8] sm:$0xff]
        %v2007 = vld [vmem:[#allocation3 + $0xc0] sm:$0xff]
        %v2008 = vld [vmem:[#allocation3 + $0xc8] sm:$0xff]
        %v2009 = vld [vmem:[#allocation3 + $0xd0] sm:$0xff]
        %v2010 = vld [vmem:[#allocation3 + $0xd8] sm:$0xff]
        %v2011 = vld [vmem:[#allocation3 + $0xe0] sm:$0xff]
        %v2012 = vld [vmem:[#allocation3 + $0xe8] sm:$0xff]
        %v2013 = vld [vmem:[#allocation3 + $0xf0] sm:$0xff]
        %v2014 = vld [vmem:[#allocation3 + $0xf8] sm:$0xff]
        %v2015 = vpack.c.bf16 %v1952, %v1951
        %v2016 = vpack.c.bf16 %v1954, %v1953
        %v2017 = vpack.c.bf16 %v1956, %v1955
        %v2018 = vpack.c.bf16 %v1958, %v1957
        %v2019 = vpack.c.bf16 %v1960, %v1959
        %v2020 = vpack.c.bf16 %v1962, %v1961
        %v2021 = vpack.c.bf16 %v1964, %v1963
        %v2022 = vpack.c.bf16 %v1966, %v1965
        %v2023 = vpack.c.bf16 %v1968, %v1967
        %v2024 = vpack.c.bf16 %v1970, %v1969
        %v2025 = vpack.c.bf16 %v1972, %v1971
        %v2026 = vpack.c.bf16 %v1974, %v1973
        %v2027 = vpack.c.bf16 %v1976, %v1975
        %v2028 = vpack.c.bf16 %v1978, %v1977
        %v2029 = vpack.c.bf16 %v1980, %v1979
        %v2030 = vpack.c.bf16 %v1982, %v1981
        %s2031 = scalar_lea.vmem [#allocation9], 256
        %v2032 = vld [vmem:[%s2031] sm:$0xf]
        %v2033 = vld [vmem:[%s2031 + $0x4] sm:$0xf]
        %v2034 = vld [vmem:[%s2031 + $0x8] sm:$0xf]
        %v2035 = vld [vmem:[%s2031 + $0xc] sm:$0xf]
        %v2036 = vld [vmem:[%s2031 + $0x10] sm:$0xf]
        %v2037 = vld [vmem:[%s2031 + $0x14] sm:$0xf]
        %v2038 = vld [vmem:[%s2031 + $0x18] sm:$0xf]
        %v2039 = vld [vmem:[%s2031 + $0x1c] sm:$0xf]
        %v2040 = vld [vmem:[%s2031 + $0x20] sm:$0xf]
        %v2041 = vld [vmem:[%s2031 + $0x24] sm:$0xf]
        %v2042 = vld [vmem:[%s2031 + $0x28] sm:$0xf]
        %v2043 = vld [vmem:[%s2031 + $0x2c] sm:$0xf]
        %v2044 = vld [vmem:[%s2031 + $0x30] sm:$0xf]
        %v2045 = vld [vmem:[%s2031 + $0x34] sm:$0xf]
        %v2046 = vld [vmem:[%s2031 + $0x38] sm:$0xf]
        %v2047 = vld [vmem:[%s2031 + $0x3c] sm:$0xf]
        %v2064 = vunpack.c.l.b16 %v2032
        %v2065 = vunpack.c.l.b16 %v2033
        %v2066 = vunpack.c.l.b16 %v2034
        %v2067 = vunpack.c.l.b16 %v2035
        %v2068 = vunpack.c.l.b16 %v2036
        %v2069 = vunpack.c.l.b16 %v2037
        %v2070 = vunpack.c.l.b16 %v2038
        %v2071 = vunpack.c.l.b16 %v2039
        %v2072 = vunpack.c.l.b16 %v2040
        %v2073 = vunpack.c.l.b16 %v2041
        %v2074 = vunpack.c.l.b16 %v2042
        %v2075 = vunpack.c.l.b16 %v2043
        %v2076 = vunpack.c.l.b16 %v2044
        %v2077 = vunpack.c.l.b16 %v2045
        %v2078 = vunpack.c.l.b16 %v2046
        %v2079 = vunpack.c.l.b16 %v2047
        %v2080 = vpack.c.b16 %v2065, %v2064
        %v2081 = vpack.c.b16 %v2067, %v2066
        %v2082 = vpack.c.b16 %v2069, %v2068
        %v2083 = vpack.c.b16 %v2071, %v2070
        %v2084 = vpack.c.b16 %v2073, %v2072
        %v2085 = vpack.c.b16 %v2075, %v2074
        %v2086 = vpack.c.b16 %v2077, %v2076
        %v2087 = vpack.c.b16 %v2079, %v2078
        %2096 = vmatpush.bf16.msra.mxu0 %v2087
        %2097 = vmatpush.bf16.msra.mxu0 %v2086
        %2098 = vmatpush.bf16.msra.mxu0 %v2085
        %2099 = vmatpush.bf16.msra.mxu0 %v2084
        %2100 = vmatpush.bf16.msra.mxu0 %v2083
        %2101 = vmatpush.bf16.msra.mxu0 %v2082
        %2102 = vmatpush.bf16.msra.mxu0 %v2081
        %2103 = vmatpush.bf16.msra.mxu0 %v2080
        %2104 = vmatmul.bf16.gmra.mxu0 %v2015
        %v2105 = vpop.f32.mrf.mxu0
        %v2106 = vadd.f32 0.0, %v2105
        %v2107 = vpop.f32.mrf.mxu0
        %v2108 = vadd.f32 0.0, %v2107
        %2109 = vmatmul.bf16.gmra.mxu0 %v2016
        %v2110 = vpop.f32.mrf.mxu0
        %v2111 = vadd.f32 0.0, %v2110
        %v2112 = vpop.f32.mrf.mxu0
        %v2113 = vadd.f32 0.0, %v2112
        %2114 = vmatmul.bf16.gmra.mxu0 %v2017
        %v2115 = vpop.f32.mrf.mxu0
        %v2116 = vadd.f32 0.0, %v2115
        %v2117 = vpop.f32.mrf.mxu0
        %v2118 = vadd.f32 0.0, %v2117
        %2119 = vmatmul.bf16.gmra.mxu0 %v2018
        %v2120 = vpop.f32.mrf.mxu0
        %v2121 = vadd.f32 0.0, %v2120
        %v2122 = vpop.f32.mrf.mxu0
        %v2123 = vadd.f32 0.0, %v2122
        %2124 = vmatmul.bf16.gmra.mxu0 %v2019
        %v2125 = vpop.f32.mrf.mxu0
        %v2126 = vadd.f32 0.0, %v2125
        %v2127 = vpop.f32.mrf.mxu0
        %v2128 = vadd.f32 0.0, %v2127
        %2129 = vmatmul.bf16.gmra.mxu0 %v2020
        %v2130 = vpop.f32.mrf.mxu0
        %v2131 = vadd.f32 0.0, %v2130
        %v2132 = vpop.f32.mrf.mxu0
        %v2133 = vadd.f32 0.0, %v2132
        %2134 = vmatmul.bf16.gmra.mxu0 %v2021
        %v2135 = vpop.f32.mrf.mxu0
        %v2136 = vadd.f32 0.0, %v2135
        %v2137 = vpop.f32.mrf.mxu0
        %v2138 = vadd.f32 0.0, %v2137
        %2139 = vmatmul.bf16.gmra.mxu0 %v2022
        %v2140 = vpop.f32.mrf.mxu0
        %v2141 = vadd.f32 0.0, %v2140
        %v2142 = vpop.f32.mrf.mxu0
        %v2143 = vadd.f32 0.0, %v2142
        %2144 = vmatmul.bf16.gmra.mxu0 %v2023
        %v2145 = vpop.f32.mrf.mxu0
        %v2146 = vadd.f32 0.0, %v2145
        %v2147 = vpop.f32.mrf.mxu0
        %v2148 = vadd.f32 0.0, %v2147
        %2149 = vmatmul.bf16.gmra.mxu0 %v2024
        %v2150 = vpop.f32.mrf.mxu0
        %v2151 = vadd.f32 0.0, %v2150
        %v2152 = vpop.f32.mrf.mxu0
        %v2153 = vadd.f32 0.0, %v2152
        %2154 = vmatmul.bf16.gmra.mxu0 %v2025
        %v2155 = vpop.f32.mrf.mxu0
        %v2156 = vadd.f32 0.0, %v2155
        %v2157 = vpop.f32.mrf.mxu0
        %v2158 = vadd.f32 0.0, %v2157
        %2159 = vmatmul.bf16.gmra.mxu0 %v2026
        %v2160 = vpop.f32.mrf.mxu0
        %v2161 = vadd.f32 0.0, %v2160
        %v2162 = vpop.f32.mrf.mxu0
        %v2163 = vadd.f32 0.0, %v2162
        %2164 = vmatmul.bf16.gmra.mxu0 %v2027
        %v2165 = vpop.f32.mrf.mxu0
        %v2166 = vadd.f32 0.0, %v2165
        %v2167 = vpop.f32.mrf.mxu0
        %v2168 = vadd.f32 0.0, %v2167
        %2169 = vmatmul.bf16.gmra.mxu0 %v2028
        %v2170 = vpop.f32.mrf.mxu0
        %v2171 = vadd.f32 0.0, %v2170
        %v2172 = vpop.f32.mrf.mxu0
        %v2173 = vadd.f32 0.0, %v2172
        %2174 = vmatmul.bf16.gmra.mxu0 %v2029
        %v2175 = vpop.f32.mrf.mxu0
        %v2176 = vadd.f32 0.0, %v2175
        %v2177 = vpop.f32.mrf.mxu0
        %v2178 = vadd.f32 0.0, %v2177
        %2179 = vmatmul.bf16.gmra.mxu0 %v2030
        %v2180 = vpop.f32.mrf.mxu0
        %v2181 = vadd.f32 0.0, %v2180
        %v2182 = vpop.f32.mrf.mxu0
        %v2183 = vadd.f32 0.0, %v2182
        %2184 = vdwg.mxu0
        %v2185 = vadd.f32 %v1983, %v2106
        %v2186 = vadd.f32 %v1984, %v2108
        %v2187 = vadd.f32 %v1985, %v2111
        %v2188 = vadd.f32 %v1986, %v2113
        %v2189 = vadd.f32 %v1987, %v2116
        %v2190 = vadd.f32 %v1988, %v2118
        %v2191 = vadd.f32 %v1989, %v2121
        %v2192 = vadd.f32 %v1990, %v2123
        %v2193 = vadd.f32 %v1991, %v2126
        %v2194 = vadd.f32 %v1992, %v2128
        %v2195 = vadd.f32 %v1993, %v2131
        %v2196 = vadd.f32 %v1994, %v2133
        %v2197 = vadd.f32 %v1995, %v2136
        %v2198 = vadd.f32 %v1996, %v2138
        %v2199 = vadd.f32 %v1997, %v2141
        %v2200 = vadd.f32 %v1998, %v2143
        %v2201 = vadd.f32 %v1999, %v2146
        %v2202 = vadd.f32 %v2000, %v2148
        %v2203 = vadd.f32 %v2001, %v2151
        %v2204 = vadd.f32 %v2002, %v2153
        %v2205 = vadd.f32 %v2003, %v2156
        %v2206 = vadd.f32 %v2004, %v2158
        %v2207 = vadd.f32 %v2005, %v2161
        %v2208 = vadd.f32 %v2006, %v2163
        %v2209 = vadd.f32 %v2007, %v2166
        %v2210 = vadd.f32 %v2008, %v2168
        %v2211 = vadd.f32 %v2009, %v2171
        %v2212 = vadd.f32 %v2010, %v2173
        %v2213 = vadd.f32 %v2011, %v2176
        %v2214 = vadd.f32 %v2012, %v2178
        %v2215 = vadd.f32 %v2013, %v2181
        %v2216 = vadd.f32 %v2014, %v2183
        %2217 = vst [vmem:[#allocation3] sm:$0xff] %v2185
        %2218 = vst [vmem:[#allocation3 + $0x8] sm:$0xff] %v2186
        %2219 = vst [vmem:[#allocation3 + $0x10] sm:$0xff] %v2187
        %2220 = vst [vmem:[#allocation3 + $0x18] sm:$0xff] %v2188
        %2221 = vst [vmem:[#allocation3 + $0x20] sm:$0xff] %v2189
        %2222 = vst [vmem:[#allocation3 + $0x28] sm:$0xff] %v2190
        %2223 = vst [vmem:[#allocation3 + $0x30] sm:$0xff] %v2191
        %2224 = vst [vmem:[#allocation3 + $0x38] sm:$0xff] %v2192
        %2225 = vst [vmem:[#allocation3 + $0x40] sm:$0xff] %v2193
        %2226 = vst [vmem:[#allocation3 + $0x48] sm:$0xff] %v2194
        %2227 = vst [vmem:[#allocation3 + $0x50] sm:$0xff] %v2195
        %2228 = vst [vmem:[#allocation3 + $0x58] sm:$0xff] %v2196
        %2229 = vst [vmem:[#allocation3 + $0x60] sm:$0xff] %v2197
        %2230 = vst [vmem:[#allocation3 + $0x68] sm:$0xff] %v2198
        %2231 = vst [vmem:[#allocation3 + $0x70] sm:$0xff] %v2199
        %2232 = vst [vmem:[#allocation3 + $0x78] sm:$0xff] %v2200
        %2233 = vst [vmem:[#allocation3 + $0x80] sm:$0xff] %v2201
        %2234 = vst [vmem:[#allocation3 + $0x88] sm:$0xff] %v2202
        %2235 = vst [vmem:[#allocation3 + $0x90] sm:$0xff] %v2203
        %2236 = vst [vmem:[#allocation3 + $0x98] sm:$0xff] %v2204
        %2237 = vst [vmem:[#allocation3 + $0xa0] sm:$0xff] %v2205
        %2238 = vst [vmem:[#allocation3 + $0xa8] sm:$0xff] %v2206
        %2239 = vst [vmem:[#allocation3 + $0xb0] sm:$0xff] %v2207
        %2240 = vst [vmem:[#allocation3 + $0xb8] sm:$0xff] %v2208
        %2241 = vst [vmem:[#allocation3 + $0xc0] sm:$0xff] %v2209
        %2242 = vst [vmem:[#allocation3 + $0xc8] sm:$0xff] %v2210
        %2243 = vst [vmem:[#allocation3 + $0xd0] sm:$0xff] %v2211
        %2244 = vst [vmem:[#allocation3 + $0xd8] sm:$0xff] %v2212
        %2245 = vst [vmem:[#allocation3 + $0xe0] sm:$0xff] %v2213
        %2246 = vst [vmem:[#allocation3 + $0xe8] sm:$0xff] %v2214
        %2247 = vst [vmem:[#allocation3 + $0xf0] sm:$0xff] %v2215
        %2248 = vst [vmem:[#allocation3 + $0xf8] sm:$0xff] %v2216
        %v2249 = vld [vmem:[%s695 + $0x2] sm:$0xff]
        %v2250 = vld [vmem:[%s695 + $0xa] sm:$0xff]
        %v2251 = vld [vmem:[%s695 + $0x1a] sm:$0xff]
        %v2252 = vld [vmem:[%s695 + $0x22] sm:$0xff]
        %v2253 = vld [vmem:[%s695 + $0x32] sm:$0xff]
        %v2254 = vld [vmem:[%s695 + $0x3a] sm:$0xff]
        %v2255 = vld [vmem:[%s695 + $0x4a] sm:$0xff]
        %v2256 = vld [vmem:[%s695 + $0x52] sm:$0xff]
        %v2257 = vld [vmem:[%s695 + $0x62] sm:$0xff]
        %v2258 = vld [vmem:[%s695 + $0x6a] sm:$0xff]
        %v2259 = vld [vmem:[%s695 + $0x7a] sm:$0xff]
        %v2260 = vld [vmem:[%s695 + $0x82] sm:$0xff]
        %v2261 = vld [vmem:[%s695 + $0x92] sm:$0xff]
        %v2262 = vld [vmem:[%s695 + $0x9a] sm:$0xff]
        %v2263 = vld [vmem:[%s695 + $0xaa] sm:$0xff]
        %v2264 = vld [vmem:[%s695 + $0xb2] sm:$0xff]
        %v2265 = vld [vmem:[%s695 + $0xc2] sm:$0xff]
        %v2266 = vld [vmem:[%s695 + $0xca] sm:$0xff]
        %v2267 = vld [vmem:[%s695 + $0xda] sm:$0xff]
        %v2268 = vld [vmem:[%s695 + $0xe2] sm:$0xff]
        %v2269 = vld [vmem:[%s695 + $0xf2] sm:$0xff]
        %v2270 = vld [vmem:[%s695 + $0xfa] sm:$0xff]
        %v2271 = vld [vmem:[%s695 + $0x10a] sm:$0xff]
        %v2272 = vld [vmem:[%s695 + $0x112] sm:$0xff]
        %v2273 = vld [vmem:[%s695 + $0x122] sm:$0xff]
        %v2274 = vld [vmem:[%s695 + $0x12a] sm:$0xff]
        %v2275 = vld [vmem:[%s695 + $0x13a] sm:$0xff]
        %v2276 = vld [vmem:[%s695 + $0x142] sm:$0xff]
        %v2277 = vld [vmem:[%s695 + $0x152] sm:$0xff]
        %v2278 = vld [vmem:[%s695 + $0x15a] sm:$0xff]
        %v2279 = vld [vmem:[%s695 + $0x16a] sm:$0xff]
        %v2280 = vld [vmem:[%s695 + $0x172] sm:$0xff]
        %v2281 = vld [vmem:[#allocation3] sm:$0xff]
        %v2282 = vld [vmem:[#allocation3 + $0x8] sm:$0xff]
        %v2283 = vld [vmem:[#allocation3 + $0x10] sm:$0xff]
        %v2284 = vld [vmem:[#allocation3 + $0x18] sm:$0xff]
        %v2285 = vld [vmem:[#allocation3 + $0x20] sm:$0xff]
        %v2286 = vld [vmem:[#allocation3 + $0x28] sm:$0xff]
        %v2287 = vld [vmem:[#allocation3 + $0x30] sm:$0xff]
        %v2288 = vld [vmem:[#allocation3 + $0x38] sm:$0xff]
        %v2289 = vld [vmem:[#allocation3 + $0x40] sm:$0xff]
        %v2290 = vld [vmem:[#allocation3 + $0x48] sm:$0xff]
        %v2291 = vld [vmem:[#allocation3 + $0x50] sm:$0xff]
        %v2292 = vld [vmem:[#allocation3 + $0x58] sm:$0xff]
        %v2293 = vld [vmem:[#allocation3 + $0x60] sm:$0xff]
        %v2294 = vld [vmem:[#allocation3 + $0x68] sm:$0xff]
        %v2295 = vld [vmem:[#allocation3 + $0x70] sm:$0xff]
        %v2296 = vld [vmem:[#allocation3 + $0x78] sm:$0xff]
        %v2297 = vld [vmem:[#allocation3 + $0x80] sm:$0xff]
        %v2298 = vld [vmem:[#allocation3 + $0x88] sm:$0xff]
        %v2299 = vld [vmem:[#allocation3 + $0x90] sm:$0xff]
        %v2300 = vld [vmem:[#allocation3 + $0x98] sm:$0xff]
        %v2301 = vld [vmem:[#allocation3 + $0xa0] sm:$0xff]
        %v2302 = vld [vmem:[#allocation3 + $0xa8] sm:$0xff]
        %v2303 = vld [vmem:[#allocation3 + $0xb0] sm:$0xff]
        %v2304 = vld [vmem:[#allocation3 + $0xb8] sm:$0xff]
        %v2305 = vld [vmem:[#allocation3 + $0xc0] sm:$0xff]
        %v2306 = vld [vmem:[#allocation3 + $0xc8] sm:$0xff]
        %v2307 = vld [vmem:[#allocation3 + $0xd0] sm:$0xff]
        %v2308 = vld [vmem:[#allocation3 + $0xd8] sm:$0xff]
        %v2309 = vld [vmem:[#allocation3 + $0xe0] sm:$0xff]
        %v2310 = vld [vmem:[#allocation3 + $0xe8] sm:$0xff]
        %v2311 = vld [vmem:[#allocation3 + $0xf0] sm:$0xff]
        %v2312 = vld [vmem:[#allocation3 + $0xf8] sm:$0xff]
        %v2313 = vpack.c.bf16 %v2250, %v2249
        %v2314 = vpack.c.bf16 %v2252, %v2251
        %v2315 = vpack.c.bf16 %v2254, %v2253
        %v2316 = vpack.c.bf16 %v2256, %v2255
        %v2317 = vpack.c.bf16 %v2258, %v2257
        %v2318 = vpack.c.bf16 %v2260, %v2259
        %v2319 = vpack.c.bf16 %v2262, %v2261
        %v2320 = vpack.c.bf16 %v2264, %v2263
        %v2321 = vpack.c.bf16 %v2266, %v2265
        %v2322 = vpack.c.bf16 %v2268, %v2267
        %v2323 = vpack.c.bf16 %v2270, %v2269
        %v2324 = vpack.c.bf16 %v2272, %v2271
        %v2325 = vpack.c.bf16 %v2274, %v2273
        %v2326 = vpack.c.bf16 %v2276, %v2275
        %v2327 = vpack.c.bf16 %v2278, %v2277
        %v2328 = vpack.c.bf16 %v2280, %v2279
        %s2329 = scalar_lea.vmem [#allocation9], 320
        %v2330 = vld [vmem:[%s2329] sm:$0xf]
        %v2331 = vld [vmem:[%s2329 + $0x4] sm:$0xf]
        %v2332 = vld [vmem:[%s2329 + $0x8] sm:$0xf]
        %v2333 = vld [vmem:[%s2329 + $0xc] sm:$0xf]
        %v2334 = vld [vmem:[%s2329 + $0x10] sm:$0xf]
        %v2335 = vld [vmem:[%s2329 + $0x14] sm:$0xf]
        %v2336 = vld [vmem:[%s2329 + $0x18] sm:$0xf]
        %v2337 = vld [vmem:[%s2329 + $0x1c] sm:$0xf]
        %v2338 = vld [vmem:[%s2329 + $0x20] sm:$0xf]
        %v2339 = vld [vmem:[%s2329 + $0x24] sm:$0xf]
        %v2340 = vld [vmem:[%s2329 + $0x28] sm:$0xf]
        %v2341 = vld [vmem:[%s2329 + $0x2c] sm:$0xf]
        %v2342 = vld [vmem:[%s2329 + $0x30] sm:$0xf]
        %v2343 = vld [vmem:[%s2329 + $0x34] sm:$0xf]
        %v2344 = vld [vmem:[%s2329 + $0x38] sm:$0xf]
        %v2345 = vld [vmem:[%s2329 + $0x3c] sm:$0xf]
        %v2362 = vunpack.c.l.b16 %v2330
        %v2363 = vunpack.c.l.b16 %v2331
        %v2364 = vunpack.c.l.b16 %v2332
        %v2365 = vunpack.c.l.b16 %v2333
        %v2366 = vunpack.c.l.b16 %v2334
        %v2367 = vunpack.c.l.b16 %v2335
        %v2368 = vunpack.c.l.b16 %v2336
        %v2369 = vunpack.c.l.b16 %v2337
        %v2370 = vunpack.c.l.b16 %v2338
        %v2371 = vunpack.c.l.b16 %v2339
        %v2372 = vunpack.c.l.b16 %v2340
        %v2373 = vunpack.c.l.b16 %v2341
        %v2374 = vunpack.c.l.b16 %v2342
        %v2375 = vunpack.c.l.b16 %v2343
        %v2376 = vunpack.c.l.b16 %v2344
        %v2377 = vunpack.c.l.b16 %v2345
        %v2378 = vpack.c.b16 %v2363, %v2362
        %v2379 = vpack.c.b16 %v2365, %v2364
        %v2380 = vpack.c.b16 %v2367, %v2366
        %v2381 = vpack.c.b16 %v2369, %v2368
        %v2382 = vpack.c.b16 %v2371, %v2370
        %v2383 = vpack.c.b16 %v2373, %v2372
        %v2384 = vpack.c.b16 %v2375, %v2374
        %v2385 = vpack.c.b16 %v2377, %v2376
        %2394 = vmatpush.bf16.msra.mxu0 %v2385
        %2395 = vmatpush.bf16.msra.mxu0 %v2384
        %2396 = vmatpush.bf16.msra.mxu0 %v2383
        %2397 = vmatpush.bf16.msra.mxu0 %v2382
        %2398 = vmatpush.bf16.msra.mxu0 %v2381
        %2399 = vmatpush.bf16.msra.mxu0 %v2380
        %2400 = vmatpush.bf16.msra.mxu0 %v2379
        %2401 = vmatpush.bf16.msra.mxu0 %v2378
        %2402 = vmatmul.bf16.gmra.mxu0 %v2313
        %v2403 = vpop.f32.mrf.mxu0
        %v2404 = vadd.f32 0.0, %v2403
        %v2405 = vpop.f32.mrf.mxu0
        %v2406 = vadd.f32 0.0, %v2405
        %2407 = vmatmul.bf16.gmra.mxu0 %v2314
        %v2408 = vpop.f32.mrf.mxu0
        %v2409 = vadd.f32 0.0, %v2408
        %v2410 = vpop.f32.mrf.mxu0
        %v2411 = vadd.f32 0.0, %v2410
        %2412 = vmatmul.bf16.gmra.mxu0 %v2315
        %v2413 = vpop.f32.mrf.mxu0
        %v2414 = vadd.f32 0.0, %v2413
        %v2415 = vpop.f32.mrf.mxu0
        %v2416 = vadd.f32 0.0, %v2415
        %2417 = vmatmul.bf16.gmra.mxu0 %v2316
        %v2418 = vpop.f32.mrf.mxu0
        %v2419 = vadd.f32 0.0, %v2418
        %v2420 = vpop.f32.mrf.mxu0
        %v2421 = vadd.f32 0.0, %v2420
        %2422 = vmatmul.bf16.gmra.mxu0 %v2317
        %v2423 = vpop.f32.mrf.mxu0
        %v2424 = vadd.f32 0.0, %v2423
        %v2425 = vpop.f32.mrf.mxu0
        %v2426 = vadd.f32 0.0, %v2425
        %2427 = vmatmul.bf16.gmra.mxu0 %v2318
        %v2428 = vpop.f32.mrf.mxu0
        %v2429 = vadd.f32 0.0, %v2428
        %v2430 = vpop.f32.mrf.mxu0
        %v2431 = vadd.f32 0.0, %v2430
        %2432 = vmatmul.bf16.gmra.mxu0 %v2319
        %v2433 = vpop.f32.mrf.mxu0
        %v2434 = vadd.f32 0.0, %v2433
        %v2435 = vpop.f32.mrf.mxu0
        %v2436 = vadd.f32 0.0, %v2435
        %2437 = vmatmul.bf16.gmra.mxu0 %v2320
        %v2438 = vpop.f32.mrf.mxu0
        %v2439 = vadd.f32 0.0, %v2438
        %v2440 = vpop.f32.mrf.mxu0
        %v2441 = vadd.f32 0.0, %v2440
        %2442 = vmatmul.bf16.gmra.mxu0 %v2321
        %v2443 = vpop.f32.mrf.mxu0
        %v2444 = vadd.f32 0.0, %v2443
        %v2445 = vpop.f32.mrf.mxu0
        %v2446 = vadd.f32 0.0, %v2445
        %2447 = vmatmul.bf16.gmra.mxu0 %v2322
        %v2448 = vpop.f32.mrf.mxu0
        %v2449 = vadd.f32 0.0, %v2448
        %v2450 = vpop.f32.mrf.mxu0
        %v2451 = vadd.f32 0.0, %v2450
        %2452 = vmatmul.bf16.gmra.mxu0 %v2323
        %v2453 = vpop.f32.mrf.mxu0
        %v2454 = vadd.f32 0.0, %v2453
        %v2455 = vpop.f32.mrf.mxu0
        %v2456 = vadd.f32 0.0, %v2455
        %2457 = vmatmul.bf16.gmra.mxu0 %v2324
        %v2458 = vpop.f32.mrf.mxu0
        %v2459 = vadd.f32 0.0, %v2458
        %v2460 = vpop.f32.mrf.mxu0
        %v2461 = vadd.f32 0.0, %v2460
        %2462 = vmatmul.bf16.gmra.mxu0 %v2325
        %v2463 = vpop.f32.mrf.mxu0
        %v2464 = vadd.f32 0.0, %v2463
        %v2465 = vpop.f32.mrf.mxu0
        %v2466 = vadd.f32 0.0, %v2465
        %2467 = vmatmul.bf16.gmra.mxu0 %v2326
        %v2468 = vpop.f32.mrf.mxu0
        %v2469 = vadd.f32 0.0, %v2468
        %v2470 = vpop.f32.mrf.mxu0
        %v2471 = vadd.f32 0.0, %v2470
        %2472 = vmatmul.bf16.gmra.mxu0 %v2327
        %v2473 = vpop.f32.mrf.mxu0
        %v2474 = vadd.f32 0.0, %v2473
        %v2475 = vpop.f32.mrf.mxu0
        %v2476 = vadd.f32 0.0, %v2475
        %2477 = vmatmul.bf16.gmra.mxu0 %v2328
        %v2478 = vpop.f32.mrf.mxu0
        %v2479 = vadd.f32 0.0, %v2478
        %v2480 = vpop.f32.mrf.mxu0
        %v2481 = vadd.f32 0.0, %v2480
        %2482 = vdwg.mxu0
        %v2483 = vadd.f32 %v2281, %v2404
        %v2484 = vadd.f32 %v2282, %v2406
        %v2485 = vadd.f32 %v2283, %v2409
        %v2486 = vadd.f32 %v2284, %v2411
        %v2487 = vadd.f32 %v2285, %v2414
        %v2488 = vadd.f32 %v2286, %v2416
        %v2489 = vadd.f32 %v2287, %v2419
        %v2490 = vadd.f32 %v2288, %v2421
        %v2491 = vadd.f32 %v2289, %v2424
        %v2492 = vadd.f32 %v2290, %v2426
        %v2493 = vadd.f32 %v2291, %v2429
        %v2494 = vadd.f32 %v2292, %v2431
        %v2495 = vadd.f32 %v2293, %v2434
        %v2496 = vadd.f32 %v2294, %v2436
        %v2497 = vadd.f32 %v2295, %v2439
        %v2498 = vadd.f32 %v2296, %v2441
        %v2499 = vadd.f32 %v2297, %v2444
        %v2500 = vadd.f32 %v2298, %v2446
        %v2501 = vadd.f32 %v2299, %v2449
        %v2502 = vadd.f32 %v2300, %v2451
        %v2503 = vadd.f32 %v2301, %v2454
        %v2504 = vadd.f32 %v2302, %v2456
        %v2505 = vadd.f32 %v2303, %v2459
        %v2506 = vadd.f32 %v2304, %v2461
        %v2507 = vadd.f32 %v2305, %v2464
        %v2508 = vadd.f32 %v2306, %v2466
        %v2509 = vadd.f32 %v2307, %v2469
        %v2510 = vadd.f32 %v2308, %v2471
        %v2511 = vadd.f32 %v2309, %v2474
        %v2512 = vadd.f32 %v2310, %v2476
        %v2513 = vadd.f32 %v2311, %v2479
        %v2514 = vadd.f32 %v2312, %v2481
        %2515 = vst [vmem:[#allocation3] sm:$0xff] %v2483
        %2516 = vst [vmem:[#allocation3 + $0x8] sm:$0xff] %v2484
        %2517 = vst [vmem:[#allocation3 + $0x10] sm:$0xff] %v2485
        %2518 = vst [vmem:[#allocation3 + $0x18] sm:$0xff] %v2486
        %2519 = vst [vmem:[#allocation3 + $0x20] sm:$0xff] %v2487
        %2520 = vst [vmem:[#allocation3 + $0x28] sm:$0xff] %v2488
        %2521 = vst [vmem:[#allocation3 + $0x30] sm:$0xff] %v2489
        %2522 = vst [vmem:[#allocation3 + $0x38] sm:$0xff] %v2490
        %2523 = vst [vmem:[#allocation3 + $0x40] sm:$0xff] %v2491
        %2524 = vst [vmem:[#allocation3 + $0x48] sm:$0xff] %v2492
        %2525 = vst [vmem:[#allocation3 + $0x50] sm:$0xff] %v2493
        %2526 = vst [vmem:[#allocation3 + $0x58] sm:$0xff] %v2494
        %2527 = vst [vmem:[#allocation3 + $0x60] sm:$0xff] %v2495
        %2528 = vst [vmem:[#allocation3 + $0x68] sm:$0xff] %v2496
        %2529 = vst [vmem:[#allocation3 + $0x70] sm:$0xff] %v2497
        %2530 = vst [vmem:[#allocation3 + $0x78] sm:$0xff] %v2498
        %2531 = vst [vmem:[#allocation3 + $0x80] sm:$0xff] %v2499
        %2532 = vst [vmem:[#allocation3 + $0x88] sm:$0xff] %v2500
        %2533 = vst [vmem:[#allocation3 + $0x90] sm:$0xff] %v2501
        %2534 = vst [vmem:[#allocation3 + $0x98] sm:$0xff] %v2502
        %2535 = vst [vmem:[#allocation3 + $0xa0] sm:$0xff] %v2503
        %2536 = vst [vmem:[#allocation3 + $0xa8] sm:$0xff] %v2504
        %2537 = vst [vmem:[#allocation3 + $0xb0] sm:$0xff] %v2505
        %2538 = vst [vmem:[#allocation3 + $0xb8] sm:$0xff] %v2506
        %2539 = vst [vmem:[#allocation3 + $0xc0] sm:$0xff] %v2507
        %2540 = vst [vmem:[#allocation3 + $0xc8] sm:$0xff] %v2508
        %2541 = vst [vmem:[#allocation3 + $0xd0] sm:$0xff] %v2509
        %2542 = vst [vmem:[#allocation3 + $0xd8] sm:$0xff] %v2510
        %2543 = vst [vmem:[#allocation3 + $0xe0] sm:$0xff] %v2511
        %2544 = vst [vmem:[#allocation3 + $0xe8] sm:$0xff] %v2512
        %2545 = vst [vmem:[#allocation3 + $0xf0] sm:$0xff] %v2513
        %2546 = vst [vmem:[#allocation3 + $0xf8] sm:$0xff] %v2514
        %s2547 = scalar_lea.vmem [#allocation2], 48
        %v2548 = vld [vmem:[%s2547] sm:$0xff]
        %v2549 = vld [vmem:[%s2547 + $0x8] sm:$0xff]
        %v2550 = vld [vmem:[%s2547 + $0x18] sm:$0xff]
        %v2551 = vld [vmem:[%s2547 + $0x20] sm:$0xff]
        %v2552 = vld [vmem:[%s2547 + $0x30] sm:$0xff]
        %v2553 = vld [vmem:[%s2547 + $0x38] sm:$0xff]
        %v2554 = vld [vmem:[%s2547 + $0x48] sm:$0xff]
        %v2555 = vld [vmem:[%s2547 + $0x50] sm:$0xff]
        %v2556 = vld [vmem:[%s2547 + $0x60] sm:$0xff]
        %v2557 = vld [vmem:[%s2547 + $0x68] sm:$0xff]
        %v2558 = vld [vmem:[%s2547 + $0x78] sm:$0xff]
        %v2559 = vld [vmem:[%s2547 + $0x80] sm:$0xff]
        %v2560 = vld [vmem:[%s2547 + $0x90] sm:$0xff]
        %v2561 = vld [vmem:[%s2547 + $0x98] sm:$0xff]
        %v2562 = vld [vmem:[%s2547 + $0xa8] sm:$0xff]
        %v2563 = vld [vmem:[%s2547 + $0xb0] sm:$0xff]
        %v2564 = vld [vmem:[%s2547 + $0xc0] sm:$0xff]
        %v2565 = vld [vmem:[%s2547 + $0xc8] sm:$0xff]
        %v2566 = vld [vmem:[%s2547 + $0xd8] sm:$0xff]
        %v2567 = vld [vmem:[%s2547 + $0xe0] sm:$0xff]
        %v2568 = vld [vmem:[%s2547 + $0xf0] sm:$0xff]
        %v2569 = vld [vmem:[%s2547 + $0xf8] sm:$0xff]
        %v2570 = vld [vmem:[%s2547 + $0x108] sm:$0xff]
        %v2571 = vld [vmem:[%s2547 + $0x110] sm:$0xff]
        %v2572 = vld [vmem:[%s2547 + $0x120] sm:$0xff]
        %v2573 = vld [vmem:[%s2547 + $0x128] sm:$0xff]
        %v2574 = vld [vmem:[%s2547 + $0x138] sm:$0xff]
        %v2575 = vld [vmem:[%s2547 + $0x140] sm:$0xff]
        %v2576 = vld [vmem:[%s2547 + $0x150] sm:$0xff]
        %v2577 = vld [vmem:[%s2547 + $0x158] sm:$0xff]
        %v2578 = vld [vmem:[%s2547 + $0x168] sm:$0xff]
        %v2579 = vld [vmem:[%s2547 + $0x170] sm:$0xff]
        %v2580 = vld [vmem:[#allocation3] sm:$0xff]
        %v2581 = vld [vmem:[#allocation3 + $0x8] sm:$0xff]
        %v2582 = vld [vmem:[#allocation3 + $0x10] sm:$0xff]
        %v2583 = vld [vmem:[#allocation3 + $0x18] sm:$0xff]
        %v2584 = vld [vmem:[#allocation3 + $0x20] sm:$0xff]
        %v2585 = vld [vmem:[#allocation3 + $0x28] sm:$0xff]
        %v2586 = vld [vmem:[#allocation3 + $0x30] sm:$0xff]
        %v2587 = vld [vmem:[#allocation3 + $0x38] sm:$0xff]
        %v2588 = vld [vmem:[#allocation3 + $0x40] sm:$0xff]
        %v2589 = vld [vmem:[#allocation3 + $0x48] sm:$0xff]
        %v2590 = vld [vmem:[#allocation3 + $0x50] sm:$0xff]
        %v2591 = vld [vmem:[#allocation3 + $0x58] sm:$0xff]
        %v2592 = vld [vmem:[#allocation3 + $0x60] sm:$0xff]
        %v2593 = vld [vmem:[#allocation3 + $0x68] sm:$0xff]
        %v2594 = vld [vmem:[#allocation3 + $0x70] sm:$0xff]
        %v2595 = vld [vmem:[#allocation3 + $0x78] sm:$0xff]
        %v2596 = vld [vmem:[#allocation3 + $0x80] sm:$0xff]
        %v2597 = vld [vmem:[#allocation3 + $0x88] sm:$0xff]
        %v2598 = vld [vmem:[#allocation3 + $0x90] sm:$0xff]
        %v2599 = vld [vmem:[#allocation3 + $0x98] sm:$0xff]
        %v2600 = vld [vmem:[#allocation3 + $0xa0] sm:$0xff]
        %v2601 = vld [vmem:[#allocation3 + $0xa8] sm:$0xff]
        %v2602 = vld [vmem:[#allocation3 + $0xb0] sm:$0xff]
        %v2603 = vld [vmem:[#allocation3 + $0xb8] sm:$0xff]
        %v2604 = vld [vmem:[#allocation3 + $0xc0] sm:$0xff]
        %v2605 = vld [vmem:[#allocation3 + $0xc8] sm:$0xff]
        %v2606 = vld [vmem:[#allocation3 + $0xd0] sm:$0xff]
        %v2607 = vld [vmem:[#allocation3 + $0xd8] sm:$0xff]
        %v2608 = vld [vmem:[#allocation3 + $0xe0] sm:$0xff]
        %v2609 = vld [vmem:[#allocation3 + $0xe8] sm:$0xff]
        %v2610 = vld [vmem:[#allocation3 + $0xf0] sm:$0xff]
        %v2611 = vld [vmem:[#allocation3 + $0xf8] sm:$0xff]
        %v2612 = vpack.c.bf16 %v2549, %v2548
        %v2613 = vpack.c.bf16 %v2551, %v2550
        %v2614 = vpack.c.bf16 %v2553, %v2552
        %v2615 = vpack.c.bf16 %v2555, %v2554
        %v2616 = vpack.c.bf16 %v2557, %v2556
        %v2617 = vpack.c.bf16 %v2559, %v2558
        %v2618 = vpack.c.bf16 %v2561, %v2560
        %v2619 = vpack.c.bf16 %v2563, %v2562
        %v2620 = vpack.c.bf16 %v2565, %v2564
        %v2621 = vpack.c.bf16 %v2567, %v2566
        %v2622 = vpack.c.bf16 %v2569, %v2568
        %v2623 = vpack.c.bf16 %v2571, %v2570
        %v2624 = vpack.c.bf16 %v2573, %v2572
        %v2625 = vpack.c.bf16 %v2575, %v2574
        %v2626 = vpack.c.bf16 %v2577, %v2576
        %v2627 = vpack.c.bf16 %v2579, %v2578
        %s2628 = scalar_lea.vmem [#allocation9], 384
        %v2629 = vld [vmem:[%s2628] sm:$0xf]
        %v2630 = vld [vmem:[%s2628 + $0x4] sm:$0xf]
        %v2631 = vld [vmem:[%s2628 + $0x8] sm:$0xf]
        %v2632 = vld [vmem:[%s2628 + $0xc] sm:$0xf]
        %v2633 = vld [vmem:[%s2628 + $0x10] sm:$0xf]
        %v2634 = vld [vmem:[%s2628 + $0x14] sm:$0xf]
        %v2635 = vld [vmem:[%s2628 + $0x18] sm:$0xf]
        %v2636 = vld [vmem:[%s2628 + $0x1c] sm:$0xf]
        %v2637 = vld [vmem:[%s2628 + $0x20] sm:$0xf]
        %v2638 = vld [vmem:[%s2628 + $0x24] sm:$0xf]
        %v2639 = vld [vmem:[%s2628 + $0x28] sm:$0xf]
        %v2640 = vld [vmem:[%s2628 + $0x2c] sm:$0xf]
        %v2641 = vld [vmem:[%s2628 + $0x30] sm:$0xf]
        %v2642 = vld [vmem:[%s2628 + $0x34] sm:$0xf]
        %v2643 = vld [vmem:[%s2628 + $0x38] sm:$0xf]
        %v2644 = vld [vmem:[%s2628 + $0x3c] sm:$0xf]
        %v2661 = vunpack.c.l.b16 %v2629
        %v2662 = vunpack.c.l.b16 %v2630
        %v2663 = vunpack.c.l.b16 %v2631
        %v2664 = vunpack.c.l.b16 %v2632
        %v2665 = vunpack.c.l.b16 %v2633
        %v2666 = vunpack.c.l.b16 %v2634
        %v2667 = vunpack.c.l.b16 %v2635
        %v2668 = vunpack.c.l.b16 %v2636
        %v2669 = vunpack.c.l.b16 %v2637
        %v2670 = vunpack.c.l.b16 %v2638
        %v2671 = vunpack.c.l.b16 %v2639
        %v2672 = vunpack.c.l.b16 %v2640
        %v2673 = vunpack.c.l.b16 %v2641
        %v2674 = vunpack.c.l.b16 %v2642
        %v2675 = vunpack.c.l.b16 %v2643
        %v2676 = vunpack.c.l.b16 %v2644
        %v2677 = vpack.c.b16 %v2662, %v2661
        %v2678 = vpack.c.b16 %v2664, %v2663
        %v2679 = vpack.c.b16 %v2666, %v2665
        %v2680 = vpack.c.b16 %v2668, %v2667
        %v2681 = vpack.c.b16 %v2670, %v2669
        %v2682 = vpack.c.b16 %v2672, %v2671
        %v2683 = vpack.c.b16 %v2674, %v2673
        %v2684 = vpack.c.b16 %v2676, %v2675
        %2693 = vmatpush.bf16.msra.mxu0 %v2684
        %2694 = vmatpush.bf16.msra.mxu0 %v2683
        %2695 = vmatpush.bf16.msra.mxu0 %v2682
        %2696 = vmatpush.bf16.msra.mxu0 %v2681
        %2697 = vmatpush.bf16.msra.mxu0 %v2680
        %2698 = vmatpush.bf16.msra.mxu0 %v2679
        %2699 = vmatpush.bf16.msra.mxu0 %v2678
        %2700 = vmatpush.bf16.msra.mxu0 %v2677
        %2701 = vmatmul.bf16.gmra.mxu0 %v2612
        %v2702 = vpop.f32.mrf.mxu0
        %v2703 = vadd.f32 0.0, %v2702
        %v2704 = vpop.f32.mrf.mxu0
        %v2705 = vadd.f32 0.0, %v2704
        %2706 = vmatmul.bf16.gmra.mxu0 %v2613
        %v2707 = vpop.f32.mrf.mxu0
        %v2708 = vadd.f32 0.0, %v2707
        %v2709 = vpop.f32.mrf.mxu0
        %v2710 = vadd.f32 0.0, %v2709
        %2711 = vmatmul.bf16.gmra.mxu0 %v2614
        %v2712 = vpop.f32.mrf.mxu0
        %v2713 = vadd.f32 0.0, %v2712
        %v2714 = vpop.f32.mrf.mxu0
        %v2715 = vadd.f32 0.0, %v2714
        %2716 = vmatmul.bf16.gmra.mxu0 %v2615
        %v2717 = vpop.f32.mrf.mxu0
        %v2718 = vadd.f32 0.0, %v2717
        %v2719 = vpop.f32.mrf.mxu0
        %v2720 = vadd.f32 0.0, %v2719
        %2721 = vmatmul.bf16.gmra.mxu0 %v2616
        %v2722 = vpop.f32.mrf.mxu0
        %v2723 = vadd.f32 0.0, %v2722
        %v2724 = vpop.f32.mrf.mxu0
        %v2725 = vadd.f32 0.0, %v2724
        %2726 = vmatmul.bf16.gmra.mxu0 %v2617
        %v2727 = vpop.f32.mrf.mxu0
        %v2728 = vadd.f32 0.0, %v2727
        %v2729 = vpop.f32.mrf.mxu0
        %v2730 = vadd.f32 0.0, %v2729
        %2731 = vmatmul.bf16.gmra.mxu0 %v2618
        %v2732 = vpop.f32.mrf.mxu0
        %v2733 = vadd.f32 0.0, %v2732
        %v2734 = vpop.f32.mrf.mxu0
        %v2735 = vadd.f32 0.0, %v2734
        %2736 = vmatmul.bf16.gmra.mxu0 %v2619
        %v2737 = vpop.f32.mrf.mxu0
        %v2738 = vadd.f32 0.0, %v2737
        %v2739 = vpop.f32.mrf.mxu0
        %v2740 = vadd.f32 0.0, %v2739
        %2741 = vmatmul.bf16.gmra.mxu0 %v2620
        %v2742 = vpop.f32.mrf.mxu0
        %v2743 = vadd.f32 0.0, %v2742
        %v2744 = vpop.f32.mrf.mxu0
        %v2745 = vadd.f32 0.0, %v2744
        %2746 = vmatmul.bf16.gmra.mxu0 %v2621
        %v2747 = vpop.f32.mrf.mxu0
        %v2748 = vadd.f32 0.0, %v2747
        %v2749 = vpop.f32.mrf.mxu0
        %v2750 = vadd.f32 0.0, %v2749
        %2751 = vmatmul.bf16.gmra.mxu0 %v2622
        %v2752 = vpop.f32.mrf.mxu0
        %v2753 = vadd.f32 0.0, %v2752
        %v2754 = vpop.f32.mrf.mxu0
        %v2755 = vadd.f32 0.0, %v2754
        %2756 = vmatmul.bf16.gmra.mxu0 %v2623
        %v2757 = vpop.f32.mrf.mxu0
        %v2758 = vadd.f32 0.0, %v2757
        %v2759 = vpop.f32.mrf.mxu0
        %v2760 = vadd.f32 0.0, %v2759
        %2761 = vmatmul.bf16.gmra.mxu0 %v2624
        %v2762 = vpop.f32.mrf.mxu0
        %v2763 = vadd.f32 0.0, %v2762
        %v2764 = vpop.f32.mrf.mxu0
        %v2765 = vadd.f32 0.0, %v2764
        %2766 = vmatmul.bf16.gmra.mxu0 %v2625
        %v2767 = vpop.f32.mrf.mxu0
        %v2768 = vadd.f32 0.0, %v2767
        %v2769 = vpop.f32.mrf.mxu0
        %v2770 = vadd.f32 0.0, %v2769
        %2771 = vmatmul.bf16.gmra.mxu0 %v2626
        %v2772 = vpop.f32.mrf.mxu0
        %v2773 = vadd.f32 0.0, %v2772
        %v2774 = vpop.f32.mrf.mxu0
        %v2775 = vadd.f32 0.0, %v2774
        %2776 = vmatmul.bf16.gmra.mxu0 %v2627
        %v2777 = vpop.f32.mrf.mxu0
        %v2778 = vadd.f32 0.0, %v2777
        %v2779 = vpop.f32.mrf.mxu0
        %v2780 = vadd.f32 0.0, %v2779
        %2781 = vdwg.mxu0
        %v2782 = vadd.f32 %v2580, %v2703
        %v2783 = vadd.f32 %v2581, %v2705
        %v2784 = vadd.f32 %v2582, %v2708
        %v2785 = vadd.f32 %v2583, %v2710
        %v2786 = vadd.f32 %v2584, %v2713
        %v2787 = vadd.f32 %v2585, %v2715
        %v2788 = vadd.f32 %v2586, %v2718
        %v2789 = vadd.f32 %v2587, %v2720
        %v2790 = vadd.f32 %v2588, %v2723
        %v2791 = vadd.f32 %v2589, %v2725
        %v2792 = vadd.f32 %v2590, %v2728
        %v2793 = vadd.f32 %v2591, %v2730
        %v2794 = vadd.f32 %v2592, %v2733
        %v2795 = vadd.f32 %v2593, %v2735
        %v2796 = vadd.f32 %v2594, %v2738
        %v2797 = vadd.f32 %v2595, %v2740
        %v2798 = vadd.f32 %v2596, %v2743
        %v2799 = vadd.f32 %v2597, %v2745
        %v2800 = vadd.f32 %v2598, %v2748
        %v2801 = vadd.f32 %v2599, %v2750
        %v2802 = vadd.f32 %v2600, %v2753
        %v2803 = vadd.f32 %v2601, %v2755
        %v2804 = vadd.f32 %v2602, %v2758
        %v2805 = vadd.f32 %v2603, %v2760
        %v2806 = vadd.f32 %v2604, %v2763
        %v2807 = vadd.f32 %v2605, %v2765
        %v2808 = vadd.f32 %v2606, %v2768
        %v2809 = vadd.f32 %v2607, %v2770
        %v2810 = vadd.f32 %v2608, %v2773
        %v2811 = vadd.f32 %v2609, %v2775
        %v2812 = vadd.f32 %v2610, %v2778
        %v2813 = vadd.f32 %v2611, %v2780
        %2814 = vst [vmem:[#allocation3] sm:$0xff] %v2782
        %2815 = vst [vmem:[#allocation3 + $0x8] sm:$0xff] %v2783
        %2816 = vst [vmem:[#allocation3 + $0x10] sm:$0xff] %v2784
        %2817 = vst [vmem:[#allocation3 + $0x18] sm:$0xff] %v2785
        %2818 = vst [vmem:[#allocation3 + $0x20] sm:$0xff] %v2786
        %2819 = vst [vmem:[#allocation3 + $0x28] sm:$0xff] %v2787
        %2820 = vst [vmem:[#allocation3 + $0x30] sm:$0xff] %v2788
        %2821 = vst [vmem:[#allocation3 + $0x38] sm:$0xff] %v2789
        %2822 = vst [vmem:[#allocation3 + $0x40] sm:$0xff] %v2790
        %2823 = vst [vmem:[#allocation3 + $0x48] sm:$0xff] %v2791
        %2824 = vst [vmem:[#allocation3 + $0x50] sm:$0xff] %v2792
        %2825 = vst [vmem:[#allocation3 + $0x58] sm:$0xff] %v2793
        %2826 = vst [vmem:[#allocation3 + $0x60] sm:$0xff] %v2794
        %2827 = vst [vmem:[#allocation3 + $0x68] sm:$0xff] %v2795
        %2828 = vst [vmem:[#allocation3 + $0x70] sm:$0xff] %v2796
        %2829 = vst [vmem:[#allocation3 + $0x78] sm:$0xff] %v2797
        %2830 = vst [vmem:[#allocation3 + $0x80] sm:$0xff] %v2798
        %2831 = vst [vmem:[#allocation3 + $0x88] sm:$0xff] %v2799
        %2832 = vst [vmem:[#allocation3 + $0x90] sm:$0xff] %v2800
        %2833 = vst [vmem:[#allocation3 + $0x98] sm:$0xff] %v2801
        %2834 = vst [vmem:[#allocation3 + $0xa0] sm:$0xff] %v2802
        %2835 = vst [vmem:[#allocation3 + $0xa8] sm:$0xff] %v2803
        %2836 = vst [vmem:[#allocation3 + $0xb0] sm:$0xff] %v2804
        %2837 = vst [vmem:[#allocation3 + $0xb8] sm:$0xff] %v2805
        %2838 = vst [vmem:[#allocation3 + $0xc0] sm:$0xff] %v2806
        %2839 = vst [vmem:[#allocation3 + $0xc8] sm:$0xff] %v2807
        %2840 = vst [vmem:[#allocation3 + $0xd0] sm:$0xff] %v2808
        %2841 = vst [vmem:[#allocation3 + $0xd8] sm:$0xff] %v2809
        %2842 = vst [vmem:[#allocation3 + $0xe0] sm:$0xff] %v2810
        %2843 = vst [vmem:[#allocation3 + $0xe8] sm:$0xff] %v2811
        %2844 = vst [vmem:[#allocation3 + $0xf0] sm:$0xff] %v2812
        %2845 = vst [vmem:[#allocation3 + $0xf8] sm:$0xff] %v2813
        %v2846 = vld [vmem:[%s2547 + $0x1] sm:$0xff]
        %v2847 = vld [vmem:[%s2547 + $0x9] sm:$0xff]
        %v2848 = vld [vmem:[%s2547 + $0x19] sm:$0xff]
        %v2849 = vld [vmem:[%s2547 + $0x21] sm:$0xff]
        %v2850 = vld [vmem:[%s2547 + $0x31] sm:$0xff]
        %v2851 = vld [vmem:[%s2547 + $0x39] sm:$0xff]
        %v2852 = vld [vmem:[%s2547 + $0x49] sm:$0xff]
        %v2853 = vld [vmem:[%s2547 + $0x51] sm:$0xff]
        %v2854 = vld [vmem:[%s2547 + $0x61] sm:$0xff]
        %v2855 = vld [vmem:[%s2547 + $0x69] sm:$0xff]
        %v2856 = vld [vmem:[%s2547 + $0x79] sm:$0xff]
        %v2857 = vld [vmem:[%s2547 + $0x81] sm:$0xff]
        %v2858 = vld [vmem:[%s2547 + $0x91] sm:$0xff]
        %v2859 = vld [vmem:[%s2547 + $0x99] sm:$0xff]
        %v2860 = vld [vmem:[%s2547 + $0xa9] sm:$0xff]
        %v2861 = vld [vmem:[%s2547 + $0xb1] sm:$0xff]
        %v2862 = vld [vmem:[%s2547 + $0xc1] sm:$0xff]
        %v2863 = vld [vmem:[%s2547 + $0xc9] sm:$0xff]
        %v2864 = vld [vmem:[%s2547 + $0xd9] sm:$0xff]
        %v2865 = vld [vmem:[%s2547 + $0xe1] sm:$0xff]
        %v2866 = vld [vmem:[%s2547 + $0xf1] sm:$0xff]
        %v2867 = vld [vmem:[%s2547 + $0xf9] sm:$0xff]
        %v2868 = vld [vmem:[%s2547 + $0x109] sm:$0xff]
        %v2869 = vld [vmem:[%s2547 + $0x111] sm:$0xff]
        %v2870 = vld [vmem:[%s2547 + $0x121] sm:$0xff]
        %v2871 = vld [vmem:[%s2547 + $0x129] sm:$0xff]
        %v2872 = vld [vmem:[%s2547 + $0x139] sm:$0xff]
        %v2873 = vld [vmem:[%s2547 + $0x141] sm:$0xff]
        %v2874 = vld [vmem:[%s2547 + $0x151] sm:$0xff]
        %v2875 = vld [vmem:[%s2547 + $0x159] sm:$0xff]
        %v2876 = vld [vmem:[%s2547 + $0x169] sm:$0xff]
        %v2877 = vld [vmem:[%s2547 + $0x171] sm:$0xff]
        %v2878 = vld [vmem:[#allocation3] sm:$0xff]
        %v2879 = vld [vmem:[#allocation3 + $0x8] sm:$0xff]
        %v2880 = vld [vmem:[#allocation3 + $0x10] sm:$0xff]
        %v2881 = vld [vmem:[#allocation3 + $0x18] sm:$0xff]
        %v2882 = vld [vmem:[#allocation3 + $0x20] sm:$0xff]
        %v2883 = vld [vmem:[#allocation3 + $0x28] sm:$0xff]
        %v2884 = vld [vmem:[#allocation3 + $0x30] sm:$0xff]
        %v2885 = vld [vmem:[#allocation3 + $0x38] sm:$0xff]
        %v2886 = vld [vmem:[#allocation3 + $0x40] sm:$0xff]
        %v2887 = vld [vmem:[#allocation3 + $0x48] sm:$0xff]
        %v2888 = vld [vmem:[#allocation3 + $0x50] sm:$0xff]
        %v2889 = vld [vmem:[#allocation3 + $0x58] sm:$0xff]
        %v2890 = vld [vmem:[#allocation3 + $0x60] sm:$0xff]
        %v2891 = vld [vmem:[#allocation3 + $0x68] sm:$0xff]
        %v2892 = vld [vmem:[#allocation3 + $0x70] sm:$0xff]
        %v2893 = vld [vmem:[#allocation3 + $0x78] sm:$0xff]
        %v2894 = vld [vmem:[#allocation3 + $0x80] sm:$0xff]
        %v2895 = vld [vmem:[#allocation3 + $0x88] sm:$0xff]
        %v2896 = vld [vmem:[#allocation3 + $0x90] sm:$0xff]
        %v2897 = vld [vmem:[#allocation3 + $0x98] sm:$0xff]
        %v2898 = vld [vmem:[#allocation3 + $0xa0] sm:$0xff]
        %v2899 = vld [vmem:[#allocation3 + $0xa8] sm:$0xff]
        %v2900 = vld [vmem:[#allocation3 + $0xb0] sm:$0xff]
        %v2901 = vld [vmem:[#allocation3 + $0xb8] sm:$0xff]
        %v2902 = vld [vmem:[#allocation3 + $0xc0] sm:$0xff]
        %v2903 = vld [vmem:[#allocation3 + $0xc8] sm:$0xff]
        %v2904 = vld [vmem:[#allocation3 + $0xd0] sm:$0xff]
        %v2905 = vld [vmem:[#allocation3 + $0xd8] sm:$0xff]
        %v2906 = vld [vmem:[#allocation3 + $0xe0] sm:$0xff]
        %v2907 = vld [vmem:[#allocation3 + $0xe8] sm:$0xff]
        %v2908 = vld [vmem:[#allocation3 + $0xf0] sm:$0xff]
        %v2909 = vld [vmem:[#allocation3 + $0xf8] sm:$0xff]
        %v2910 = vpack.c.bf16 %v2847, %v2846
        %v2911 = vpack.c.bf16 %v2849, %v2848
        %v2912 = vpack.c.bf16 %v2851, %v2850
        %v2913 = vpack.c.bf16 %v2853, %v2852
        %v2914 = vpack.c.bf16 %v2855, %v2854
        %v2915 = vpack.c.bf16 %v2857, %v2856
        %v2916 = vpack.c.bf16 %v2859, %v2858
        %v2917 = vpack.c.bf16 %v2861, %v2860
        %v2918 = vpack.c.bf16 %v2863, %v2862
        %v2919 = vpack.c.bf16 %v2865, %v2864
        %v2920 = vpack.c.bf16 %v2867, %v2866
        %v2921 = vpack.c.bf16 %v2869, %v2868
        %v2922 = vpack.c.bf16 %v2871, %v2870
        %v2923 = vpack.c.bf16 %v2873, %v2872
        %v2924 = vpack.c.bf16 %v2875, %v2874
        %v2925 = vpack.c.bf16 %v2877, %v2876
        %s2926 = scalar_lea.vmem [#allocation9], 448
        %v2927 = vld [vmem:[%s2926] sm:$0xf]
        %v2928 = vld [vmem:[%s2926 + $0x4] sm:$0xf]
        %v2929 = vld [vmem:[%s2926 + $0x8] sm:$0xf]
        %v2930 = vld [vmem:[%s2926 + $0xc] sm:$0xf]
        %v2931 = vld [vmem:[%s2926 + $0x10] sm:$0xf]
        %v2932 = vld [vmem:[%s2926 + $0x14] sm:$0xf]
        %v2933 = vld [vmem:[%s2926 + $0x18] sm:$0xf]
        %v2934 = vld [vmem:[%s2926 + $0x1c] sm:$0xf]
        %v2935 = vld [vmem:[%s2926 + $0x20] sm:$0xf]
        %v2936 = vld [vmem:[%s2926 + $0x24] sm:$0xf]
        %v2937 = vld [vmem:[%s2926 + $0x28] sm:$0xf]
        %v2938 = vld [vmem:[%s2926 + $0x2c] sm:$0xf]
        %v2939 = vld [vmem:[%s2926 + $0x30] sm:$0xf]
        %v2940 = vld [vmem:[%s2926 + $0x34] sm:$0xf]
        %v2941 = vld [vmem:[%s2926 + $0x38] sm:$0xf]
        %v2942 = vld [vmem:[%s2926 + $0x3c] sm:$0xf]
        %v2959 = vunpack.c.l.b16 %v2927
        %v2960 = vunpack.c.l.b16 %v2928
        %v2961 = vunpack.c.l.b16 %v2929
        %v2962 = vunpack.c.l.b16 %v2930
        %v2963 = vunpack.c.l.b16 %v2931
        %v2964 = vunpack.c.l.b16 %v2932
        %v2965 = vunpack.c.l.b16 %v2933
        %v2966 = vunpack.c.l.b16 %v2934
        %v2967 = vunpack.c.l.b16 %v2935
        %v2968 = vunpack.c.l.b16 %v2936
        %v2969 = vunpack.c.l.b16 %v2937
        %v2970 = vunpack.c.l.b16 %v2938
        %v2971 = vunpack.c.l.b16 %v2939
        %v2972 = vunpack.c.l.b16 %v2940
        %v2973 = vunpack.c.l.b16 %v2941
        %v2974 = vunpack.c.l.b16 %v2942
        %v2975 = vpack.c.b16 %v2960, %v2959
        %v2976 = vpack.c.b16 %v2962, %v2961
        %v2977 = vpack.c.b16 %v2964, %v2963
        %v2978 = vpack.c.b16 %v2966, %v2965
        %v2979 = vpack.c.b16 %v2968, %v2967
        %v2980 = vpack.c.b16 %v2970, %v2969
        %v2981 = vpack.c.b16 %v2972, %v2971
        %v2982 = vpack.c.b16 %v2974, %v2973
        %2991 = vmatpush.bf16.msra.mxu0 %v2982
        %2992 = vmatpush.bf16.msra.mxu0 %v2981
        %2993 = vmatpush.bf16.msra.mxu0 %v2980
        %2994 = vmatpush.bf16.msra.mxu0 %v2979
        %2995 = vmatpush.bf16.msra.mxu0 %v2978
        %2996 = vmatpush.bf16.msra.mxu0 %v2977
        %2997 = vmatpush.bf16.msra.mxu0 %v2976
        %2998 = vmatpush.bf16.msra.mxu0 %v2975
        %2999 = vmatmul.bf16.gmra.mxu0 %v2910
        %v3000 = vpop.f32.mrf.mxu0
        %v3001 = vadd.f32 0.0, %v3000
        %v3002 = vpop.f32.mrf.mxu0
        %v3003 = vadd.f32 0.0, %v3002
        %3004 = vmatmul.bf16.gmra.mxu0 %v2911
        %v3005 = vpop.f32.mrf.mxu0
        %v3006 = vadd.f32 0.0, %v3005
        %v3007 = vpop.f32.mrf.mxu0
        %v3008 = vadd.f32 0.0, %v3007
        %3009 = vmatmul.bf16.gmra.mxu0 %v2912
        %v3010 = vpop.f32.mrf.mxu0
        %v3011 = vadd.f32 0.0, %v3010
        %v3012 = vpop.f32.mrf.mxu0
        %v3013 = vadd.f32 0.0, %v3012
        %3014 = vmatmul.bf16.gmra.mxu0 %v2913
        %v3015 = vpop.f32.mrf.mxu0
        %v3016 = vadd.f32 0.0, %v3015
        %v3017 = vpop.f32.mrf.mxu0
        %v3018 = vadd.f32 0.0, %v3017
        %3019 = vmatmul.bf16.gmra.mxu0 %v2914
        %v3020 = vpop.f32.mrf.mxu0
        %v3021 = vadd.f32 0.0, %v3020
        %v3022 = vpop.f32.mrf.mxu0
        %v3023 = vadd.f32 0.0, %v3022
        %3024 = vmatmul.bf16.gmra.mxu0 %v2915
        %v3025 = vpop.f32.mrf.mxu0
        %v3026 = vadd.f32 0.0, %v3025
        %v3027 = vpop.f32.mrf.mxu0
        %v3028 = vadd.f32 0.0, %v3027
        %3029 = vmatmul.bf16.gmra.mxu0 %v2916
        %v3030 = vpop.f32.mrf.mxu0
        %v3031 = vadd.f32 0.0, %v3030
        %v3032 = vpop.f32.mrf.mxu0
        %v3033 = vadd.f32 0.0, %v3032
        %3034 = vmatmul.bf16.gmra.mxu0 %v2917
        %v3035 = vpop.f32.mrf.mxu0
        %v3036 = vadd.f32 0.0, %v3035
        %v3037 = vpop.f32.mrf.mxu0
        %v3038 = vadd.f32 0.0, %v3037
        %3039 = vmatmul.bf16.gmra.mxu0 %v2918
        %v3040 = vpop.f32.mrf.mxu0
        %v3041 = vadd.f32 0.0, %v3040
        %v3042 = vpop.f32.mrf.mxu0
        %v3043 = vadd.f32 0.0, %v3042
        %3044 = vmatmul.bf16.gmra.mxu0 %v2919
        %v3045 = vpop.f32.mrf.mxu0
        %v3046 = vadd.f32 0.0, %v3045
        %v3047 = vpop.f32.mrf.mxu0
        %v3048 = vadd.f32 0.0, %v3047
        %3049 = vmatmul.bf16.gmra.mxu0 %v2920
        %v3050 = vpop.f32.mrf.mxu0
        %v3051 = vadd.f32 0.0, %v3050
        %v3052 = vpop.f32.mrf.mxu0
        %v3053 = vadd.f32 0.0, %v3052
        %3054 = vmatmul.bf16.gmra.mxu0 %v2921
        %v3055 = vpop.f32.mrf.mxu0
        %v3056 = vadd.f32 0.0, %v3055
        %v3057 = vpop.f32.mrf.mxu0
        %v3058 = vadd.f32 0.0, %v3057
        %3059 = vmatmul.bf16.gmra.mxu0 %v2922
        %v3060 = vpop.f32.mrf.mxu0
        %v3061 = vadd.f32 0.0, %v3060
        %v3062 = vpop.f32.mrf.mxu0
        %v3063 = vadd.f32 0.0, %v3062
        %3064 = vmatmul.bf16.gmra.mxu0 %v2923
        %v3065 = vpop.f32.mrf.mxu0
        %v3066 = vadd.f32 0.0, %v3065
        %v3067 = vpop.f32.mrf.mxu0
        %v3068 = vadd.f32 0.0, %v3067
        %3069 = vmatmul.bf16.gmra.mxu0 %v2924
        %v3070 = vpop.f32.mrf.mxu0
        %v3071 = vadd.f32 0.0, %v3070
        %v3072 = vpop.f32.mrf.mxu0
        %v3073 = vadd.f32 0.0, %v3072
        %3074 = vmatmul.bf16.gmra.mxu0 %v2925
        %v3075 = vpop.f32.mrf.mxu0
        %v3076 = vadd.f32 0.0, %v3075
        %v3077 = vpop.f32.mrf.mxu0
        %v3078 = vadd.f32 0.0, %v3077
        %3079 = vdwg.mxu0
        %v3080 = vadd.f32 %v2878, %v3001
        %v3081 = vadd.f32 %v2879, %v3003
        %v3082 = vadd.f32 %v2880, %v3006
        %v3083 = vadd.f32 %v2881, %v3008
        %v3084 = vadd.f32 %v2882, %v3011
        %v3085 = vadd.f32 %v2883, %v3013
        %v3086 = vadd.f32 %v2884, %v3016
        %v3087 = vadd.f32 %v2885, %v3018
        %v3088 = vadd.f32 %v2886, %v3021
        %v3089 = vadd.f32 %v2887, %v3023
        %v3090 = vadd.f32 %v2888, %v3026
        %v3091 = vadd.f32 %v2889, %v3028
        %v3092 = vadd.f32 %v2890, %v3031
        %v3093 = vadd.f32 %v2891, %v3033
        %v3094 = vadd.f32 %v2892, %v3036
        %v3095 = vadd.f32 %v2893, %v3038
        %v3096 = vadd.f32 %v2894, %v3041
        %v3097 = vadd.f32 %v2895, %v3043
        %v3098 = vadd.f32 %v2896, %v3046
        %v3099 = vadd.f32 %v2897, %v3048
        %v3100 = vadd.f32 %v2898, %v3051
        %v3101 = vadd.f32 %v2899, %v3053
        %v3102 = vadd.f32 %v2900, %v3056
        %v3103 = vadd.f32 %v2901, %v3058
        %v3104 = vadd.f32 %v2902, %v3061
        %v3105 = vadd.f32 %v2903, %v3063
        %v3106 = vadd.f32 %v2904, %v3066
        %v3107 = vadd.f32 %v2905, %v3068
        %v3108 = vadd.f32 %v2906, %v3071
        %v3109 = vadd.f32 %v2907, %v3073
        %v3110 = vadd.f32 %v2908, %v3076
        %v3111 = vadd.f32 %v2909, %v3078
        %3112 = vst [vmem:[#allocation3] sm:$0xff] %v3080
        %3113 = vst [vmem:[#allocation3 + $0x8] sm:$0xff] %v3081
        %3114 = vst [vmem:[#allocation3 + $0x10] sm:$0xff] %v3082
        %3115 = vst [vmem:[#allocation3 + $0x18] sm:$0xff] %v3083
        %3116 = vst [vmem:[#allocation3 + $0x20] sm:$0xff] %v3084
        %3117 = vst [vmem:[#allocation3 + $0x28] sm:$0xff] %v3085
        %3118 = vst [vmem:[#allocation3 + $0x30] sm:$0xff] %v3086
        %3119 = vst [vmem:[#allocation3 + $0x38] sm:$0xff] %v3087
        %3120 = vst [vmem:[#allocation3 + $0x40] sm:$0xff] %v3088
        %3121 = vst [vmem:[#allocation3 + $0x48] sm:$0xff] %v3089
        %3122 = vst [vmem:[#allocation3 + $0x50] sm:$0xff] %v3090
        %3123 = vst [vmem:[#allocation3 + $0x58] sm:$0xff] %v3091
        %3124 = vst [vmem:[#allocation3 + $0x60] sm:$0xff] %v3092
        %3125 = vst [vmem:[#allocation3 + $0x68] sm:$0xff] %v3093
        %3126 = vst [vmem:[#allocation3 + $0x70] sm:$0xff] %v3094
        %3127 = vst [vmem:[#allocation3 + $0x78] sm:$0xff] %v3095
        %3128 = vst [vmem:[#allocation3 + $0x80] sm:$0xff] %v3096
        %3129 = vst [vmem:[#allocation3 + $0x88] sm:$0xff] %v3097
        %3130 = vst [vmem:[#allocation3 + $0x90] sm:$0xff] %v3098
        %3131 = vst [vmem:[#allocation3 + $0x98] sm:$0xff] %v3099
        %3132 = vst [vmem:[#allocation3 + $0xa0] sm:$0xff] %v3100
        %3133 = vst [vmem:[#allocation3 + $0xa8] sm:$0xff] %v3101
        %3134 = vst [vmem:[#allocation3 + $0xb0] sm:$0xff] %v3102
        %3135 = vst [vmem:[#allocation3 + $0xb8] sm:$0xff] %v3103
        %3136 = vst [vmem:[#allocation3 + $0xc0] sm:$0xff] %v3104
        %3137 = vst [vmem:[#allocation3 + $0xc8] sm:$0xff] %v3105
        %3138 = vst [vmem:[#allocation3 + $0xd0] sm:$0xff] %v3106
        %3139 = vst [vmem:[#allocation3 + $0xd8] sm:$0xff] %v3107
        %3140 = vst [vmem:[#allocation3 + $0xe0] sm:$0xff] %v3108
        %3141 = vst [vmem:[#allocation3 + $0xe8] sm:$0xff] %v3109
        %3142 = vst [vmem:[#allocation3 + $0xf0] sm:$0xff] %v3110
        %3143 = vst [vmem:[#allocation3 + $0xf8] sm:$0xff] %v3111
        %v3144 = vld [vmem:[%s2547 + $0x2] sm:$0xff]
        %v3145 = vld [vmem:[%s2547 + $0xa] sm:$0xff]
        %v3146 = vld [vmem:[%s2547 + $0x1a] sm:$0xff]
        %v3147 = vld [vmem:[%s2547 + $0x22] sm:$0xff]
        %v3148 = vld [vmem:[%s2547 + $0x32] sm:$0xff]
        %v3149 = vld [vmem:[%s2547 + $0x3a] sm:$0xff]
        %v3150 = vld [vmem:[%s2547 + $0x4a] sm:$0xff]
        %v3151 = vld [vmem:[%s2547 + $0x52] sm:$0xff]
        %v3152 = vld [vmem:[%s2547 + $0x62] sm:$0xff]
        %v3153 = vld [vmem:[%s2547 + $0x6a] sm:$0xff]
        %v3154 = vld [vmem:[%s2547 + $0x7a] sm:$0xff]
        %v3155 = vld [vmem:[%s2547 + $0x82] sm:$0xff]
        %v3156 = vld [vmem:[%s2547 + $0x92] sm:$0xff]
        %v3157 = vld [vmem:[%s2547 + $0x9a] sm:$0xff]
        %v3158 = vld [vmem:[%s2547 + $0xaa] sm:$0xff]
        %v3159 = vld [vmem:[%s2547 + $0xb2] sm:$0xff]
        %v3160 = vld [vmem:[%s2547 + $0xc2] sm:$0xff]
        %v3161 = vld [vmem:[%s2547 + $0xca] sm:$0xff]
        %v3162 = vld [vmem:[%s2547 + $0xda] sm:$0xff]
        %v3163 = vld [vmem:[%s2547 + $0xe2] sm:$0xff]
        %v3164 = vld [vmem:[%s2547 + $0xf2] sm:$0xff]
        %v3165 = vld [vmem:[%s2547 + $0xfa] sm:$0xff]
        %v3166 = vld [vmem:[%s2547 + $0x10a] sm:$0xff]
        %v3167 = vld [vmem:[%s2547 + $0x112] sm:$0xff]
        %v3168 = vld [vmem:[%s2547 + $0x122] sm:$0xff]
        %v3169 = vld [vmem:[%s2547 + $0x12a] sm:$0xff]
        %v3170 = vld [vmem:[%s2547 + $0x13a] sm:$0xff]
        %v3171 = vld [vmem:[%s2547 + $0x142] sm:$0xff]
        %v3172 = vld [vmem:[%s2547 + $0x152] sm:$0xff]
        %v3173 = vld [vmem:[%s2547 + $0x15a] sm:$0xff]
        %v3174 = vld [vmem:[%s2547 + $0x16a] sm:$0xff]
        %v3175 = vld [vmem:[%s2547 + $0x172] sm:$0xff]
        %v3176 = vld [vmem:[#allocation3] sm:$0xff]
        %v3177 = vld [vmem:[#allocation3 + $0x8] sm:$0xff]
        %v3178 = vld [vmem:[#allocation3 + $0x10] sm:$0xff]
        %v3179 = vld [vmem:[#allocation3 + $0x18] sm:$0xff]
        %v3180 = vld [vmem:[#allocation3 + $0x20] sm:$0xff]
        %v3181 = vld [vmem:[#allocation3 + $0x28] sm:$0xff]
        %v3182 = vld [vmem:[#allocation3 + $0x30] sm:$0xff]
        %v3183 = vld [vmem:[#allocation3 + $0x38] sm:$0xff]
        %v3184 = vld [vmem:[#allocation3 + $0x40] sm:$0xff]
        %v3185 = vld [vmem:[#allocation3 + $0x48] sm:$0xff]
        %v3186 = vld [vmem:[#allocation3 + $0x50] sm:$0xff]
        %v3187 = vld [vmem:[#allocation3 + $0x58] sm:$0xff]
        %v3188 = vld [vmem:[#allocation3 + $0x60] sm:$0xff]
        %v3189 = vld [vmem:[#allocation3 + $0x68] sm:$0xff]
        %v3190 = vld [vmem:[#allocation3 + $0x70] sm:$0xff]
        %v3191 = vld [vmem:[#allocation3 + $0x78] sm:$0xff]
        %v3192 = vld [vmem:[#allocation3 + $0x80] sm:$0xff]
        %v3193 = vld [vmem:[#allocation3 + $0x88] sm:$0xff]
        %v3194 = vld [vmem:[#allocation3 + $0x90] sm:$0xff]
        %v3195 = vld [vmem:[#allocation3 + $0x98] sm:$0xff]
        %v3196 = vld [vmem:[#allocation3 + $0xa0] sm:$0xff]
        %v3197 = vld [vmem:[#allocation3 + $0xa8] sm:$0xff]
        %v3198 = vld [vmem:[#allocation3 + $0xb0] sm:$0xff]
        %v3199 = vld [vmem:[#allocation3 + $0xb8] sm:$0xff]
        %v3200 = vld [vmem:[#allocation3 + $0xc0] sm:$0xff]
        %v3201 = vld [vmem:[#allocation3 + $0xc8] sm:$0xff]
        %v3202 = vld [vmem:[#allocation3 + $0xd0] sm:$0xff]
        %v3203 = vld [vmem:[#allocation3 + $0xd8] sm:$0xff]
        %v3204 = vld [vmem:[#allocation3 + $0xe0] sm:$0xff]
        %v3205 = vld [vmem:[#allocation3 + $0xe8] sm:$0xff]
        %v3206 = vld [vmem:[#allocation3 + $0xf0] sm:$0xff]
        %v3207 = vld [vmem:[#allocation3 + $0xf8] sm:$0xff]
        %v3208 = vpack.c.bf16 %v3145, %v3144
        %v3209 = vpack.c.bf16 %v3147, %v3146
        %v3210 = vpack.c.bf16 %v3149, %v3148
        %v3211 = vpack.c.bf16 %v3151, %v3150
        %v3212 = vpack.c.bf16 %v3153, %v3152
        %v3213 = vpack.c.bf16 %v3155, %v3154
        %v3214 = vpack.c.bf16 %v3157, %v3156
        %v3215 = vpack.c.bf16 %v3159, %v3158
        %v3216 = vpack.c.bf16 %v3161, %v3160
        %v3217 = vpack.c.bf16 %v3163, %v3162
        %v3218 = vpack.c.bf16 %v3165, %v3164
        %v3219 = vpack.c.bf16 %v3167, %v3166
        %v3220 = vpack.c.bf16 %v3169, %v3168
        %v3221 = vpack.c.bf16 %v3171, %v3170
        %v3222 = vpack.c.bf16 %v3173, %v3172
        %v3223 = vpack.c.bf16 %v3175, %v3174
        %s3224 = scalar_lea.vmem [#allocation9], 512
        %v3225 = vld [vmem:[%s3224] sm:$0xf]
        %v3226 = vld [vmem:[%s3224 + $0x4] sm:$0xf]
        %v3227 = vld [vmem:[%s3224 + $0x8] sm:$0xf]
        %v3228 = vld [vmem:[%s3224 + $0xc] sm:$0xf]
        %v3229 = vld [vmem:[%s3224 + $0x10] sm:$0xf]
        %v3230 = vld [vmem:[%s3224 + $0x14] sm:$0xf]
        %v3231 = vld [vmem:[%s3224 + $0x18] sm:$0xf]
        %v3232 = vld [vmem:[%s3224 + $0x1c] sm:$0xf]
        %v3233 = vld [vmem:[%s3224 + $0x20] sm:$0xf]
        %v3234 = vld [vmem:[%s3224 + $0x24] sm:$0xf]
        %v3235 = vld [vmem:[%s3224 + $0x28] sm:$0xf]
        %v3236 = vld [vmem:[%s3224 + $0x2c] sm:$0xf]
        %v3237 = vld [vmem:[%s3224 + $0x30] sm:$0xf]
        %v3238 = vld [vmem:[%s3224 + $0x34] sm:$0xf]
        %v3239 = vld [vmem:[%s3224 + $0x38] sm:$0xf]
        %v3240 = vld [vmem:[%s3224 + $0x3c] sm:$0xf]
        %v3257 = vunpack.c.l.b16 %v3225
        %v3258 = vunpack.c.l.b16 %v3226
        %v3259 = vunpack.c.l.b16 %v3227
        %v3260 = vunpack.c.l.b16 %v3228
        %v3261 = vunpack.c.l.b16 %v3229
        %v3262 = vunpack.c.l.b16 %v3230
        %v3263 = vunpack.c.l.b16 %v3231
        %v3264 = vunpack.c.l.b16 %v3232
        %v3265 = vunpack.c.l.b16 %v3233
        %v3266 = vunpack.c.l.b16 %v3234
        %v3267 = vunpack.c.l.b16 %v3235
        %v3268 = vunpack.c.l.b16 %v3236
        %v3269 = vunpack.c.l.b16 %v3237
        %v3270 = vunpack.c.l.b16 %v3238
        %v3271 = vunpack.c.l.b16 %v3239
        %v3272 = vunpack.c.l.b16 %v3240
        %v3273 = vpack.c.b16 %v3258, %v3257
        %v3274 = vpack.c.b16 %v3260, %v3259
        %v3275 = vpack.c.b16 %v3262, %v3261
        %v3276 = vpack.c.b16 %v3264, %v3263
        %v3277 = vpack.c.b16 %v3266, %v3265
        %v3278 = vpack.c.b16 %v3268, %v3267
        %v3279 = vpack.c.b16 %v3270, %v3269
        %v3280 = vpack.c.b16 %v3272, %v3271
        %3289 = vmatpush.bf16.msra.mxu0 %v3280
        %3290 = vmatpush.bf16.msra.mxu0 %v3279
        %3291 = vmatpush.bf16.msra.mxu0 %v3278
        %3292 = vmatpush.bf16.msra.mxu0 %v3277
        %3293 = vmatpush.bf16.msra.mxu0 %v3276
        %3294 = vmatpush.bf16.msra.mxu0 %v3275
        %3295 = vmatpush.bf16.msra.mxu0 %v3274
        %3296 = vmatpush.bf16.msra.mxu0 %v3273
        %3297 = vmatmul.bf16.gmra.mxu0 %v3208
        %v3298 = vpop.f32.mrf.mxu0
        %v3299 = vadd.f32 0.0, %v3298
        %v3300 = vpop.f32.mrf.mxu0
        %v3301 = vadd.f32 0.0, %v3300
        %3302 = vmatmul.bf16.gmra.mxu0 %v3209
        %v3303 = vpop.f32.mrf.mxu0
        %v3304 = vadd.f32 0.0, %v3303
        %v3305 = vpop.f32.mrf.mxu0
        %v3306 = vadd.f32 0.0, %v3305
        %3307 = vmatmul.bf16.gmra.mxu0 %v3210
        %v3308 = vpop.f32.mrf.mxu0
        %v3309 = vadd.f32 0.0, %v3308
        %v3310 = vpop.f32.mrf.mxu0
        %v3311 = vadd.f32 0.0, %v3310
        %3312 = vmatmul.bf16.gmra.mxu0 %v3211
        %v3313 = vpop.f32.mrf.mxu0
        %v3314 = vadd.f32 0.0, %v3313
        %v3315 = vpop.f32.mrf.mxu0
        %v3316 = vadd.f32 0.0, %v3315
        %3317 = vmatmul.bf16.gmra.mxu0 %v3212
        %v3318 = vpop.f32.mrf.mxu0
        %v3319 = vadd.f32 0.0, %v3318
        %v3320 = vpop.f32.mrf.mxu0
        %v3321 = vadd.f32 0.0, %v3320
        %3322 = vmatmul.bf16.gmra.mxu0 %v3213
        %v3323 = vpop.f32.mrf.mxu0
        %v3324 = vadd.f32 0.0, %v3323
        %v3325 = vpop.f32.mrf.mxu0
        %v3326 = vadd.f32 0.0, %v3325
        %3327 = vmatmul.bf16.gmra.mxu0 %v3214
        %v3328 = vpop.f32.mrf.mxu0
        %v3329 = vadd.f32 0.0, %v3328
        %v3330 = vpop.f32.mrf.mxu0
        %v3331 = vadd.f32 0.0, %v3330
        %3332 = vmatmul.bf16.gmra.mxu0 %v3215
        %v3333 = vpop.f32.mrf.mxu0
        %v3334 = vadd.f32 0.0, %v3333
        %v3335 = vpop.f32.mrf.mxu0
        %v3336 = vadd.f32 0.0, %v3335
        %3337 = vmatmul.bf16.gmra.mxu0 %v3216
        %v3338 = vpop.f32.mrf.mxu0
        %v3339 = vadd.f32 0.0, %v3338
        %v3340 = vpop.f32.mrf.mxu0
        %v3341 = vadd.f32 0.0, %v3340
        %3342 = vmatmul.bf16.gmra.mxu0 %v3217
        %v3343 = vpop.f32.mrf.mxu0
        %v3344 = vadd.f32 0.0, %v3343
        %v3345 = vpop.f32.mrf.mxu0
        %v3346 = vadd.f32 0.0, %v3345
        %3347 = vmatmul.bf16.gmra.mxu0 %v3218
        %v3348 = vpop.f32.mrf.mxu0
        %v3349 = vadd.f32 0.0, %v3348
        %v3350 = vpop.f32.mrf.mxu0
        %v3351 = vadd.f32 0.0, %v3350
        %3352 = vmatmul.bf16.gmra.mxu0 %v3219
        %v3353 = vpop.f32.mrf.mxu0
        %v3354 = vadd.f32 0.0, %v3353
        %v3355 = vpop.f32.mrf.mxu0
        %v3356 = vadd.f32 0.0, %v3355
        %3357 = vmatmul.bf16.gmra.mxu0 %v3220
        %v3358 = vpop.f32.mrf.mxu0
        %v3359 = vadd.f32 0.0, %v3358
        %v3360 = vpop.f32.mrf.mxu0
        %v3361 = vadd.f32 0.0, %v3360
        %3362 = vmatmul.bf16.gmra.mxu0 %v3221
        %v3363 = vpop.f32.mrf.mxu0
        %v3364 = vadd.f32 0.0, %v3363
        %v3365 = vpop.f32.mrf.mxu0
        %v3366 = vadd.f32 0.0, %v3365
        %3367 = vmatmul.bf16.gmra.mxu0 %v3222
        %v3368 = vpop.f32.mrf.mxu0
        %v3369 = vadd.f32 0.0, %v3368
        %v3370 = vpop.f32.mrf.mxu0
        %v3371 = vadd.f32 0.0, %v3370
        %3372 = vmatmul.bf16.gmra.mxu0 %v3223
        %v3373 = vpop.f32.mrf.mxu0
        %v3374 = vadd.f32 0.0, %v3373
        %v3375 = vpop.f32.mrf.mxu0
        %v3376 = vadd.f32 0.0, %v3375
        %3377 = vdwg.mxu0
        %v3378 = vadd.f32 %v3176, %v3299
        %v3379 = vadd.f32 %v3177, %v3301
        %v3380 = vadd.f32 %v3178, %v3304
        %v3381 = vadd.f32 %v3179, %v3306
        %v3382 = vadd.f32 %v3180, %v3309
        %v3383 = vadd.f32 %v3181, %v3311
        %v3384 = vadd.f32 %v3182, %v3314
        %v3385 = vadd.f32 %v3183, %v3316
        %v3386 = vadd.f32 %v3184, %v3319
        %v3387 = vadd.f32 %v3185, %v3321
        %v3388 = vadd.f32 %v3186, %v3324
        %v3389 = vadd.f32 %v3187, %v3326
        %v3390 = vadd.f32 %v3188, %v3329
        %v3391 = vadd.f32 %v3189, %v3331
        %v3392 = vadd.f32 %v3190, %v3334
        %v3393 = vadd.f32 %v3191, %v3336
        %v3394 = vadd.f32 %v3192, %v3339
        %v3395 = vadd.f32 %v3193, %v3341
        %v3396 = vadd.f32 %v3194, %v3344
        %v3397 = vadd.f32 %v3195, %v3346
        %v3398 = vadd.f32 %v3196, %v3349
        %v3399 = vadd.f32 %v3197, %v3351
        %v3400 = vadd.f32 %v3198, %v3354
        %v3401 = vadd.f32 %v3199, %v3356
        %v3402 = vadd.f32 %v3200, %v3359
        %v3403 = vadd.f32 %v3201, %v3361
        %v3404 = vadd.f32 %v3202, %v3364
        %v3405 = vadd.f32 %v3203, %v3366
        %v3406 = vadd.f32 %v3204, %v3369
        %v3407 = vadd.f32 %v3205, %v3371
        %v3408 = vadd.f32 %v3206, %v3374
        %v3409 = vadd.f32 %v3207, %v3376
        %3410 = vst [vmem:[#allocation3] sm:$0xff] %v3378
        %3411 = vst [vmem:[#allocation3 + $0x8] sm:$0xff] %v3379
        %3412 = vst [vmem:[#allocation3 + $0x10] sm:$0xff] %v3380
        %3413 = vst [vmem:[#allocation3 + $0x18] sm:$0xff] %v3381
        %3414 = vst [vmem:[#allocation3 + $0x20] sm:$0xff] %v3382
        %3415 = vst [vmem:[#allocation3 + $0x28] sm:$0xff] %v3383
        %3416 = vst [vmem:[#allocation3 + $0x30] sm:$0xff] %v3384
        %3417 = vst [vmem:[#allocation3 + $0x38] sm:$0xff] %v3385
        %3418 = vst [vmem:[#allocation3 + $0x40] sm:$0xff] %v3386
        %3419 = vst [vmem:[#allocation3 + $0x48] sm:$0xff] %v3387
        %3420 = vst [vmem:[#allocation3 + $0x50] sm:$0xff] %v3388
        %3421 = vst [vmem:[#allocation3 + $0x58] sm:$0xff] %v3389
        %3422 = vst [vmem:[#allocation3 + $0x60] sm:$0xff] %v3390
        %3423 = vst [vmem:[#allocation3 + $0x68] sm:$0xff] %v3391
        %3424 = vst [vmem:[#allocation3 + $0x70] sm:$0xff] %v3392
        %3425 = vst [vmem:[#allocation3 + $0x78] sm:$0xff] %v3393
        %3426 = vst [vmem:[#allocation3 + $0x80] sm:$0xff] %v3394
        %3427 = vst [vmem:[#allocation3 + $0x88] sm:$0xff] %v3395
        %3428 = vst [vmem:[#allocation3 + $0x90] sm:$0xff] %v3396
        %3429 = vst [vmem:[#allocation3 + $0x98] sm:$0xff] %v3397
        %3430 = vst [vmem:[#allocation3 + $0xa0] sm:$0xff] %v3398
        %3431 = vst [vmem:[#allocation3 + $0xa8] sm:$0xff] %v3399
        %3432 = vst [vmem:[#allocation3 + $0xb0] sm:$0xff] %v3400
        %3433 = vst [vmem:[#allocation3 + $0xb8] sm:$0xff] %v3401
        %3434 = vst [vmem:[#allocation3 + $0xc0] sm:$0xff] %v3402
        %3435 = vst [vmem:[#allocation3 + $0xc8] sm:$0xff] %v3403
        %3436 = vst [vmem:[#allocation3 + $0xd0] sm:$0xff] %v3404
        %3437 = vst [vmem:[#allocation3 + $0xd8] sm:$0xff] %v3405
        %3438 = vst [vmem:[#allocation3 + $0xe0] sm:$0xff] %v3406
        %3439 = vst [vmem:[#allocation3 + $0xe8] sm:$0xff] %v3407
        %3440 = vst [vmem:[#allocation3 + $0xf0] sm:$0xff] %v3408
        %3441 = vst [vmem:[#allocation3 + $0xf8] sm:$0xff] %v3409
        %v3442 = vld [vmem:[#allocation3] sm:$0xff]
        %v3443 = vld [vmem:[#allocation3 + $0x8] sm:$0xff]
        %v3444 = vld [vmem:[#allocation3 + $0x10] sm:$0xff]
        %v3445 = vld [vmem:[#allocation3 + $0x18] sm:$0xff]
        %v3446 = vld [vmem:[#allocation3 + $0x20] sm:$0xff]
        %v3447 = vld [vmem:[#allocation3 + $0x28] sm:$0xff]
        %v3448 = vld [vmem:[#allocation3 + $0x30] sm:$0xff]
        %v3449 = vld [vmem:[#allocation3 + $0x38] sm:$0xff]
        %v3450 = vld [vmem:[#allocation3 + $0x40] sm:$0xff]
        %v3451 = vld [vmem:[#allocation3 + $0x48] sm:$0xff]
        %v3452 = vld [vmem:[#allocation3 + $0x50] sm:$0xff]
        %v3453 = vld [vmem:[#allocation3 + $0x58] sm:$0xff]
        %v3454 = vld [vmem:[#allocation3 + $0x60] sm:$0xff]
        %v3455 = vld [vmem:[#allocation3 + $0x68] sm:$0xff]
        %v3456 = vld [vmem:[#allocation3 + $0x70] sm:$0xff]
        %v3457 = vld [vmem:[#allocation3 + $0x78] sm:$0xff]
        %v3458 = vld [vmem:[#allocation3 + $0x80] sm:$0xff]
        %v3459 = vld [vmem:[#allocation3 + $0x88] sm:$0xff]
        %v3460 = vld [vmem:[#allocation3 + $0x90] sm:$0xff]
        %v3461 = vld [vmem:[#allocation3 + $0x98] sm:$0xff]
        %v3462 = vld [vmem:[#allocation3 + $0xa0] sm:$0xff]
        %v3463 = vld [vmem:[#allocation3 + $0xa8] sm:$0xff]
        %v3464 = vld [vmem:[#allocation3 + $0xb0] sm:$0xff]
        %v3465 = vld [vmem:[#allocation3 + $0xb8] sm:$0xff]
        %v3466 = vld [vmem:[#allocation3 + $0xc0] sm:$0xff]
        %v3467 = vld [vmem:[#allocation3 + $0xc8] sm:$0xff]
        %v3468 = vld [vmem:[#allocation3 + $0xd0] sm:$0xff]
        %v3469 = vld [vmem:[#allocation3 + $0xd8] sm:$0xff]
        %v3470 = vld [vmem:[#allocation3 + $0xe0] sm:$0xff]
        %v3471 = vld [vmem:[#allocation3 + $0xe8] sm:$0xff]
        %v3472 = vld [vmem:[#allocation3 + $0xf0] sm:$0xff]
        %v3473 = vld [vmem:[#allocation3 + $0xf8] sm:$0xff]
        %v3474 = vld [vmem:[#allocation10] sm:$0x1]
        %v3476 = vperm.slane %v3474, 0
        %v3478 = vadd.f32 %v3442, %v3476
        %v3479 = vadd.f32 %v3443, %v3476
        %v3480 = vadd.f32 %v3444, %v3476
        %v3481 = vadd.f32 %v3445, %v3476
        %v3482 = vadd.f32 %v3446, %v3476
        %v3483 = vadd.f32 %v3447, %v3476
        %v3484 = vadd.f32 %v3448, %v3476
        %v3485 = vadd.f32 %v3449, %v3476
        %v3486 = vadd.f32 %v3450, %v3476
        %v3487 = vadd.f32 %v3451, %v3476
        %v3488 = vadd.f32 %v3452, %v3476
        %v3489 = vadd.f32 %v3453, %v3476
        %v3490 = vadd.f32 %v3454, %v3476
        %v3491 = vadd.f32 %v3455, %v3476
        %v3492 = vadd.f32 %v3456, %v3476
        %v3493 = vadd.f32 %v3457, %v3476
        %v3494 = vadd.f32 %v3458, %v3476
        %v3495 = vadd.f32 %v3459, %v3476
        %v3496 = vadd.f32 %v3460, %v3476
        %v3497 = vadd.f32 %v3461, %v3476
        %v3498 = vadd.f32 %v3462, %v3476
        %v3499 = vadd.f32 %v3463, %v3476
        %v3500 = vadd.f32 %v3464, %v3476
        %v3501 = vadd.f32 %v3465, %v3476
        %v3502 = vadd.f32 %v3466, %v3476
        %v3503 = vadd.f32 %v3467, %v3476
        %v3504 = vadd.f32 %v3468, %v3476
        %v3505 = vadd.f32 %v3469, %v3476
        %v3506 = vadd.f32 %v3470, %v3476
        %v3507 = vadd.f32 %v3471, %v3476
        %v3508 = vadd.f32 %v3472, %v3476
        %v3509 = vadd.f32 %v3473, %v3476
        %3510 = vst [vmem:[%s400] sm:$0xff] %v3478
        %3511 = vst [vmem:[%s400 + $0x8] sm:$0xff] %v3479
        %3512 = vst [vmem:[%s400 + $0x10] sm:$0xff] %v3480
        %3513 = vst [vmem:[%s400 + $0x18] sm:$0xff] %v3481
        %3514 = vst [vmem:[%s400 + $0x20] sm:$0xff] %v3482
        %3515 = vst [vmem:[%s400 + $0x28] sm:$0xff] %v3483
        %3516 = vst [vmem:[%s400 + $0x30] sm:$0xff] %v3484
        %3517 = vst [vmem:[%s400 + $0x38] sm:$0xff] %v3485
        %3518 = vst [vmem:[%s400 + $0x40] sm:$0xff] %v3486
        %3519 = vst [vmem:[%s400 + $0x48] sm:$0xff] %v3487
        %3520 = vst [vmem:[%s400 + $0x50] sm:$0xff] %v3488
        %3521 = vst [vmem:[%s400 + $0x58] sm:$0xff] %v3489
        %3522 = vst [vmem:[%s400 + $0x60] sm:$0xff] %v3490
        %3523 = vst [vmem:[%s400 + $0x68] sm:$0xff] %v3491
        %3524 = vst [vmem:[%s400 + $0x70] sm:$0xff] %v3492
        %3525 = vst [vmem:[%s400 + $0x78] sm:$0xff] %v3493
        %3526 = vst [vmem:[%s400 + $0x80] sm:$0xff] %v3494
        %3527 = vst [vmem:[%s400 + $0x88] sm:$0xff] %v3495
        %3528 = vst [vmem:[%s400 + $0x90] sm:$0xff] %v3496
        %3529 = vst [vmem:[%s400 + $0x98] sm:$0xff] %v3497
        %3530 = vst [vmem:[%s400 + $0xa0] sm:$0xff] %v3498
        %3531 = vst [vmem:[%s400 + $0xa8] sm:$0xff] %v3499
        %3532 = vst [vmem:[%s400 + $0xb0] sm:$0xff] %v3500
        %3533 = vst [vmem:[%s400 + $0xb8] sm:$0xff] %v3501
        %3534 = vst [vmem:[%s400 + $0xc0] sm:$0xff] %v3502
        %3535 = vst [vmem:[%s400 + $0xc8] sm:$0xff] %v3503
        %3536 = vst [vmem:[%s400 + $0xd0] sm:$0xff] %v3504
        %3537 = vst [vmem:[%s400 + $0xd8] sm:$0xff] %v3505
        %3538 = vst [vmem:[%s400 + $0xe0] sm:$0xff] %v3506
        %3539 = vst [vmem:[%s400 + $0xe8] sm:$0xff] %v3507
        %3540 = vst [vmem:[%s400 + $0xf0] sm:$0xff] %v3508
        %3541 = vst [vmem:[%s400 + $0xf8] sm:$0xff] %v3509
        %s3542 = sand.u32 %s230, 1
        %s3543 = scalar_lea.sflag [#allocation6], %s3542
        %s3544 = sand.u32 %s230, 1
        %s3545 = smul.addr %s3544, 256
        %s3546 = scalar_lea.vmem [#allocation12], %s3545
        // Predicated region
        $region73: #{ce_block_forward.3} parent=55 // pred_check
          %p3547 = pneg %p240
        $region74: #{ce_block_forward.3} parent=55 // pred_check_branch
          %3549 = sbr.rel (%p3547) target = $region76
        $region75: #{ce_block_forward.3} parent=55 // pred_region
          %3551 = vsyncadd %s3543, 0
          %s3552 = smul.addr %s28, 32
          %s3553 = smul.addr %s3552, 8
          %s3554 = scalar_lea.hbm %s9, %s3553
          %s3555 = sshll.u32 %s3546, 4
          %s3556 = int_to_ptr.vmem [resolvable:$true] %s3555
          %s3557 = sshll.u32 %s3554, 4
          %s3558 = int_to_ptr.hbm [resolvable:$true] %s3557
          %3563 = dma.vmem_to_hbm [thread:$0]  %s3556, 4096, %s3558, %s3543, 128, 128, 8
        $region76: #{ce_block_forward.3} parent=55 // pred_fallthru
          _
      $region56: #{ce_block_forward.3} parent=5 // pred_fallthru
        _
      %p3564 = scmp.le.s32.totalorder 2, %s23
      // Predicated region
      $region77: #{ce_block_forward.3} parent=5 // pred_check
        %p3565 = pneg %p3564
      $region78: #{ce_block_forward.3} parent=5 // pred_check_branch
        %3567 = sbr.rel (%p3565) target = $region80
      $region79: #{ce_block_forward.3} parent=5 // pred_region
        %s3568 = ssub.s32 %s23, 2
        // Predicated region
        $region81: #{ce_block_forward.3} parent=79 // pred_check
          %p3569 = pneg %p246
        $region82: #{ce_block_forward.3} parent=79 // pred_check_branch
          %3571 = sbr.rel (%p3569) target = $region84
        $region83: #{ce_block_forward.3} parent=79 // pred_region
          %s3572 = sand.u32 %s231, 1
          %s3573 = scalar_lea.sflag [#allocation6], %s3572
          %s3574 = sand.u32 %s231, 1
          %s3575 = smul.addr %s3574, 256
          %s3576 = scalar_lea.vmem [#allocation12], %s3575
          %3578 = dma.done %s3573, 4096
        $region84: #{ce_block_forward.3} parent=79 // pred_fallthru
          _
      $region80: #{ce_block_forward.3} parent=5 // pred_fallthru
        _
    $region6: #{ce_block_forward.3} parent=1 // loop_footer
      %s27 = sadd.s32 1, %s23
    $region7: #{ce_block_forward.3} parent=1 // loop_footer_branch
      %22 = sbr.rel target = $region3
    $region8: #{ce_block_forward.3} parent=1 // loop_exit
      _
    %3579 = vsyncpa [#allocation5], 1
    %s3580 = scalar_lea.sflag [#allocation5], 1
    %3581 = vsyncpa %s3580, 1
    %3582 = vsyncpa [#allocation8], 1
    %3583 = vsyncpa [#allocation11], 1
    %3584 = vsyncpa [#allocation6], 1
    %s3585 = scalar_lea.sflag [#allocation6], 1
    %3586 = vsyncpa %s3585, 1

</llo_original>
